<compile_context>
chip_gen: v6e
topology: v6e:2x2x1
jax: 0.10.0
libtpu: 0.0.40
codegen_flags: <defaults>
</compile_context>

<pallas_src>
import jax
import jax.numpy as jnp
from jax import lax
from jax.experimental import pallas as pl
from jax.experimental.pallas import tpu as pltpu

# ---------------- configuration (small, consistent with the module) ----------------
EMBED_DIM = 32          # d_model
DEPTH = 2               # number of Mamba blocks
PATCH = 8               # patch_size = stride
IMG = 16                # img size for both template (z) and search (x)
IN_CHANS = 3            # patch_embed in_chans (RGB stream); total input has 6 chans
D_STATE = 8
D_CONV = 4
EXPAND = 2
D_INNER = EXPAND * EMBED_DIM
DT_RANK = max(1, -(-EMBED_DIM // 16))   # ceil(d_model / 16)
EPS = 1e-5
NXC = 2 * D_INNER + 4 * D_STATE         # fused x_proj+dt_proj output width (both dirs)


# ---------------- small in-kernel math helpers ----------------
def _sigmoid(x):
    return 1.0 / (1.0 + jnp.exp(-x))


def _softplus(x):
    return jnp.where(x > 20.0, x, jnp.log(1.0 + jnp.exp(jnp.minimum(x, 20.0))))


# ---------------- the single fused VisionMamba kernel ----------------
def _videomamba_kernel(rows_ref, pos_ref, pw_ref, pb_ref, nf_ref,
                       nw_ref, win_ref, cw_ref, cb_ref, wx_ref, bx_ref,
                       a_ref, dD_ref, wo_ref,
                       out_ref,
                       xpad_s, fw_s, bw_s, hf_s, hb_s, hcar_s, rcar_s):
    L = rows_ref.shape[0]
    d = D_INNER
    n = D_STATE
    nd = n * d
    Kc = D_CONV
    l = pl.program_id(1)

    # ---- layer 0 only: fused patch-embed matmul + bias + pos-embed into the carry ----
    @pl.when(l == 0)
    def _():
        hcar_s[...] = (jnp.dot(rows_ref[...], pw_ref[...],
                               preferred_element_type=jnp.float32)
                       + pb_ref[...] + pos_ref[...])
        rcar_s[...] = jnp.zeros_like(rcar_s)

    # ---- fused residual add + RMSNorm (prenorm=True, residual_in_fp32) ----
    res = hcar_s[...] + rcar_s[...]
    ms = jnp.mean(res * res, axis=-1, keepdims=True)
    normed = res * lax.rsqrt(ms + EPS) * nw_ref[...]

    # ---- in_proj (no bias): (L, D) @ (D, 2*d_inner) ----
    xz = jnp.dot(normed, win_ref[...], preferred_element_type=jnp.float32)
    x_in = xz[:, :d]
    z_in = xz[:, d:]

    # ---- packed depthwise conv (fwd causal | bwd anti-causal) + SiLU, 128 lanes ----
    # fwd half: x at rows [Kc-1, Kc-1+L), zeros above.  bwd half: x at rows [0, L),
    # zeros below.  bwd taps are pre-reversed at init so one shared tap loop works.
    xpad_s[0:Kc - 1, :] = jnp.zeros((Kc - 1, 2 * d), jnp.float32)
    xpad_s[L:L + Kc - 1, :] = jnp.zeros((Kc - 1, 2 * d), jnp.float32)
    xpad_s[Kc - 1:Kc - 1 + L, 0:d] = x_in
    xpad_s[0:L, d:2 * d] = x_in
    acc = jnp.zeros((L, 2 * d), jnp.float32)
    for k in range(Kc):                               # static, unrolled taps
        acc = acc + xpad_s[k:k + L, :] * cw_ref[k:k + 1, :]
    acc = acc + cb_ref[...]
    xc = acc * _sigmoid(acc)                          # (L, 2d) = [xc_f | xc_b]

    # ---- fused (x_proj o dt_proj) for BOTH directions, lane-aligned columns ----
    xdbl = (jnp.dot(xc, wx_ref[...], preferred_element_type=jnp.float32)
            + bx_ref[...])                            # (L, 2d + 4n)
    dt = _softplus(xdbl[:, :2 * d])                   # dense 128-wide [dt_f | dt_b]
    B_f = xdbl[:, 2 * d:2 * d + n]
    C_f = xdbl[:, 2 * d + n:2 * d + 2 * n]
    B_b = xdbl[:, 2 * d + 2 * n:2 * d + 3 * n]
    C_b = xdbl[:, 2 * d + 3 * n:2 * d + 4 * n]

    # ---- vectorized scan precompute, written straight into the VMEM slabs ----
    atc = a_ref[...]                                  # (n, 2d) = [A_f^T | A_b^T]
    dtu = dt * xc                                     # (L, 2d)
    for j in range(n):                                # static contraction over n
        ea = jnp.exp(dt * atc[j:j + 1, :])            # (L, 2d), fwd+bwd in one exp
        fw_s[:, j * d:(j + 1) * d] = ea[:, :d]
        bw_s[:, j * d:(j + 1) * d] = ea[:, d:]
        fw_s[:, nd + j * d:nd + (j + 1) * d] = dtu[:, :d] * B_f[:, j:j + 1]
        bw_s[:, nd + j * d:nd + (j + 1) * d] = dtu[:, d:] * B_b[:, j:j + 1]

    # ---- serial recurrence only: fwd reads row t, bwd reads row L-1-t (no flips) ----
    # TODO(synk): at production L use a sublane-dense (8,128) packed state with
    #   pre-time-reversed bwd slabs and unroll=4..8 instead of full unroll.
    h0 = jnp.zeros((1, nd), jnp.float32)

    def body(t, carry):
        h_f, h_b = carry
        rt = L - 1 - t
        rowf = fw_s[pl.ds(t, 1), :]                   # (1, 2*n*d): [dA_f | dBu_f]
        h_f = rowf[:, :nd] * h_f + rowf[:, nd:]
        hf_s[pl.ds(t, 1), :] = h_f
        rowb = bw_s[pl.ds(rt, 1), :]
        h_b = rowb[:, :nd] * h_b + rowb[:, nd:]
        hb_s[pl.ds(rt, 1), :] = h_b
        return (h_f, h_b)

    lax.fori_loop(0, L, body, (h0, h0), unroll=True)

    # ---- vectorized epilogue: y = C*h + D*u, SiLU(z) gate, out_proj ----
    dD = dD_ref[...]                                  # (1, 2d) = [D_f | D_b]
    y_f = xc[:, :d] * dD[:, :d]
    y_b = xc[:, d:] * dD[:, d:]
    for j in range(n):
        y_f = y_f + C_f[:, j:j + 1] * hf_s[:, j * d:(j + 1) * d]
        y_b = y_b + C_b[:, j:j + 1] * hb_s[:, j * d:(j + 1) * d]
    gate = z_in * _sigmoid(z_in)
    hidden_new = jnp.dot((y_f + y_b) * gate, wo_ref[...],
                         preferred_element_type=jnp.float32)      # (L, D)

    # ---- carry to next layer; fused final add + RMSNorm on the last layer ----
    hcar_s[...] = hidden_new
    rcar_s[...] = res

    @pl.when(l == pl.num_programs(1) - 1)
    def _():
        total = hidden_new + res
        msf = jnp.mean(total * total, axis=-1, keepdims=True)
        out_ref[...] = total * lax.rsqrt(msf + EPS) * nf_ref[...]


def videomamba_stack(rows_seq, pos_seq, params):
    """rows_seq: (B, L, C*p*p) patch pixel rows in final sequence order.
    pos_seq: (L, D) positional embedding per sequence position.  Returns (B, L, D)."""
    B, L, K = rows_seq.shape
    D = EMBED_DIM
    d, n = D_INNER, D_STATE

    seq_in = pl.BlockSpec((None, L, K), lambda b, l: (b, 0, 0))
    out_spec = pl.BlockSpec((None, L, D), lambda b, l: (b, 0, 0))

    def cst(shape):
        return pl.BlockSpec(shape, lambda b, l, _s=shape: (0,) * len(_s))

    def per_layer(shape):                             # stacked, leading layer axis
        return pl.BlockSpec((None,) + shape, lambda b, l: (l, 0, 0))

    return pl.pallas_call(
        _videomamba_kernel,
        out_shape=jax.ShapeDtypeStruct((B, L, D), jnp.float32),
        grid=(B, DEPTH),
        in_specs=[
            seq_in,                                   # patch pixel rows (per batch)
            cst((L, D)),                              # pos embedding per seq position
            cst((K, D)), cst((1, D)),                 # patch-embed weight^T, bias
            cst((1, D)),                              # final RMSNorm weight
            per_layer((1, D)),                        # per-layer RMSNorm weight
            per_layer((D, 2 * d)),                    # in_proj^T
            per_layer((D_CONV, 2 * d)),               # packed conv taps [f | rev(b)]
            per_layer((1, 2 * d)),                    # packed conv bias
            per_layer((2 * d, NXC)),                  # fused x_proj+dt_proj (block-diag)
            per_layer((1, NXC)),                      # its bias
            per_layer((n, 2 * d)),                    # [A_f^T | A_b^T]
            per_layer((1, 2 * d)),                    # [D_f | D_b]
            per_layer((d, D)),                        # out_proj^T
        ],
        out_specs=out_spec,
        scratch_shapes=[
            pltpu.VMEM((L + D_CONV - 1, 2 * d), jnp.float32),   # conv pad buffer
            pltpu.VMEM((L, 2 * n * d), jnp.float32),            # fwd [dA | dB*u]
            pltpu.VMEM((L, 2 * n * d), jnp.float32),            # bwd [dA | dB*u]
            pltpu.VMEM((L, n * d), jnp.float32),                # fwd h trace
            pltpu.VMEM((L, n * d), jnp.float32),                # bwd h trace
            pltpu.VMEM((L, EMBED_DIM), jnp.float32),            # hidden carry
            pltpu.VMEM((L, EMBED_DIM), jnp.float32),            # residual carry
        ],
        compiler_params=pltpu.CompilerParams(
            dimension_semantics=("parallel", "arbitrary")),
    )(rows_seq, pos_seq, params["patch_wt"], params["patch_b"], params["norm_f_w"],
      params["norm_w"], params["w_in_t"], params["conv_w"], params["conv_b"],
      params["w_xdt"], params["b_xdt"], params["a_cat"], params["d_cat"],
      params["w_out_t"])


# ---------------- model glue ----------------
def _patchify(imgs):
    """NCHW -> (N, Hp*Wp, C*p*p) with (c, kh, kw) flattening == Conv2d(k=stride=PATCH)."""
    N, C, H, W = imgs.shape
    p = PATCH
    Hp, Wp = H // p, W // p
    xp = imgs.reshape(N, C, Hp, p, Wp, p).transpose(0, 2, 4, 1, 3, 5)
    return xp.reshape(N, Hp * Wp, C * p * p)


def vision_mamba_forward(params, z_list, x, z_frame_ids=None,
                         concat_mode="tsts", scan_mode="spatial_first"):
    """Reproduces VisionMamba.forward_features for concat_mode='tsts',
    scan_mode='spatial_first', add_z_seg=False, add_cls_token=False (eval mode)."""
    assert concat_mode == "tsts" and scan_mode == "spatial_first"
    z = jnp.stack(z_list, axis=1)                     # (B, T_z, 6, H, W)
    B, T_z = z.shape[0], z.shape[1]
    zf = z.reshape((-1,) + z.shape[2:])               # (B*T_z, 6, H, W)
    n_patches = (IMG // PATCH) ** 2
    K = IN_CHANS * PATCH * PATCH

    # patch-pixel rows pre-arranged in the final 'tsts' / spatial_first sequence order;
    # the embedding matmul itself happens inside the fused kernel at layer 0.
    t_rgb = _patchify(zf[:, :3]).reshape(B, T_z * n_patches, K)
    t_X = _patchify(zf[:, 3:]).reshape(B, T_z * n_patches, K)
    s_rgb = _patchify(x[:, :3])
    s_X = _patchify(x[:, 3:])
    rows_seq = jnp.concatenate([t_rgb, s_rgb, t_X, s_X], axis=1).astype(jnp.float32)

    pos_t = jnp.tile(params["pos_embed_t"], (T_z, 1))        # (T_z*np, D)
    pos_s = params["pos_embed_s"]                            # (np, D)
    pos_seq = jnp.concatenate([pos_t, pos_s, pos_t, pos_s], axis=0)  # (L, D)

    return videomamba_stack(rows_seq, pos_seq, params)


# ---------------- deterministic parameter init + one-time kernel-layout prep ----------------
def init_params(key):
    """Synthesize PyTorch-layout weights deterministically, then convert ONCE into the
    fused / pre-transposed / layer-stacked layout consumed by the kernel."""
    keys = iter(jax.random.split(key, 256))

    def nrm(shape, std=0.02):
        return jax.random.normal(next(keys), shape, jnp.float32) * std

    n_patches = (IMG // PATCH) ** 2
    d, n = D_INNER, D_STATE
    patch_w = nrm((EMBED_DIM, IN_CHANS, PATCH, PATCH))        # Conv2d weight
    params = {
        "patch_wt": patch_w.reshape(EMBED_DIM, IN_CHANS * PATCH * PATCH).T,
        "patch_b": jnp.zeros((1, EMBED_DIM), jnp.float32),
        # pos_embed_t / pos_embed_s normally come from interpolate_pos_embed(cfg);
        # created directly here at the per-frame patch count.
        "pos_embed_t": nrm((n_patches, EMBED_DIM)),
        "pos_embed_s": nrm((n_patches, EMBED_DIM)),
        "norm_f_w": jnp.ones((1, EMBED_DIM), jnp.float32),
    }

    A_log = jnp.log(jnp.tile(jnp.arange(1, n + 1, dtype=jnp.float32)[None, :], (d, 1)))
    A_neg_T = (-jnp.exp(A_log)).T                             # (n, d)

    norm_w, w_in_t, conv_w, conv_b = [], [], [], []
    w_xdt, b_xdt, a_cat, d_cat, w_out_t = [], [], [], [], []
    for _ in range(DEPTH):
        in_proj_w = nrm((2 * d, EMBED_DIM))                   # PyTorch (out, in)
        out_proj_w = nrm((EMBED_DIM, d)) / jnp.sqrt(float(DEPTH))
        norm_w.append(jnp.ones((1, EMBED_DIM), jnp.float32))
        w_in_t.append(in_proj_w.T)
        w_out_t.append(out_proj_w.T)

        wx = jnp.zeros((2 * d, NXC), jnp.float32)             # block-diag fwd/bwd
        bx = jnp.zeros((1, NXC), jnp.float32)
        cw_dir, a_dir, dd_dir = [], [], []
        for di in range(2):                                   # 0 = fwd, 1 = bwd
            cw = nrm((D_CONV, d), 0.1)                        # depthwise taps
            x_proj_w = nrm((DT_RANK + 2 * n, d))              # PyTorch (out, in)
            dt_proj_w = nrm((d, DT_RANK), 0.1)
            dt_proj_b = jnp.full((d,), 0.5, jnp.float32)
            # fold dt_proj into x_proj offline: xc @ W_dir + b == [dt_pre | B | C]
            w_dt = (dt_proj_w @ x_proj_w[:DT_RANK]).T          # (d, d)
            w_B = x_proj_w[DT_RANK:DT_RANK + n].T              # (d, n)
            w_C = x_proj_w[DT_RANK + n:].T                     # (d, n)
            rows = slice(di * d, (di + 1) * d)
            wx = wx.at[rows, di * d:(di + 1) * d].set(w_dt)
            off = 2 * d + 2 * n * di
            wx = wx.at[rows, off:off + n].set(w_B)
            wx = wx.at[rows, off + n:off + 2 * n].set(w_C)
            bx = bx.at[0, di * d:(di + 1) * d].set(dt_proj_b)
            # bwd conv taps are stored reversed so one shared causal tap-loop
            # implements the anti-causal (flip-conv-flip) direction.
            cw_dir.append(cw if di == 0 else cw[::-1])
            a_dir.append(A_neg_T)
            dd_dir.append(jnp.ones((1, d), jnp.float32))
        conv_w.append(jnp.concatenate(cw_dir, axis=1))         # (Kc, 2d)
        conv_b.append(jnp.zeros((1, 2 * d), jnp.float32))
        w_xdt.append(wx)
        b_xdt.append(bx)
        a_cat.append(jnp.concatenate(a_dir, axis=1))           # (n, 2d)
        d_cat.append(jnp.concatenate(dd_dir, axis=1))          # (1, 2d)

    params["norm_w"] = jnp.stack(norm_w)
    params["w_in_t"] = jnp.stack(w_in_t)
    params["conv_w"] = jnp.stack(conv_w)
    params["conv_b"] = jnp.stack(conv_b)
    params["w_xdt"] = jnp.stack(w_xdt)
    params["b_xdt"] = jnp.stack(b_xdt)
    params["a_cat"] = jnp.stack(a_cat)
    params["d_cat"] = jnp.stack(d_cat)
    params["w_out_t"] = jnp.stack(w_out_t)
    return params


# TODO(synk): load_pretrained / resize_pos_embed (bicubic checkpoint interpolation) and
# allocate_inference_cache (stateful decoding) have no synthetic-kernel equivalent here.

if __name__ == "__main__":
    key = jax.random.PRNGKey(0)
    kp, kz1, kz2, kx = jax.random.split(key, 4)
    params = init_params(kp)

    B = 2
    T_z = 2
    z_list = [
        jax.random.normal(kz1, (B, 6, IMG, IMG), jnp.float32),
        jax.random.normal(kz2, (B, 6, IMG, IMG), jnp.float32),
    ]
    x = jax.random.normal(kx, (B, 6, IMG, IMG), jnp.float32)

    fwd = jax.jit(lambda p, zl, xx: vision_mamba_forward(
        p, zl, xx, z_frame_ids=None, concat_mode="tsts", scan_mode="spatial_first"))
    out = jax.block_until_ready(fwd(params, z_list, x))

    n_patches = (IMG // PATCH) ** 2
    L_expected = 2 * (T_z * n_patches + n_patches)   # tsts: [t_rgb, s_rgb, t_X, s_X]
    assert out.shape == (B, L_expected, EMBED_DIM), out.shape
    assert bool(jnp.all(jnp.isfinite(out)))
    print("KERNEL_OK")
</pallas_src>

<mosaic_0001>
module attributes {stable_mosaic.version = 11 : i64} {
  func.func @_videomamba_kernel(%arg0: i32, %arg1: i32, %arg2: memref<1x24x192xf32, #tpu.memory_space<vmem>>, %arg3: memref<24x32xf32, #tpu.memory_space<vmem>>, %arg4: memref<192x32xf32, #tpu.memory_space<vmem>>, %arg5: memref<1x32xf32, #tpu.memory_space<vmem>>, %arg6: memref<1x32xf32, #tpu.memory_space<vmem>>, %arg7: memref<1x1x32xf32, #tpu.memory_space<vmem>>, %arg8: memref<1x32x128xf32, #tpu.memory_space<vmem>>, %arg9: memref<1x4x128xf32, #tpu.memory_space<vmem>>, %arg10: memref<1x1x128xf32, #tpu.memory_space<vmem>>, %arg11: memref<1x128x160xf32, #tpu.memory_space<vmem>>, %arg12: memref<1x1x160xf32, #tpu.memory_space<vmem>>, %arg13: memref<1x8x128xf32, #tpu.memory_space<vmem>>, %arg14: memref<1x1x128xf32, #tpu.memory_space<vmem>>, %arg15: memref<1x64x32xf32, #tpu.memory_space<vmem>>, %arg16: memref<1x24x32xf32, #tpu.memory_space<vmem>>, %arg17: memref<27x128xf32, #tpu.memory_space<vmem>>, %arg18: memref<24x1024xf32, #tpu.memory_space<vmem>>, %arg19: memref<24x1024xf32, #tpu.memory_space<vmem>>, %arg20: memref<24x512xf32, #tpu.memory_space<vmem>>, %arg21: memref<24x512xf32, #tpu.memory_space<vmem>>, %arg22: memref<24x32xf32, #tpu.memory_space<vmem>>, %arg23: memref<24x32xf32, #tpu.memory_space<vmem>>) attributes {dimension_semantics = [#tpu.dimension_semantics<parallel>, #tpu.dimension_semantics<arbitrary>], iteration_bounds = array<i64: 2, 2>, scalar_prefetch = 0 : i64, scratch_operands = 7 : i64, tpu.core_type = #tpu.core_type<tc>, window_params = [{transform_indices = @transform_0, window_bounds = array<i64: 1, 24, 192>}, {pipeline_mode = #tpu.pipeline_mode<synchronous>, transform_indices = @transform_1, window_bounds = array<i64: 24, 32>}, {pipeline_mode = #tpu.pipeline_mode<synchronous>, transform_indices = @transform_2, window_bounds = array<i64: 192, 32>}, {pipeline_mode = #tpu.pipeline_mode<synchronous>, transform_indices = @transform_3, window_bounds = array<i64: 1, 32>}, {pipeline_mode = #tpu.pipeline_mode<synchronous>, transform_indices = @transform_4, window_bounds = array<i64: 1, 32>}, {transform_indices = @transform_5, window_bounds = array<i64: 1, 1, 32>}, {transform_indices = @transform_6, window_bounds = array<i64: 1, 32, 128>}, {transform_indices = @transform_7, window_bounds = array<i64: 1, 4, 128>}, {transform_indices = @transform_8, window_bounds = array<i64: 1, 1, 128>}, {transform_indices = @transform_9, window_bounds = array<i64: 1, 128, 160>}, {transform_indices = @transform_10, window_bounds = array<i64: 1, 1, 160>}, {transform_indices = @transform_11, window_bounds = array<i64: 1, 8, 128>}, {transform_indices = @transform_12, window_bounds = array<i64: 1, 1, 128>}, {transform_indices = @transform_13, window_bounds = array<i64: 1, 64, 32>}, {transform_indices = @transform_14, window_bounds = array<i64: 1, 24, 32>}]} {
    %c0_i32 = arith.constant 0 : i32
    %0 = arith.cmpi eq, %arg1, %c0_i32 : i32
    %1 = arith.extui %0 : i1 to i32
    %c0_i32_0 = arith.constant 0 : i32
    %2 = arith.cmpi ne, %1, %c0_i32_0 : i32
    scf.if %2 {
      %c0_278 = arith.constant 0 : index
      %c0_279 = arith.constant 0 : index
      %c0_280 = arith.constant 0 : index
      %753 = vector.load %arg2[%c0_278, %c0_279, %c0_280] : memref<1x24x192xf32, #tpu.memory_space<vmem>>, vector<1x24x192xf32>
      %754 = vector.shape_cast %753 : vector<1x24x192xf32> to vector<24x192xf32>
      %c0_281 = arith.constant 0 : index
      %c0_282 = arith.constant 0 : index
      %755 = vector.load %arg4[%c0_281, %c0_282] : memref<192x32xf32, #tpu.memory_space<vmem>>, vector<192x32xf32>
      %cst_283 = arith.constant dense<0.000000e+00> : vector<24x32xf32>
      %756 = tpu.matmul %754, %755, %cst_283 {dimension_numbers = #tpu.dot_dimension_numbers<[1], [0], [0], [1], [0, 0, 1, 1], [], []>} : vector<24x192xf32>, vector<192x32xf32>, vector<24x32xf32> -> vector<24x32xf32>
      %c0_284 = arith.constant 0 : index
      %c0_285 = arith.constant 0 : index
      %757 = vector.load %arg5[%c0_284, %c0_285] : memref<1x32xf32, #tpu.memory_space<vmem>>, vector<1x32xf32>
      %758 = vector.broadcast %757 : vector<1x32xf32> to vector<24x32xf32>
      %759 = arith.addf %756, %758 : vector<24x32xf32>
      %c0_286 = arith.constant 0 : index
      %c0_287 = arith.constant 0 : index
      %760 = vector.load %arg3[%c0_286, %c0_287] : memref<24x32xf32, #tpu.memory_space<vmem>>, vector<24x32xf32>
      %761 = arith.addf %759, %760 : vector<24x32xf32>
      %c0_288 = arith.constant 0 : index
      %c0_289 = arith.constant 0 : index
      %762 = vector.load %arg22[%c0_288, %c0_289] : memref<24x32xf32, #tpu.memory_space<vmem>>, vector<24x32xf32>
      tpu.vector_store %arg22[%c0_288, %c0_289], %761 {strides = array<i32>} : memref<24x32xf32, #tpu.memory_space<vmem>>, vector<24x32xf32>,
      %cst_290 = arith.constant 0.000000e+00 : f32
      %763 = vector.broadcast %cst_290 : f32 to vector<24x32xf32>
      %c0_291 = arith.constant 0 : index
      %c0_292 = arith.constant 0 : index
      %764 = vector.load %arg23[%c0_291, %c0_292] : memref<24x32xf32, #tpu.memory_space<vmem>>, vector<24x32xf32>
      tpu.vector_store %arg23[%c0_291, %c0_292], %763 {strides = array<i32>} : memref<24x32xf32, #tpu.memory_space<vmem>>, vector<24x32xf32>,
    } else {
    }
    %c0 = arith.constant 0 : index
    %c0_1 = arith.constant 0 : index
    %3 = vector.load %arg22[%c0, %c0_1] : memref<24x32xf32, #tpu.memory_space<vmem>>, vector<24x32xf32>
    %c0_2 = arith.constant 0 : index
    %c0_3 = arith.constant 0 : index
    %4 = vector.load %arg23[%c0_2, %c0_3] : memref<24x32xf32, #tpu.memory_space<vmem>>, vector<24x32xf32>
    %5 = arith.addf %3, %4 : vector<24x32xf32>
    %6 = arith.mulf %5, %5 : vector<24x32xf32>
    %cst = arith.constant dense<0.000000e+00> : vector<24xf32>
    %7 = vector.multi_reduction <add>, %6, %cst [1] : vector<24x32xf32> to vector<24xf32>
    %8 = vector.shape_cast %7 : vector<24xf32> to vector<24x1xf32>
    %cst_4 = arith.constant 3.200000e+01 : f32
    %9 = vector.broadcast %cst_4 : f32 to vector<24x1xf32>
    %10 = arith.divf %8, %9 : vector<24x1xf32>
    %cst_5 = arith.constant 9.99999974E-6 : f32
    %11 = vector.broadcast %cst_5 : f32 to vector<24x1xf32>
    %12 = arith.addf %10, %11 : vector<24x1xf32>
    %13 = math.rsqrt %12 : vector<24x1xf32>
    %14 = vector.broadcast %13 : vector<24x1xf32> to vector<24x32xf32>
    %15 = arith.mulf %5, %14 : vector<24x32xf32>
    %c0_6 = arith.constant 0 : index
    %c0_7 = arith.constant 0 : index
    %c0_8 = arith.constant 0 : index
    %16 = vector.load %arg7[%c0_6, %c0_7, %c0_8] : memref<1x1x32xf32, #tpu.memory_space<vmem>>, vector<1x1x32xf32>
    %17 = vector.shape_cast %16 : vector<1x1x32xf32> to vector<1x32xf32>
    %18 = vector.broadcast %17 : vector<1x32xf32> to vector<24x32xf32>
    %19 = arith.mulf %15, %18 : vector<24x32xf32>
    %c0_9 = arith.constant 0 : index
    %c0_10 = arith.constant 0 : index
    %c0_11 = arith.constant 0 : index
    %20 = vector.load %arg8[%c0_9, %c0_10, %c0_11] : memref<1x32x128xf32, #tpu.memory_space<vmem>>, vector<1x32x128xf32>
    %21 = vector.shape_cast %20 : vector<1x32x128xf32> to vector<32x128xf32>
    %cst_12 = arith.constant dense<0.000000e+00> : vector<24x128xf32>
    %22 = tpu.matmul %19, %21, %cst_12 {dimension_numbers = #tpu.dot_dimension_numbers<[1], [0], [0], [1], [0, 0, 1, 1], [], []>} : vector<24x32xf32>, vector<32x128xf32>, vector<24x128xf32> -> vector<24x128xf32>
    %23 = vector.extract_strided_slice %22 {offsets = [0, 0], sizes = [24, 64], strides = [1, 1]} : vector<24x128xf32> to vector<24x64xf32>
    %24 = vector.extract_strided_slice %22 {offsets = [0, 64], sizes = [24, 64], strides = [1, 1]} : vector<24x128xf32> to vector<24x64xf32>
    %cst_13 = arith.constant 0.000000e+00 : f32
    %25 = vector.broadcast %cst_13 : f32 to vector<3x128xf32>
    %c0_14 = arith.constant 0 : index
    %c0_15 = arith.constant 0 : index
    %26 = vector.load %arg17[%c0_14, %c0_15] : memref<27x128xf32, #tpu.memory_space<vmem>>, vector<3x128xf32>
    tpu.vector_store %arg17[%c0_14, %c0_15], %25 {strides = array<i32>} : memref<27x128xf32, #tpu.memory_space<vmem>>, vector<3x128xf32>,
    %cst_16 = arith.constant 0.000000e+00 : f32
    %27 = vector.broadcast %cst_16 : f32 to vector<3x128xf32>
    %c24 = arith.constant 24 : index
    %c0_17 = arith.constant 0 : index
    %28 = vector.load %arg17[%c24, %c0_17] : memref<27x128xf32, #tpu.memory_space<vmem>>, vector<3x128xf32>
    tpu.vector_store %arg17[%c24, %c0_17], %27 {strides = array<i32>} : memref<27x128xf32, #tpu.memory_space<vmem>>, vector<3x128xf32>,
    %c3 = arith.constant 3 : index
    %c0_18 = arith.constant 0 : index
    %29 = vector.load %arg17[%c3, %c0_18] : memref<27x128xf32, #tpu.memory_space<vmem>>, vector<24x64xf32>
    tpu.vector_store %arg17[%c3, %c0_18], %23 {strides = array<i32>} : memref<27x128xf32, #tpu.memory_space<vmem>>, vector<24x64xf32>,
    %c0_19 = arith.constant 0 : index
    %c64 = arith.constant 64 : index
    %30 = vector.load %arg17[%c0_19, %c64] : memref<27x128xf32, #tpu.memory_space<vmem>>, vector<24x64xf32>
    tpu.vector_store %arg17[%c0_19, %c64], %23 {strides = array<i32>} : memref<27x128xf32, #tpu.memory_space<vmem>>, vector<24x64xf32>,
    %cst_20 = arith.constant 0.000000e+00 : f32
    %31 = vector.broadcast %cst_20 : f32 to vector<24x128xf32>
    %c0_21 = arith.constant 0 : index
    %c0_22 = arith.constant 0 : index
    %32 = vector.load %arg17[%c0_21, %c0_22] : memref<27x128xf32, #tpu.memory_space<vmem>>, vector<24x128xf32>
    %c0_23 = arith.constant 0 : index
    %c0_24 = arith.constant 0 : index
    %c0_25 = arith.constant 0 : index
    %33 = vector.load %arg9[%c0_23, %c0_24, %c0_25] : memref<1x4x128xf32, #tpu.memory_space<vmem>>, vector<1x1x128xf32>
    %34 = vector.shape_cast %33 : vector<1x1x128xf32> to vector<1x128xf32>
    %35 = vector.broadcast %34 : vector<1x128xf32> to vector<24x128xf32>
    %36 = arith.mulf %32, %35 : vector<24x128xf32>
    %37 = arith.addf %31, %36 : vector<24x128xf32>
    %c1 = arith.constant 1 : index
    %c0_26 = arith.constant 0 : index
    %38 = vector.load %arg17[%c1, %c0_26] : memref<27x128xf32, #tpu.memory_space<vmem>>, vector<24x128xf32>
    %c0_27 = arith.constant 0 : index
    %c1_28 = arith.constant 1 : index
    %c0_29 = arith.constant 0 : index
    %39 = vector.load %arg9[%c0_27, %c1_28, %c0_29] : memref<1x4x128xf32, #tpu.memory_space<vmem>>, vector<1x1x128xf32>
    %40 = vector.shape_cast %39 : vector<1x1x128xf32> to vector<1x128xf32>
    %41 = vector.broadcast %40 : vector<1x128xf32> to vector<24x128xf32>
    %42 = arith.mulf %38, %41 : vector<24x128xf32>
    %43 = arith.addf %37, %42 : vector<24x128xf32>
    %c2 = arith.constant 2 : index
    %c0_30 = arith.constant 0 : index
    %44 = vector.load %arg17[%c2, %c0_30] : memref<27x128xf32, #tpu.memory_space<vmem>>, vector<24x128xf32>
    %c0_31 = arith.constant 0 : index
    %c2_32 = arith.constant 2 : index
    %c0_33 = arith.constant 0 : index
    %45 = vector.load %arg9[%c0_31, %c2_32, %c0_33] : memref<1x4x128xf32, #tpu.memory_space<vmem>>, vector<1x1x128xf32>
    %46 = vector.shape_cast %45 : vector<1x1x128xf32> to vector<1x128xf32>
    %47 = vector.broadcast %46 : vector<1x128xf32> to vector<24x128xf32>
    %48 = arith.mulf %44, %47 : vector<24x128xf32>
    %49 = arith.addf %43, %48 : vector<24x128xf32>
    %c3_34 = arith.constant 3 : index
    %c0_35 = arith.constant 0 : index
    %50 = vector.load %arg17[%c3_34, %c0_35] : memref<27x128xf32, #tpu.memory_space<vmem>>, vector<24x128xf32>
    %c0_36 = arith.constant 0 : index
    %c3_37 = arith.constant 3 : index
    %c0_38 = arith.constant 0 : index
    %51 = vector.load %arg9[%c0_36, %c3_37, %c0_38] : memref<1x4x128xf32, #tpu.memory_space<vmem>>, vector<1x1x128xf32>
    %52 = vector.shape_cast %51 : vector<1x1x128xf32> to vector<1x128xf32>
    %53 = vector.broadcast %52 : vector<1x128xf32> to vector<24x128xf32>
    %54 = arith.mulf %50, %53 : vector<24x128xf32>
    %55 = arith.addf %49, %54 : vector<24x128xf32>
    %c0_39 = arith.constant 0 : index
    %c0_40 = arith.constant 0 : index
    %c0_41 = arith.constant 0 : index
    %56 = vector.load %arg10[%c0_39, %c0_40, %c0_41] : memref<1x1x128xf32, #tpu.memory_space<vmem>>, vector<1x1x128xf32>
    %57 = vector.shape_cast %56 : vector<1x1x128xf32> to vector<1x128xf32>
    %58 = vector.broadcast %57 : vector<1x128xf32> to vector<24x128xf32>
    %59 = arith.addf %55, %58 : vector<24x128xf32>
    %cst_42 = arith.constant 0.000000e+00 : f32
    %60 = vector.broadcast %cst_42 : f32 to vector<24x128xf32>
    %61 = arith.subf %60, %59 : vector<24x128xf32>
    %62 = math.exp %61 : vector<24x128xf32>
    %cst_43 = arith.constant 1.000000e+00 : f32
    %63 = vector.broadcast %cst_43 : f32 to vector<24x128xf32>
    %64 = arith.addf %63, %62 : vector<24x128xf32>
    %cst_44 = arith.constant 1.000000e+00 : f32
    %65 = vector.broadcast %cst_44 : f32 to vector<24x128xf32>
    %66 = arith.divf %65, %64 : vector<24x128xf32>
    %67 = arith.mulf %59, %66 : vector<24x128xf32>
    %c0_45 = arith.constant 0 : index
    %c0_46 = arith.constant 0 : index
    %c0_47 = arith.constant 0 : index
    %68 = vector.load %arg11[%c0_45, %c0_46, %c0_47] : memref<1x128x160xf32, #tpu.memory_space<vmem>>, vector<1x128x160xf32>
    %69 = vector.shape_cast %68 : vector<1x128x160xf32> to vector<128x160xf32>
    %cst_48 = arith.constant dense<0.000000e+00> : vector<24x160xf32>
    %70 = tpu.matmul %67, %69, %cst_48 {dimension_numbers = #tpu.dot_dimension_numbers<[1], [0], [0], [1], [0, 0, 1, 1], [], []>} : vector<24x128xf32>, vector<128x160xf32>, vector<24x160xf32> -> vector<24x160xf32>
    %c0_49 = arith.constant 0 : index
    %c0_50 = arith.constant 0 : index
    %c0_51 = arith.constant 0 : index
    %71 = vector.load %arg12[%c0_49, %c0_50, %c0_51] : memref<1x1x160xf32, #tpu.memory_space<vmem>>, vector<1x1x160xf32>
    %72 = vector.shape_cast %71 : vector<1x1x160xf32> to vector<1x160xf32>
    %73 = vector.broadcast %72 : vector<1x160xf32> to vector<24x160xf32>
    %74 = arith.addf %70, %73 : vector<24x160xf32>
    %75 = vector.extract_strided_slice %74 {offsets = [0, 0], sizes = [24, 128], strides = [1, 1]} : vector<24x160xf32> to vector<24x128xf32>
    %cst_52 = arith.constant 2.000000e+01 : f32
    %76 = vector.broadcast %cst_52 : f32 to vector<24x128xf32>
    %77 = arith.cmpf ogt, %75, %76 : vector<24x128xf32>
    %cst_53 = arith.constant 2.000000e+01 : f32
    %78 = vector.broadcast %cst_53 : f32 to vector<24x128xf32>
    %79 = arith.minimumf %75, %78 : vector<24x128xf32>
    %80 = math.exp %79 : vector<24x128xf32>
    %cst_54 = arith.constant 1.000000e+00 : f32
    %81 = vector.broadcast %cst_54 : f32 to vector<24x128xf32>
    %82 = arith.addf %81, %80 : vector<24x128xf32>
    %83 = math.log %82 : vector<24x128xf32>
    %84 = arith.select %77, %75, %83 : vector<24x128xi1>, vector<24x128xf32>
    %85 = vector.extract_strided_slice %74 {offsets = [0, 128], sizes = [24, 8], strides = [1, 1]} : vector<24x160xf32> to vector<24x8xf32>
    %86 = vector.extract_strided_slice %74 {offsets = [0, 136], sizes = [24, 8], strides = [1, 1]} : vector<24x160xf32> to vector<24x8xf32>
    %87 = vector.extract_strided_slice %74 {offsets = [0, 144], sizes = [24, 8], strides = [1, 1]} : vector<24x160xf32> to vector<24x8xf32>
    %88 = vector.extract_strided_slice %74 {offsets = [0, 152], sizes = [24, 8], strides = [1, 1]} : vector<24x160xf32> to vector<24x8xf32>
    %c0_55 = arith.constant 0 : index
    %c0_56 = arith.constant 0 : index
    %c0_57 = arith.constant 0 : index
    %89 = vector.load %arg13[%c0_55, %c0_56, %c0_57] : memref<1x8x128xf32, #tpu.memory_space<vmem>>, vector<1x8x128xf32>
    %90 = vector.shape_cast %89 : vector<1x8x128xf32> to vector<8x128xf32>
    %91 = arith.mulf %84, %67 : vector<24x128xf32>
    %92 = vector.extract_strided_slice %90 {offsets = [0, 0], sizes = [1, 128], strides = [1, 1]} : vector<8x128xf32> to vector<1x128xf32>
    %93 = vector.broadcast %92 : vector<1x128xf32> to vector<24x128xf32>
    %94 = arith.mulf %84, %93 : vector<24x128xf32>
    %95 = math.exp %94 : vector<24x128xf32>
    %96 = vector.extract_strided_slice %95 {offsets = [0, 0], sizes = [24, 64], strides = [1, 1]} : vector<24x128xf32> to vector<24x64xf32>
    %c0_58 = arith.constant 0 : index
    %c0_59 = arith.constant 0 : index
    %97 = vector.load %arg18[%c0_58, %c0_59] : memref<24x1024xf32, #tpu.memory_space<vmem>>, vector<24x64xf32>
    tpu.vector_store %arg18[%c0_58, %c0_59], %96 {strides = array<i32>} : memref<24x1024xf32, #tpu.memory_space<vmem>>, vector<24x64xf32>,
    %98 = vector.extract_strided_slice %95 {offsets = [0, 64], sizes = [24, 64], strides = [1, 1]} : vector<24x128xf32> to vector<24x64xf32>
    %c0_60 = arith.constant 0 : index
    %c0_61 = arith.constant 0 : index
    %99 = vector.load %arg19[%c0_60, %c0_61] : memref<24x1024xf32, #tpu.memory_space<vmem>>, vector<24x64xf32>
    tpu.vector_store %arg19[%c0_60, %c0_61], %98 {strides = array<i32>} : memref<24x1024xf32, #tpu.memory_space<vmem>>, vector<24x64xf32>,
    %100 = vector.extract_strided_slice %91 {offsets = [0, 0], sizes = [24, 64], strides = [1, 1]} : vector<24x128xf32> to vector<24x64xf32>
    %101 = vector.extract_strided_slice %85 {offsets = [0, 0], sizes = [24, 1], strides = [1, 1]} : vector<24x8xf32> to vector<24x1xf32>
    %102 = vector.broadcast %101 : vector<24x1xf32> to vector<24x64xf32>
    %103 = arith.mulf %100, %102 : vector<24x64xf32>
    %c0_62 = arith.constant 0 : index
    %c512 = arith.constant 512 : index
    %104 = vector.load %arg18[%c0_62, %c512] : memref<24x1024xf32, #tpu.memory_space<vmem>>, vector<24x64xf32>
    tpu.vector_store %arg18[%c0_62, %c512], %103 {strides = array<i32>} : memref<24x1024xf32, #tpu.memory_space<vmem>>, vector<24x64xf32>,
    %105 = vector.extract_strided_slice %91 {offsets = [0, 64], sizes = [24, 64], strides = [1, 1]} : vector<24x128xf32> to vector<24x64xf32>
    %106 = vector.extract_strided_slice %87 {offsets = [0, 0], sizes = [24, 1], strides = [1, 1]} : vector<24x8xf32> to vector<24x1xf32>
    %107 = vector.broadcast %106 : vector<24x1xf32> to vector<24x64xf32>
    %108 = arith.mulf %105, %107 : vector<24x64xf32>
    %c0_63 = arith.constant 0 : index
    %c512_64 = arith.constant 512 : index
    %109 = vector.load %arg19[%c0_63, %c512_64] : memref<24x1024xf32, #tpu.memory_space<vmem>>, vector<24x64xf32>
    tpu.vector_store %arg19[%c0_63, %c512_64], %108 {strides = array<i32>} : memref<24x1024xf32, #tpu.memory_space<vmem>>, vector<24x64xf32>,
    %110 = vector.extract_strided_slice %90 {offsets = [1, 0], sizes = [1, 128], strides = [1, 1]} : vector<8x128xf32> to vector<1x128xf32>
    %111 = vector.broadcast %110 : vector<1x128xf32> to vector<24x128xf32>
    %112 = arith.mulf %84, %111 : vector<24x128xf32>
    %113 = math.exp %112 : vector<24x128xf32>
    %114 = vector.extract_strided_slice %113 {offsets = [0, 0], sizes = [24, 64], strides = [1, 1]} : vector<24x128xf32> to vector<24x64xf32>
    %c0_65 = arith.constant 0 : index
    %c64_66 = arith.constant 64 : index
    %115 = vector.load %arg18[%c0_65, %c64_66] : memref<24x1024xf32, #tpu.memory_space<vmem>>, vector<24x64xf32>
    tpu.vector_store %arg18[%c0_65, %c64_66], %114 {strides = array<i32>} : memref<24x1024xf32, #tpu.memory_space<vmem>>, vector<24x64xf32>,
    %116 = vector.extract_strided_slice %113 {offsets = [0, 64], sizes = [24, 64], strides = [1, 1]} : vector<24x128xf32> to vector<24x64xf32>
    %c0_67 = arith.constant 0 : index
    %c64_68 = arith.constant 64 : index
    %117 = vector.load %arg19[%c0_67, %c64_68] : memref<24x1024xf32, #tpu.memory_space<vmem>>, vector<24x64xf32>
    tpu.vector_store %arg19[%c0_67, %c64_68], %116 {strides = array<i32>} : memref<24x1024xf32, #tpu.memory_space<vmem>>, vector<24x64xf32>,
    %118 = vector.extract_strided_slice %91 {offsets = [0, 0], sizes = [24, 64], strides = [1, 1]} : vector<24x128xf32> to vector<24x64xf32>
    %119 = vector.extract_strided_slice %85 {offsets = [0, 1], sizes = [24, 1], strides = [1, 1]} : vector<24x8xf32> to vector<24x1xf32>
    %120 = vector.broadcast %119 : vector<24x1xf32> to vector<24x64xf32>
    %121 = arith.mulf %118, %120 : vector<24x64xf32>
    %c0_69 = arith.constant 0 : index
    %c576 = arith.constant 576 : index
    %122 = vector.load %arg18[%c0_69, %c576] : memref<24x1024xf32, #tpu.memory_space<vmem>>, vector<24x64xf32>
    tpu.vector_store %arg18[%c0_69, %c576], %121 {strides = array<i32>} : memref<24x1024xf32, #tpu.memory_space<vmem>>, vector<24x64xf32>,
    %123 = vector.extract_strided_slice %91 {offsets = [0, 64], sizes = [24, 64], strides = [1, 1]} : vector<24x128xf32> to vector<24x64xf32>
    %124 = vector.extract_strided_slice %87 {offsets = [0, 1], sizes = [24, 1], strides = [1, 1]} : vector<24x8xf32> to vector<24x1xf32>
    %125 = vector.broadcast %124 : vector<24x1xf32> to vector<24x64xf32>
    %126 = arith.mulf %123, %125 : vector<24x64xf32>
    %c0_70 = arith.constant 0 : index
    %c576_71 = arith.constant 576 : index
    %127 = vector.load %arg19[%c0_70, %c576_71] : memref<24x1024xf32, #tpu.memory_space<vmem>>, vector<24x64xf32>
    tpu.vector_store %arg19[%c0_70, %c576_71], %126 {strides = array<i32>} : memref<24x1024xf32, #tpu.memory_space<vmem>>, vector<24x64xf32>,
    %128 = vector.extract_strided_slice %90 {offsets = [2, 0], sizes = [1, 128], strides = [1, 1]} : vector<8x128xf32> to vector<1x128xf32>
    %129 = vector.broadcast %128 : vector<1x128xf32> to vector<24x128xf32>
    %130 = arith.mulf %84, %129 : vector<24x128xf32>
    %131 = math.exp %130 : vector<24x128xf32>
    %132 = vector.extract_strided_slice %131 {offsets = [0, 0], sizes = [24, 64], strides = [1, 1]} : vector<24x128xf32> to vector<24x64xf32>
    %c0_72 = arith.constant 0 : index
    %c128 = arith.constant 128 : index
    %133 = vector.load %arg18[%c0_72, %c128] : memref<24x1024xf32, #tpu.memory_space<vmem>>, vector<24x64xf32>
    tpu.vector_store %arg18[%c0_72, %c128], %132 {strides = array<i32>} : memref<24x1024xf32, #tpu.memory_space<vmem>>, vector<24x64xf32>,
    %134 = vector.extract_strided_slice %131 {offsets = [0, 64], sizes = [24, 64], strides = [1, 1]} : vector<24x128xf32> to vector<24x64xf32>
    %c0_73 = arith.constant 0 : index
    %c128_74 = arith.constant 128 : index
    %135 = vector.load %arg19[%c0_73, %c128_74] : memref<24x1024xf32, #tpu.memory_space<vmem>>, vector<24x64xf32>
    tpu.vector_store %arg19[%c0_73, %c128_74], %134 {strides = array<i32>} : memref<24x1024xf32, #tpu.memory_space<vmem>>, vector<24x64xf32>,
    %136 = vector.extract_strided_slice %91 {offsets = [0, 0], sizes = [24, 64], strides = [1, 1]} : vector<24x128xf32> to vector<24x64xf32>
    %137 = vector.extract_strided_slice %85 {offsets = [0, 2], sizes = [24, 1], strides = [1, 1]} : vector<24x8xf32> to vector<24x1xf32>
    %138 = vector.broadcast %137 : vector<24x1xf32> to vector<24x64xf32>
    %139 = arith.mulf %136, %138 : vector<24x64xf32>
    %c0_75 = arith.constant 0 : index
    %c640 = arith.constant 640 : index
    %140 = vector.load %arg18[%c0_75, %c640] : memref<24x1024xf32, #tpu.memory_space<vmem>>, vector<24x64xf32>
    tpu.vector_store %arg18[%c0_75, %c640], %139 {strides = array<i32>} : memref<24x1024xf32, #tpu.memory_space<vmem>>, vector<24x64xf32>,
    %141 = vector.extract_strided_slice %91 {offsets = [0, 64], sizes = [24, 64], strides = [1, 1]} : vector<24x128xf32> to vector<24x64xf32>
    %142 = vector.extract_strided_slice %87 {offsets = [0, 2], sizes = [24, 1], strides = [1, 1]} : vector<24x8xf32> to vector<24x1xf32>
    %143 = vector.broadcast %142 : vector<24x1xf32> to vector<24x64xf32>
    %144 = arith.mulf %141, %143 : vector<24x64xf32>
    %c0_76 = arith.constant 0 : index
    %c640_77 = arith.constant 640 : index
    %145 = vector.load %arg19[%c0_76, %c640_77] : memref<24x1024xf32, #tpu.memory_space<vmem>>, vector<24x64xf32>
    tpu.vector_store %arg19[%c0_76, %c640_77], %144 {strides = array<i32>} : memref<24x1024xf32, #tpu.memory_space<vmem>>, vector<24x64xf32>,
    %146 = vector.extract_strided_slice %90 {offsets = [3, 0], sizes = [1, 128], strides = [1, 1]} : vector<8x128xf32> to vector<1x128xf32>
    %147 = vector.broadcast %146 : vector<1x128xf32> to vector<24x128xf32>
    %148 = arith.mulf %84, %147 : vector<24x128xf32>
    %149 = math.exp %148 : vector<24x128xf32>
    %150 = vector.extract_strided_slice %149 {offsets = [0, 0], sizes = [24, 64], strides = [1, 1]} : vector<24x128xf32> to vector<24x64xf32>
    %c0_78 = arith.constant 0 : index
    %c192 = arith.constant 192 : index
    %151 = vector.load %arg18[%c0_78, %c192] : memref<24x1024xf32, #tpu.memory_space<vmem>>, vector<24x64xf32>
    tpu.vector_store %arg18[%c0_78, %c192], %150 {strides = array<i32>} : memref<24x1024xf32, #tpu.memory_space<vmem>>, vector<24x64xf32>,
    %152 = vector.extract_strided_slice %149 {offsets = [0, 64], sizes = [24, 64], strides = [1, 1]} : vector<24x128xf32> to vector<24x64xf32>
    %c0_79 = arith.constant 0 : index
    %c192_80 = arith.constant 192 : index
    %153 = vector.load %arg19[%c0_79, %c192_80] : memref<24x1024xf32, #tpu.memory_space<vmem>>, vector<24x64xf32>
    tpu.vector_store %arg19[%c0_79, %c192_80], %152 {strides = array<i32>} : memref<24x1024xf32, #tpu.memory_space<vmem>>, vector<24x64xf32>,
    %154 = vector.extract_strided_slice %91 {offsets = [0, 0], sizes = [24, 64], strides = [1, 1]} : vector<24x128xf32> to vector<24x64xf32>
    %155 = vector.extract_strided_slice %85 {offsets = [0, 3], sizes = [24, 1], strides = [1, 1]} : vector<24x8xf32> to vector<24x1xf32>
    %156 = vector.broadcast %155 : vector<24x1xf32> to vector<24x64xf32>
    %157 = arith.mulf %154, %156 : vector<24x64xf32>
    %c0_81 = arith.constant 0 : index
    %c704 = arith.constant 704 : index
    %158 = vector.load %arg18[%c0_81, %c704] : memref<24x1024xf32, #tpu.memory_space<vmem>>, vector<24x64xf32>
    tpu.vector_store %arg18[%c0_81, %c704], %157 {strides = array<i32>} : memref<24x1024xf32, #tpu.memory_space<vmem>>, vector<24x64xf32>,
    %159 = vector.extract_strided_slice %91 {offsets = [0, 64], sizes = [24, 64], strides = [1, 1]} : vector<24x128xf32> to vector<24x64xf32>
    %160 = vector.extract_strided_slice %87 {offsets = [0, 3], sizes = [24, 1], strides = [1, 1]} : vector<24x8xf32> to vector<24x1xf32>
    %161 = vector.broadcast %160 : vector<24x1xf32> to vector<24x64xf32>
    %162 = arith.mulf %159, %161 : vector<24x64xf32>
    %c0_82 = arith.constant 0 : index
    %c704_83 = arith.constant 704 : index
    %163 = vector.load %arg19[%c0_82, %c704_83] : memref<24x1024xf32, #tpu.memory_space<vmem>>, vector<24x64xf32>
    tpu.vector_store %arg19[%c0_82, %c704_83], %162 {strides = array<i32>} : memref<24x1024xf32, #tpu.memory_space<vmem>>, vector<24x64xf32>,
    %164 = vector.extract_strided_slice %90 {offsets = [4, 0], sizes = [1, 128], strides = [1, 1]} : vector<8x128xf32> to vector<1x128xf32>
    %165 = vector.broadcast %164 : vector<1x128xf32> to vector<24x128xf32>
    %166 = arith.mulf %84, %165 : vector<24x128xf32>
    %167 = math.exp %166 : vector<24x128xf32>
    %168 = vector.extract_strided_slice %167 {offsets = [0, 0], sizes = [24, 64], strides = [1, 1]} : vector<24x128xf32> to vector<24x64xf32>
    %c0_84 = arith.constant 0 : index
    %c256 = arith.constant 256 : index
    %169 = vector.load %arg18[%c0_84, %c256] : memref<24x1024xf32, #tpu.memory_space<vmem>>, vector<24x64xf32>
    tpu.vector_store %arg18[%c0_84, %c256], %168 {strides = array<i32>} : memref<24x1024xf32, #tpu.memory_space<vmem>>, vector<24x64xf32>,
    %170 = vector.extract_strided_slice %167 {offsets = [0, 64], sizes = [24, 64], strides = [1, 1]} : vector<24x128xf32> to vector<24x64xf32>
    %c0_85 = arith.constant 0 : index
    %c256_86 = arith.constant 256 : index
    %171 = vector.load %arg19[%c0_85, %c256_86] : memref<24x1024xf32, #tpu.memory_space<vmem>>, vector<24x64xf32>
    tpu.vector_store %arg19[%c0_85, %c256_86], %170 {strides = array<i32>} : memref<24x1024xf32, #tpu.memory_space<vmem>>, vector<24x64xf32>,
    %172 = vector.extract_strided_slice %91 {offsets = [0, 0], sizes = [24, 64], strides = [1, 1]} : vector<24x128xf32> to vector<24x64xf32>
    %173 = vector.extract_strided_slice %85 {offsets = [0, 4], sizes = [24, 1], strides = [1, 1]} : vector<24x8xf32> to vector<24x1xf32>
    %174 = vector.broadcast %173 : vector<24x1xf32> to vector<24x64xf32>
    %175 = arith.mulf %172, %174 : vector<24x64xf32>
    %c0_87 = arith.constant 0 : index
    %c768 = arith.constant 768 : index
    %176 = vector.load %arg18[%c0_87, %c768] : memref<24x1024xf32, #tpu.memory_space<vmem>>, vector<24x64xf32>
    tpu.vector_store %arg18[%c0_87, %c768], %175 {strides = array<i32>} : memref<24x1024xf32, #tpu.memory_space<vmem>>, vector<24x64xf32>,
    %177 = vector.extract_strided_slice %91 {offsets = [0, 64], sizes = [24, 64], strides = [1, 1]} : vector<24x128xf32> to vector<24x64xf32>
    %178 = vector.extract_strided_slice %87 {offsets = [0, 4], sizes = [24, 1], strides = [1, 1]} : vector<24x8xf32> to vector<24x1xf32>
    %179 = vector.broadcast %178 : vector<24x1xf32> to vector<24x64xf32>
    %180 = arith.mulf %177, %179 : vector<24x64xf32>
    %c0_88 = arith.constant 0 : index
    %c768_89 = arith.constant 768 : index
    %181 = vector.load %arg19[%c0_88, %c768_89] : memref<24x1024xf32, #tpu.memory_space<vmem>>, vector<24x64xf32>
    tpu.vector_store %arg19[%c0_88, %c768_89], %180 {strides = array<i32>} : memref<24x1024xf32, #tpu.memory_space<vmem>>, vector<24x64xf32>,
    %182 = vector.extract_strided_slice %90 {offsets = [5, 0], sizes = [1, 128], strides = [1, 1]} : vector<8x128xf32> to vector<1x128xf32>
    %183 = vector.broadcast %182 : vector<1x128xf32> to vector<24x128xf32>
    %184 = arith.mulf %84, %183 : vector<24x128xf32>
    %185 = math.exp %184 : vector<24x128xf32>
    %186 = vector.extract_strided_slice %185 {offsets = [0, 0], sizes = [24, 64], strides = [1, 1]} : vector<24x128xf32> to vector<24x64xf32>
    %c0_90 = arith.constant 0 : index
    %c320 = arith.constant 320 : index
    %187 = vector.load %arg18[%c0_90, %c320] : memref<24x1024xf32, #tpu.memory_space<vmem>>, vector<24x64xf32>
    tpu.vector_store %arg18[%c0_90, %c320], %186 {strides = array<i32>} : memref<24x1024xf32, #tpu.memory_space<vmem>>, vector<24x64xf32>,
    %188 = vector.extract_strided_slice %185 {offsets = [0, 64], sizes = [24, 64], strides = [1, 1]} : vector<24x128xf32> to vector<24x64xf32>
    %c0_91 = arith.constant 0 : index
    %c320_92 = arith.constant 320 : index
    %189 = vector.load %arg19[%c0_91, %c320_92] : memref<24x1024xf32, #tpu.memory_space<vmem>>, vector<24x64xf32>
    tpu.vector_store %arg19[%c0_91, %c320_92], %188 {strides = array<i32>} : memref<24x1024xf32, #tpu.memory_space<vmem>>, vector<24x64xf32>,
    %190 = vector.extract_strided_slice %91 {offsets = [0, 0], sizes = [24, 64], strides = [1, 1]} : vector<24x128xf32> to vector<24x64xf32>
    %191 = vector.extract_strided_slice %85 {offsets = [0, 5], sizes = [24, 1], strides = [1, 1]} : vector<24x8xf32> to vector<24x1xf32>
    %192 = vector.broadcast %191 : vector<24x1xf32> to vector<24x64xf32>
    %193 = arith.mulf %190, %192 : vector<24x64xf32>
    %c0_93 = arith.constant 0 : index
    %c832 = arith.constant 832 : index
    %194 = vector.load %arg18[%c0_93, %c832] : memref<24x1024xf32, #tpu.memory_space<vmem>>, vector<24x64xf32>
    tpu.vector_store %arg18[%c0_93, %c832], %193 {strides = array<i32>} : memref<24x1024xf32, #tpu.memory_space<vmem>>, vector<24x64xf32>,
    %195 = vector.extract_strided_slice %91 {offsets = [0, 64], sizes = [24, 64], strides = [1, 1]} : vector<24x128xf32> to vector<24x64xf32>
    %196 = vector.extract_strided_slice %87 {offsets = [0, 5], sizes = [24, 1], strides = [1, 1]} : vector<24x8xf32> to vector<24x1xf32>
    %197 = vector.broadcast %196 : vector<24x1xf32> to vector<24x64xf32>
    %198 = arith.mulf %195, %197 : vector<24x64xf32>
    %c0_94 = arith.constant 0 : index
    %c832_95 = arith.constant 832 : index
    %199 = vector.load %arg19[%c0_94, %c832_95] : memref<24x1024xf32, #tpu.memory_space<vmem>>, vector<24x64xf32>
    tpu.vector_store %arg19[%c0_94, %c832_95], %198 {strides = array<i32>} : memref<24x1024xf32, #tpu.memory_space<vmem>>, vector<24x64xf32>,
    %200 = vector.extract_strided_slice %90 {offsets = [6, 0], sizes = [1, 128], strides = [1, 1]} : vector<8x128xf32> to vector<1x128xf32>
    %201 = vector.broadcast %200 : vector<1x128xf32> to vector<24x128xf32>
    %202 = arith.mulf %84, %201 : vector<24x128xf32>
    %203 = math.exp %202 : vector<24x128xf32>
    %204 = vector.extract_strided_slice %203 {offsets = [0, 0], sizes = [24, 64], strides = [1, 1]} : vector<24x128xf32> to vector<24x64xf32>
    %c0_96 = arith.constant 0 : index
    %c384 = arith.constant 384 : index
    %205 = vector.load %arg18[%c0_96, %c384] : memref<24x1024xf32, #tpu.memory_space<vmem>>, vector<24x64xf32>
    tpu.vector_store %arg18[%c0_96, %c384], %204 {strides = array<i32>} : memref<24x1024xf32, #tpu.memory_space<vmem>>, vector<24x64xf32>,
    %206 = vector.extract_strided_slice %203 {offsets = [0, 64], sizes = [24, 64], strides = [1, 1]} : vector<24x128xf32> to vector<24x64xf32>
    %c0_97 = arith.constant 0 : index
    %c384_98 = arith.constant 384 : index
    %207 = vector.load %arg19[%c0_97, %c384_98] : memref<24x1024xf32, #tpu.memory_space<vmem>>, vector<24x64xf32>
    tpu.vector_store %arg19[%c0_97, %c384_98], %206 {strides = array<i32>} : memref<24x1024xf32, #tpu.memory_space<vmem>>, vector<24x64xf32>,
    %208 = vector.extract_strided_slice %91 {offsets = [0, 0], sizes = [24, 64], strides = [1, 1]} : vector<24x128xf32> to vector<24x64xf32>
    %209 = vector.extract_strided_slice %85 {offsets = [0, 6], sizes = [24, 1], strides = [1, 1]} : vector<24x8xf32> to vector<24x1xf32>
    %210 = vector.broadcast %209 : vector<24x1xf32> to vector<24x64xf32>
    %211 = arith.mulf %208, %210 : vector<24x64xf32>
    %c0_99 = arith.constant 0 : index
    %c896 = arith.constant 896 : index
    %212 = vector.load %arg18[%c0_99, %c896] : memref<24x1024xf32, #tpu.memory_space<vmem>>, vector<24x64xf32>
    tpu.vector_store %arg18[%c0_99, %c896], %211 {strides = array<i32>} : memref<24x1024xf32, #tpu.memory_space<vmem>>, vector<24x64xf32>,
    %213 = vector.extract_strided_slice %91 {offsets = [0, 64], sizes = [24, 64], strides = [1, 1]} : vector<24x128xf32> to vector<24x64xf32>
    %214 = vector.extract_strided_slice %87 {offsets = [0, 6], sizes = [24, 1], strides = [1, 1]} : vector<24x8xf32> to vector<24x1xf32>
    %215 = vector.broadcast %214 : vector<24x1xf32> to vector<24x64xf32>
    %216 = arith.mulf %213, %215 : vector<24x64xf32>
    %c0_100 = arith.constant 0 : index
    %c896_101 = arith.constant 896 : index
    %217 = vector.load %arg19[%c0_100, %c896_101] : memref<24x1024xf32, #tpu.memory_space<vmem>>, vector<24x64xf32>
    tpu.vector_store %arg19[%c0_100, %c896_101], %216 {strides = array<i32>} : memref<24x1024xf32, #tpu.memory_space<vmem>>, vector<24x64xf32>,
    %218 = vector.extract_strided_slice %90 {offsets = [7, 0], sizes = [1, 128], strides = [1, 1]} : vector<8x128xf32> to vector<1x128xf32>
    %219 = vector.broadcast %218 : vector<1x128xf32> to vector<24x128xf32>
    %220 = arith.mulf %84, %219 : vector<24x128xf32>
    %221 = math.exp %220 : vector<24x128xf32>
    %222 = vector.extract_strided_slice %221 {offsets = [0, 0], sizes = [24, 64], strides = [1, 1]} : vector<24x128xf32> to vector<24x64xf32>
    %c0_102 = arith.constant 0 : index
    %c448 = arith.constant 448 : index
    %223 = vector.load %arg18[%c0_102, %c448] : memref<24x1024xf32, #tpu.memory_space<vmem>>, vector<24x64xf32>
    tpu.vector_store %arg18[%c0_102, %c448], %222 {strides = array<i32>} : memref<24x1024xf32, #tpu.memory_space<vmem>>, vector<24x64xf32>,
    %224 = vector.extract_strided_slice %221 {offsets = [0, 64], sizes = [24, 64], strides = [1, 1]} : vector<24x128xf32> to vector<24x64xf32>
    %c0_103 = arith.constant 0 : index
    %c448_104 = arith.constant 448 : index
    %225 = vector.load %arg19[%c0_103, %c448_104] : memref<24x1024xf32, #tpu.memory_space<vmem>>, vector<24x64xf32>
    tpu.vector_store %arg19[%c0_103, %c448_104], %224 {strides = array<i32>} : memref<24x1024xf32, #tpu.memory_space<vmem>>, vector<24x64xf32>,
    %226 = vector.extract_strided_slice %91 {offsets = [0, 0], sizes = [24, 64], strides = [1, 1]} : vector<24x128xf32> to vector<24x64xf32>
    %227 = vector.extract_strided_slice %85 {offsets = [0, 7], sizes = [24, 1], strides = [1, 1]} : vector<24x8xf32> to vector<24x1xf32>
    %228 = vector.broadcast %227 : vector<24x1xf32> to vector<24x64xf32>
    %229 = arith.mulf %226, %228 : vector<24x64xf32>
    %c0_105 = arith.constant 0 : index
    %c960 = arith.constant 960 : index
    %230 = vector.load %arg18[%c0_105, %c960] : memref<24x1024xf32, #tpu.memory_space<vmem>>, vector<24x64xf32>
    tpu.vector_store %arg18[%c0_105, %c960], %229 {strides = array<i32>} : memref<24x1024xf32, #tpu.memory_space<vmem>>, vector<24x64xf32>,
    %231 = vector.extract_strided_slice %91 {offsets = [0, 64], sizes = [24, 64], strides = [1, 1]} : vector<24x128xf32> to vector<24x64xf32>
    %232 = vector.extract_strided_slice %87 {offsets = [0, 7], sizes = [24, 1], strides = [1, 1]} : vector<24x8xf32> to vector<24x1xf32>
    %233 = vector.broadcast %232 : vector<24x1xf32> to vector<24x64xf32>
    %234 = arith.mulf %231, %233 : vector<24x64xf32>
    %c0_106 = arith.constant 0 : index
    %c960_107 = arith.constant 960 : index
    %235 = vector.load %arg19[%c0_106, %c960_107] : memref<24x1024xf32, #tpu.memory_space<vmem>>, vector<24x64xf32>
    tpu.vector_store %arg19[%c0_106, %c960_107], %234 {strides = array<i32>} : memref<24x1024xf32, #tpu.memory_space<vmem>>, vector<24x64xf32>,
    %cst_108 = arith.constant 0.000000e+00 : f32
    %236 = vector.broadcast %cst_108 : f32 to vector<1x512xf32>
    %c0_i32_109 = arith.constant 0 : i32
    %c23_i32 = arith.constant 23 : i32
    %237 = arith.subi %c23_i32, %c0_i32_109 : i32
    %238 = arith.index_cast %c0_i32_109 : i32 to index
    %c0_110 = arith.constant 0 : index
    %239 = vector.load %arg18[%238, %c0_110] : memref<24x1024xf32, #tpu.memory_space<vmem>>, vector<1x1024xf32>
    %240 = vector.extract_strided_slice %239 {offsets = [0, 0], sizes = [1, 512], strides = [1, 1]} : vector<1x1024xf32> to vector<1x512xf32>
    %241 = arith.mulf %240, %236 : vector<1x512xf32>
    %242 = vector.extract_strided_slice %239 {offsets = [0, 512], sizes = [1, 512], strides = [1, 1]} : vector<1x1024xf32> to vector<1x512xf32>
    %243 = arith.addf %241, %242 : vector<1x512xf32>
    %244 = arith.index_cast %c0_i32_109 : i32 to index
    %c0_111 = arith.constant 0 : index
    %245 = vector.load %arg20[%244, %c0_111] : memref<24x512xf32, #tpu.memory_space<vmem>>, vector<1x512xf32>
    tpu.vector_store %arg20[%244, %c0_111], %243 {strides = array<i32>} : memref<24x512xf32, #tpu.memory_space<vmem>>, vector<1x512xf32>,
    %246 = arith.index_cast %237 : i32 to index
    %c0_112 = arith.constant 0 : index
    %247 = vector.load %arg19[%246, %c0_112] : memref<24x1024xf32, #tpu.memory_space<vmem>>, vector<1x1024xf32>
    %248 = vector.extract_strided_slice %247 {offsets = [0, 0], sizes = [1, 512], strides = [1, 1]} : vector<1x1024xf32> to vector<1x512xf32>
    %249 = arith.mulf %248, %236 : vector<1x512xf32>
    %250 = vector.extract_strided_slice %247 {offsets = [0, 512], sizes = [1, 512], strides = [1, 1]} : vector<1x1024xf32> to vector<1x512xf32>
    %251 = arith.addf %249, %250 : vector<1x512xf32>
    %252 = arith.index_cast %237 : i32 to index
    %c0_113 = arith.constant 0 : index
    %253 = vector.load %arg21[%252, %c0_113] : memref<24x512xf32, #tpu.memory_space<vmem>>, vector<1x512xf32>
    tpu.vector_store %arg21[%252, %c0_113], %251 {strides = array<i32>} : memref<24x512xf32, #tpu.memory_space<vmem>>, vector<1x512xf32>,
    %c1_i32 = arith.constant 1 : i32
    %c23_i32_114 = arith.constant 23 : i32
    %254 = arith.subi %c23_i32_114, %c1_i32 : i32
    %255 = arith.index_cast %c1_i32 : i32 to index
    %c0_115 = arith.constant 0 : index
    %256 = vector.load %arg18[%255, %c0_115] : memref<24x1024xf32, #tpu.memory_space<vmem>>, vector<1x1024xf32>
    %257 = vector.extract_strided_slice %256 {offsets = [0, 0], sizes = [1, 512], strides = [1, 1]} : vector<1x1024xf32> to vector<1x512xf32>
    %258 = arith.mulf %257, %243 : vector<1x512xf32>
    %259 = vector.extract_strided_slice %256 {offsets = [0, 512], sizes = [1, 512], strides = [1, 1]} : vector<1x1024xf32> to vector<1x512xf32>
    %260 = arith.addf %258, %259 : vector<1x512xf32>
    %261 = arith.index_cast %c1_i32 : i32 to index
    %c0_116 = arith.constant 0 : index
    %262 = vector.load %arg20[%261, %c0_116] : memref<24x512xf32, #tpu.memory_space<vmem>>, vector<1x512xf32>
    tpu.vector_store %arg20[%261, %c0_116], %260 {strides = array<i32>} : memref<24x512xf32, #tpu.memory_space<vmem>>, vector<1x512xf32>,
    %263 = arith.index_cast %254 : i32 to index
    %c0_117 = arith.constant 0 : index
    %264 = vector.load %arg19[%263, %c0_117] : memref<24x1024xf32, #tpu.memory_space<vmem>>, vector<1x1024xf32>
    %265 = vector.extract_strided_slice %264 {offsets = [0, 0], sizes = [1, 512], strides = [1, 1]} : vector<1x1024xf32> to vector<1x512xf32>
    %266 = arith.mulf %265, %251 : vector<1x512xf32>
    %267 = vector.extract_strided_slice %264 {offsets = [0, 512], sizes = [1, 512], strides = [1, 1]} : vector<1x1024xf32> to vector<1x512xf32>
    %268 = arith.addf %266, %267 : vector<1x512xf32>
    %269 = arith.index_cast %254 : i32 to index
    %c0_118 = arith.constant 0 : index
    %270 = vector.load %arg21[%269, %c0_118] : memref<24x512xf32, #tpu.memory_space<vmem>>, vector<1x512xf32>
    tpu.vector_store %arg21[%269, %c0_118], %268 {strides = array<i32>} : memref<24x512xf32, #tpu.memory_space<vmem>>, vector<1x512xf32>,
    %c2_i32 = arith.constant 2 : i32
    %c23_i32_119 = arith.constant 23 : i32
    %271 = arith.subi %c23_i32_119, %c2_i32 : i32
    %272 = arith.index_cast %c2_i32 : i32 to index
    %c0_120 = arith.constant 0 : index
    %273 = vector.load %arg18[%272, %c0_120] : memref<24x1024xf32, #tpu.memory_space<vmem>>, vector<1x1024xf32>
    %274 = vector.extract_strided_slice %273 {offsets = [0, 0], sizes = [1, 512], strides = [1, 1]} : vector<1x1024xf32> to vector<1x512xf32>
    %275 = arith.mulf %274, %260 : vector<1x512xf32>
    %276 = vector.extract_strided_slice %273 {offsets = [0, 512], sizes = [1, 512], strides = [1, 1]} : vector<1x1024xf32> to vector<1x512xf32>
    %277 = arith.addf %275, %276 : vector<1x512xf32>
    %278 = arith.index_cast %c2_i32 : i32 to index
    %c0_121 = arith.constant 0 : index
    %279 = vector.load %arg20[%278, %c0_121] : memref<24x512xf32, #tpu.memory_space<vmem>>, vector<1x512xf32>
    tpu.vector_store %arg20[%278, %c0_121], %277 {strides = array<i32>} : memref<24x512xf32, #tpu.memory_space<vmem>>, vector<1x512xf32>,
    %280 = arith.index_cast %271 : i32 to index
    %c0_122 = arith.constant 0 : index
    %281 = vector.load %arg19[%280, %c0_122] : memref<24x1024xf32, #tpu.memory_space<vmem>>, vector<1x1024xf32>
    %282 = vector.extract_strided_slice %281 {offsets = [0, 0], sizes = [1, 512], strides = [1, 1]} : vector<1x1024xf32> to vector<1x512xf32>
    %283 = arith.mulf %282, %268 : vector<1x512xf32>
    %284 = vector.extract_strided_slice %281 {offsets = [0, 512], sizes = [1, 512], strides = [1, 1]} : vector<1x1024xf32> to vector<1x512xf32>
    %285 = arith.addf %283, %284 : vector<1x512xf32>
    %286 = arith.index_cast %271 : i32 to index
    %c0_123 = arith.constant 0 : index
    %287 = vector.load %arg21[%286, %c0_123] : memref<24x512xf32, #tpu.memory_space<vmem>>, vector<1x512xf32>
    tpu.vector_store %arg21[%286, %c0_123], %285 {strides = array<i32>} : memref<24x512xf32, #tpu.memory_space<vmem>>, vector<1x512xf32>,
    %c3_i32 = arith.constant 3 : i32
    %c23_i32_124 = arith.constant 23 : i32
    %288 = arith.subi %c23_i32_124, %c3_i32 : i32
    %289 = arith.index_cast %c3_i32 : i32 to index
    %c0_125 = arith.constant 0 : index
    %290 = vector.load %arg18[%289, %c0_125] : memref<24x1024xf32, #tpu.memory_space<vmem>>, vector<1x1024xf32>
    %291 = vector.extract_strided_slice %290 {offsets = [0, 0], sizes = [1, 512], strides = [1, 1]} : vector<1x1024xf32> to vector<1x512xf32>
    %292 = arith.mulf %291, %277 : vector<1x512xf32>
    %293 = vector.extract_strided_slice %290 {offsets = [0, 512], sizes = [1, 512], strides = [1, 1]} : vector<1x1024xf32> to vector<1x512xf32>
    %294 = arith.addf %292, %293 : vector<1x512xf32>
    %295 = arith.index_cast %c3_i32 : i32 to index
    %c0_126 = arith.constant 0 : index
    %296 = vector.load %arg20[%295, %c0_126] : memref<24x512xf32, #tpu.memory_space<vmem>>, vector<1x512xf32>
    tpu.vector_store %arg20[%295, %c0_126], %294 {strides = array<i32>} : memref<24x512xf32, #tpu.memory_space<vmem>>, vector<1x512xf32>,
    %297 = arith.index_cast %288 : i32 to index
    %c0_127 = arith.constant 0 : index
    %298 = vector.load %arg19[%297, %c0_127] : memref<24x1024xf32, #tpu.memory_space<vmem>>, vector<1x1024xf32>
    %299 = vector.extract_strided_slice %298 {offsets = [0, 0], sizes = [1, 512], strides = [1, 1]} : vector<1x1024xf32> to vector<1x512xf32>
    %300 = arith.mulf %299, %285 : vector<1x512xf32>
    %301 = vector.extract_strided_slice %298 {offsets = [0, 512], sizes = [1, 512], strides = [1, 1]} : vector<1x1024xf32> to vector<1x512xf32>
    %302 = arith.addf %300, %301 : vector<1x512xf32>
    %303 = arith.index_cast %288 : i32 to index
    %c0_128 = arith.constant 0 : index
    %304 = vector.load %arg21[%303, %c0_128] : memref<24x512xf32, #tpu.memory_space<vmem>>, vector<1x512xf32>
    tpu.vector_store %arg21[%303, %c0_128], %302 {strides = array<i32>} : memref<24x512xf32, #tpu.memory_space<vmem>>, vector<1x512xf32>,
    %c4_i32 = arith.constant 4 : i32
    %c23_i32_129 = arith.constant 23 : i32
    %305 = arith.subi %c23_i32_129, %c4_i32 : i32
    %306 = arith.index_cast %c4_i32 : i32 to index
    %c0_130 = arith.constant 0 : index
    %307 = vector.load %arg18[%306, %c0_130] : memref<24x1024xf32, #tpu.memory_space<vmem>>, vector<1x1024xf32>
    %308 = vector.extract_strided_slice %307 {offsets = [0, 0], sizes = [1, 512], strides = [1, 1]} : vector<1x1024xf32> to vector<1x512xf32>
    %309 = arith.mulf %308, %294 : vector<1x512xf32>
    %310 = vector.extract_strided_slice %307 {offsets = [0, 512], sizes = [1, 512], strides = [1, 1]} : vector<1x1024xf32> to vector<1x512xf32>
    %311 = arith.addf %309, %310 : vector<1x512xf32>
    %312 = arith.index_cast %c4_i32 : i32 to index
    %c0_131 = arith.constant 0 : index
    %313 = vector.load %arg20[%312, %c0_131] : memref<24x512xf32, #tpu.memory_space<vmem>>, vector<1x512xf32>
    tpu.vector_store %arg20[%312, %c0_131], %311 {strides = array<i32>} : memref<24x512xf32, #tpu.memory_space<vmem>>, vector<1x512xf32>,
    %314 = arith.index_cast %305 : i32 to index
    %c0_132 = arith.constant 0 : index
    %315 = vector.load %arg19[%314, %c0_132] : memref<24x1024xf32, #tpu.memory_space<vmem>>, vector<1x1024xf32>
    %316 = vector.extract_strided_slice %315 {offsets = [0, 0], sizes = [1, 512], strides = [1, 1]} : vector<1x1024xf32> to vector<1x512xf32>
    %317 = arith.mulf %316, %302 : vector<1x512xf32>
    %318 = vector.extract_strided_slice %315 {offsets = [0, 512], sizes = [1, 512], strides = [1, 1]} : vector<1x1024xf32> to vector<1x512xf32>
    %319 = arith.addf %317, %318 : vector<1x512xf32>
    %320 = arith.index_cast %305 : i32 to index
    %c0_133 = arith.constant 0 : index
    %321 = vector.load %arg21[%320, %c0_133] : memref<24x512xf32, #tpu.memory_space<vmem>>, vector<1x512xf32>
    tpu.vector_store %arg21[%320, %c0_133], %319 {strides = array<i32>} : memref<24x512xf32, #tpu.memory_space<vmem>>, vector<1x512xf32>,
    %c5_i32 = arith.constant 5 : i32
    %c23_i32_134 = arith.constant 23 : i32
    %322 = arith.subi %c23_i32_134, %c5_i32 : i32
    %323 = arith.index_cast %c5_i32 : i32 to index
    %c0_135 = arith.constant 0 : index
    %324 = vector.load %arg18[%323, %c0_135] : memref<24x1024xf32, #tpu.memory_space<vmem>>, vector<1x1024xf32>
    %325 = vector.extract_strided_slice %324 {offsets = [0, 0], sizes = [1, 512], strides = [1, 1]} : vector<1x1024xf32> to vector<1x512xf32>
    %326 = arith.mulf %325, %311 : vector<1x512xf32>
    %327 = vector.extract_strided_slice %324 {offsets = [0, 512], sizes = [1, 512], strides = [1, 1]} : vector<1x1024xf32> to vector<1x512xf32>
    %328 = arith.addf %326, %327 : vector<1x512xf32>
    %329 = arith.index_cast %c5_i32 : i32 to index
    %c0_136 = arith.constant 0 : index
    %330 = vector.load %arg20[%329, %c0_136] : memref<24x512xf32, #tpu.memory_space<vmem>>, vector<1x512xf32>
    tpu.vector_store %arg20[%329, %c0_136], %328 {strides = array<i32>} : memref<24x512xf32, #tpu.memory_space<vmem>>, vector<1x512xf32>,
    %331 = arith.index_cast %322 : i32 to index
    %c0_137 = arith.constant 0 : index
    %332 = vector.load %arg19[%331, %c0_137] : memref<24x1024xf32, #tpu.memory_space<vmem>>, vector<1x1024xf32>
    %333 = vector.extract_strided_slice %332 {offsets = [0, 0], sizes = [1, 512], strides = [1, 1]} : vector<1x1024xf32> to vector<1x512xf32>
    %334 = arith.mulf %333, %319 : vector<1x512xf32>
    %335 = vector.extract_strided_slice %332 {offsets = [0, 512], sizes = [1, 512], strides = [1, 1]} : vector<1x1024xf32> to vector<1x512xf32>
    %336 = arith.addf %334, %335 : vector<1x512xf32>
    %337 = arith.index_cast %322 : i32 to index
    %c0_138 = arith.constant 0 : index
    %338 = vector.load %arg21[%337, %c0_138] : memref<24x512xf32, #tpu.memory_space<vmem>>, vector<1x512xf32>
    tpu.vector_store %arg21[%337, %c0_138], %336 {strides = array<i32>} : memref<24x512xf32, #tpu.memory_space<vmem>>, vector<1x512xf32>,
    %c6_i32 = arith.constant 6 : i32
    %c23_i32_139 = arith.constant 23 : i32
    %339 = arith.subi %c23_i32_139, %c6_i32 : i32
    %340 = arith.index_cast %c6_i32 : i32 to index
    %c0_140 = arith.constant 0 : index
    %341 = vector.load %arg18[%340, %c0_140] : memref<24x1024xf32, #tpu.memory_space<vmem>>, vector<1x1024xf32>
    %342 = vector.extract_strided_slice %341 {offsets = [0, 0], sizes = [1, 512], strides = [1, 1]} : vector<1x1024xf32> to vector<1x512xf32>
    %343 = arith.mulf %342, %328 : vector<1x512xf32>
    %344 = vector.extract_strided_slice %341 {offsets = [0, 512], sizes = [1, 512], strides = [1, 1]} : vector<1x1024xf32> to vector<1x512xf32>
    %345 = arith.addf %343, %344 : vector<1x512xf32>
    %346 = arith.index_cast %c6_i32 : i32 to index
    %c0_141 = arith.constant 0 : index
    %347 = vector.load %arg20[%346, %c0_141] : memref<24x512xf32, #tpu.memory_space<vmem>>, vector<1x512xf32>
    tpu.vector_store %arg20[%346, %c0_141], %345 {strides = array<i32>} : memref<24x512xf32, #tpu.memory_space<vmem>>, vector<1x512xf32>,
    %348 = arith.index_cast %339 : i32 to index
    %c0_142 = arith.constant 0 : index
    %349 = vector.load %arg19[%348, %c0_142] : memref<24x1024xf32, #tpu.memory_space<vmem>>, vector<1x1024xf32>
    %350 = vector.extract_strided_slice %349 {offsets = [0, 0], sizes = [1, 512], strides = [1, 1]} : vector<1x1024xf32> to vector<1x512xf32>
    %351 = arith.mulf %350, %336 : vector<1x512xf32>
    %352 = vector.extract_strided_slice %349 {offsets = [0, 512], sizes = [1, 512], strides = [1, 1]} : vector<1x1024xf32> to vector<1x512xf32>
    %353 = arith.addf %351, %352 : vector<1x512xf32>
    %354 = arith.index_cast %339 : i32 to index
    %c0_143 = arith.constant 0 : index
    %355 = vector.load %arg21[%354, %c0_143] : memref<24x512xf32, #tpu.memory_space<vmem>>, vector<1x512xf32>
    tpu.vector_store %arg21[%354, %c0_143], %353 {strides = array<i32>} : memref<24x512xf32, #tpu.memory_space<vmem>>, vector<1x512xf32>,
    %c7_i32 = arith.constant 7 : i32
    %c23_i32_144 = arith.constant 23 : i32
    %356 = arith.subi %c23_i32_144, %c7_i32 : i32
    %357 = arith.index_cast %c7_i32 : i32 to index
    %c0_145 = arith.constant 0 : index
    %358 = vector.load %arg18[%357, %c0_145] : memref<24x1024xf32, #tpu.memory_space<vmem>>, vector<1x1024xf32>
    %359 = vector.extract_strided_slice %358 {offsets = [0, 0], sizes = [1, 512], strides = [1, 1]} : vector<1x1024xf32> to vector<1x512xf32>
    %360 = arith.mulf %359, %345 : vector<1x512xf32>
    %361 = vector.extract_strided_slice %358 {offsets = [0, 512], sizes = [1, 512], strides = [1, 1]} : vector<1x1024xf32> to vector<1x512xf32>
    %362 = arith.addf %360, %361 : vector<1x512xf32>
    %363 = arith.index_cast %c7_i32 : i32 to index
    %c0_146 = arith.constant 0 : index
    %364 = vector.load %arg20[%363, %c0_146] : memref<24x512xf32, #tpu.memory_space<vmem>>, vector<1x512xf32>
    tpu.vector_store %arg20[%363, %c0_146], %362 {strides = array<i32>} : memref<24x512xf32, #tpu.memory_space<vmem>>, vector<1x512xf32>,
    %365 = arith.index_cast %356 : i32 to index
    %c0_147 = arith.constant 0 : index
    %366 = vector.load %arg19[%365, %c0_147] : memref<24x1024xf32, #tpu.memory_space<vmem>>, vector<1x1024xf32>
    %367 = vector.extract_strided_slice %366 {offsets = [0, 0], sizes = [1, 512], strides = [1, 1]} : vector<1x1024xf32> to vector<1x512xf32>
    %368 = arith.mulf %367, %353 : vector<1x512xf32>
    %369 = vector.extract_strided_slice %366 {offsets = [0, 512], sizes = [1, 512], strides = [1, 1]} : vector<1x1024xf32> to vector<1x512xf32>
    %370 = arith.addf %368, %369 : vector<1x512xf32>
    %371 = arith.index_cast %356 : i32 to index
    %c0_148 = arith.constant 0 : index
    %372 = vector.load %arg21[%371, %c0_148] : memref<24x512xf32, #tpu.memory_space<vmem>>, vector<1x512xf32>
    tpu.vector_store %arg21[%371, %c0_148], %370 {strides = array<i32>} : memref<24x512xf32, #tpu.memory_space<vmem>>, vector<1x512xf32>,
    %c8_i32 = arith.constant 8 : i32
    %c23_i32_149 = arith.constant 23 : i32
    %373 = arith.subi %c23_i32_149, %c8_i32 : i32
    %374 = arith.index_cast %c8_i32 : i32 to index
    %c0_150 = arith.constant 0 : index
    %375 = vector.load %arg18[%374, %c0_150] : memref<24x1024xf32, #tpu.memory_space<vmem>>, vector<1x1024xf32>
    %376 = vector.extract_strided_slice %375 {offsets = [0, 0], sizes = [1, 512], strides = [1, 1]} : vector<1x1024xf32> to vector<1x512xf32>
    %377 = arith.mulf %376, %362 : vector<1x512xf32>
    %378 = vector.extract_strided_slice %375 {offsets = [0, 512], sizes = [1, 512], strides = [1, 1]} : vector<1x1024xf32> to vector<1x512xf32>
    %379 = arith.addf %377, %378 : vector<1x512xf32>
    %380 = arith.index_cast %c8_i32 : i32 to index
    %c0_151 = arith.constant 0 : index
    %381 = vector.load %arg20[%380, %c0_151] : memref<24x512xf32, #tpu.memory_space<vmem>>, vector<1x512xf32>
    tpu.vector_store %arg20[%380, %c0_151], %379 {strides = array<i32>} : memref<24x512xf32, #tpu.memory_space<vmem>>, vector<1x512xf32>,
    %382 = arith.index_cast %373 : i32 to index
    %c0_152 = arith.constant 0 : index
    %383 = vector.load %arg19[%382, %c0_152] : memref<24x1024xf32, #tpu.memory_space<vmem>>, vector<1x1024xf32>
    %384 = vector.extract_strided_slice %383 {offsets = [0, 0], sizes = [1, 512], strides = [1, 1]} : vector<1x1024xf32> to vector<1x512xf32>
    %385 = arith.mulf %384, %370 : vector<1x512xf32>
    %386 = vector.extract_strided_slice %383 {offsets = [0, 512], sizes = [1, 512], strides = [1, 1]} : vector<1x1024xf32> to vector<1x512xf32>
    %387 = arith.addf %385, %386 : vector<1x512xf32>
    %388 = arith.index_cast %373 : i32 to index
    %c0_153 = arith.constant 0 : index
    %389 = vector.load %arg21[%388, %c0_153] : memref<24x512xf32, #tpu.memory_space<vmem>>, vector<1x512xf32>
    tpu.vector_store %arg21[%388, %c0_153], %387 {strides = array<i32>} : memref<24x512xf32, #tpu.memory_space<vmem>>, vector<1x512xf32>,
    %c9_i32 = arith.constant 9 : i32
    %c23_i32_154 = arith.constant 23 : i32
    %390 = arith.subi %c23_i32_154, %c9_i32 : i32
    %391 = arith.index_cast %c9_i32 : i32 to index
    %c0_155 = arith.constant 0 : index
    %392 = vector.load %arg18[%391, %c0_155] : memref<24x1024xf32, #tpu.memory_space<vmem>>, vector<1x1024xf32>
    %393 = vector.extract_strided_slice %392 {offsets = [0, 0], sizes = [1, 512], strides = [1, 1]} : vector<1x1024xf32> to vector<1x512xf32>
    %394 = arith.mulf %393, %379 : vector<1x512xf32>
    %395 = vector.extract_strided_slice %392 {offsets = [0, 512], sizes = [1, 512], strides = [1, 1]} : vector<1x1024xf32> to vector<1x512xf32>
    %396 = arith.addf %394, %395 : vector<1x512xf32>
    %397 = arith.index_cast %c9_i32 : i32 to index
    %c0_156 = arith.constant 0 : index
    %398 = vector.load %arg20[%397, %c0_156] : memref<24x512xf32, #tpu.memory_space<vmem>>, vector<1x512xf32>
    tpu.vector_store %arg20[%397, %c0_156], %396 {strides = array<i32>} : memref<24x512xf32, #tpu.memory_space<vmem>>, vector<1x512xf32>,
    %399 = arith.index_cast %390 : i32 to index
    %c0_157 = arith.constant 0 : index
    %400 = vector.load %arg19[%399, %c0_157] : memref<24x1024xf32, #tpu.memory_space<vmem>>, vector<1x1024xf32>
    %401 = vector.extract_strided_slice %400 {offsets = [0, 0], sizes = [1, 512], strides = [1, 1]} : vector<1x1024xf32> to vector<1x512xf32>
    %402 = arith.mulf %401, %387 : vector<1x512xf32>
    %403 = vector.extract_strided_slice %400 {offsets = [0, 512], sizes = [1, 512], strides = [1, 1]} : vector<1x1024xf32> to vector<1x512xf32>
    %404 = arith.addf %402, %403 : vector<1x512xf32>
    %405 = arith.index_cast %390 : i32 to index
    %c0_158 = arith.constant 0 : index
    %406 = vector.load %arg21[%405, %c0_158] : memref<24x512xf32, #tpu.memory_space<vmem>>, vector<1x512xf32>
    tpu.vector_store %arg21[%405, %c0_158], %404 {strides = array<i32>} : memref<24x512xf32, #tpu.memory_space<vmem>>, vector<1x512xf32>,
    %c10_i32 = arith.constant 10 : i32
    %c23_i32_159 = arith.constant 23 : i32
    %407 = arith.subi %c23_i32_159, %c10_i32 : i32
    %408 = arith.index_cast %c10_i32 : i32 to index
    %c0_160 = arith.constant 0 : index
    %409 = vector.load %arg18[%408, %c0_160] : memref<24x1024xf32, #tpu.memory_space<vmem>>, vector<1x1024xf32>
    %410 = vector.extract_strided_slice %409 {offsets = [0, 0], sizes = [1, 512], strides = [1, 1]} : vector<1x1024xf32> to vector<1x512xf32>
    %411 = arith.mulf %410, %396 : vector<1x512xf32>
    %412 = vector.extract_strided_slice %409 {offsets = [0, 512], sizes = [1, 512], strides = [1, 1]} : vector<1x1024xf32> to vector<1x512xf32>
    %413 = arith.addf %411, %412 : vector<1x512xf32>
    %414 = arith.index_cast %c10_i32 : i32 to index
    %c0_161 = arith.constant 0 : index
    %415 = vector.load %arg20[%414, %c0_161] : memref<24x512xf32, #tpu.memory_space<vmem>>, vector<1x512xf32>
    tpu.vector_store %arg20[%414, %c0_161], %413 {strides = array<i32>} : memref<24x512xf32, #tpu.memory_space<vmem>>, vector<1x512xf32>,
    %416 = arith.index_cast %407 : i32 to index
    %c0_162 = arith.constant 0 : index
    %417 = vector.load %arg19[%416, %c0_162] : memref<24x1024xf32, #tpu.memory_space<vmem>>, vector<1x1024xf32>
    %418 = vector.extract_strided_slice %417 {offsets = [0, 0], sizes = [1, 512], strides = [1, 1]} : vector<1x1024xf32> to vector<1x512xf32>
    %419 = arith.mulf %418, %404 : vector<1x512xf32>
    %420 = vector.extract_strided_slice %417 {offsets = [0, 512], sizes = [1, 512], strides = [1, 1]} : vector<1x1024xf32> to vector<1x512xf32>
    %421 = arith.addf %419, %420 : vector<1x512xf32>
    %422 = arith.index_cast %407 : i32 to index
    %c0_163 = arith.constant 0 : index
    %423 = vector.load %arg21[%422, %c0_163] : memref<24x512xf32, #tpu.memory_space<vmem>>, vector<1x512xf32>
    tpu.vector_store %arg21[%422, %c0_163], %421 {strides = array<i32>} : memref<24x512xf32, #tpu.memory_space<vmem>>, vector<1x512xf32>,
    %c11_i32 = arith.constant 11 : i32
    %c23_i32_164 = arith.constant 23 : i32
    %424 = arith.subi %c23_i32_164, %c11_i32 : i32
    %425 = arith.index_cast %c11_i32 : i32 to index
    %c0_165 = arith.constant 0 : index
    %426 = vector.load %arg18[%425, %c0_165] : memref<24x1024xf32, #tpu.memory_space<vmem>>, vector<1x1024xf32>
    %427 = vector.extract_strided_slice %426 {offsets = [0, 0], sizes = [1, 512], strides = [1, 1]} : vector<1x1024xf32> to vector<1x512xf32>
    %428 = arith.mulf %427, %413 : vector<1x512xf32>
    %429 = vector.extract_strided_slice %426 {offsets = [0, 512], sizes = [1, 512], strides = [1, 1]} : vector<1x1024xf32> to vector<1x512xf32>
    %430 = arith.addf %428, %429 : vector<1x512xf32>
    %431 = arith.index_cast %c11_i32 : i32 to index
    %c0_166 = arith.constant 0 : index
    %432 = vector.load %arg20[%431, %c0_166] : memref<24x512xf32, #tpu.memory_space<vmem>>, vector<1x512xf32>
    tpu.vector_store %arg20[%431, %c0_166], %430 {strides = array<i32>} : memref<24x512xf32, #tpu.memory_space<vmem>>, vector<1x512xf32>,
    %433 = arith.index_cast %424 : i32 to index
    %c0_167 = arith.constant 0 : index
    %434 = vector.load %arg19[%433, %c0_167] : memref<24x1024xf32, #tpu.memory_space<vmem>>, vector<1x1024xf32>
    %435 = vector.extract_strided_slice %434 {offsets = [0, 0], sizes = [1, 512], strides = [1, 1]} : vector<1x1024xf32> to vector<1x512xf32>
    %436 = arith.mulf %435, %421 : vector<1x512xf32>
    %437 = vector.extract_strided_slice %434 {offsets = [0, 512], sizes = [1, 512], strides = [1, 1]} : vector<1x1024xf32> to vector<1x512xf32>
    %438 = arith.addf %436, %437 : vector<1x512xf32>
    %439 = arith.index_cast %424 : i32 to index
    %c0_168 = arith.constant 0 : index
    %440 = vector.load %arg21[%439, %c0_168] : memref<24x512xf32, #tpu.memory_space<vmem>>, vector<1x512xf32>
    tpu.vector_store %arg21[%439, %c0_168], %438 {strides = array<i32>} : memref<24x512xf32, #tpu.memory_space<vmem>>, vector<1x512xf32>,
    %c12_i32 = arith.constant 12 : i32
    %c23_i32_169 = arith.constant 23 : i32
    %441 = arith.subi %c23_i32_169, %c12_i32 : i32
    %442 = arith.index_cast %c12_i32 : i32 to index
    %c0_170 = arith.constant 0 : index
    %443 = vector.load %arg18[%442, %c0_170] : memref<24x1024xf32, #tpu.memory_space<vmem>>, vector<1x1024xf32>
    %444 = vector.extract_strided_slice %443 {offsets = [0, 0], sizes = [1, 512], strides = [1, 1]} : vector<1x1024xf32> to vector<1x512xf32>
    %445 = arith.mulf %444, %430 : vector<1x512xf32>
    %446 = vector.extract_strided_slice %443 {offsets = [0, 512], sizes = [1, 512], strides = [1, 1]} : vector<1x1024xf32> to vector<1x512xf32>
    %447 = arith.addf %445, %446 : vector<1x512xf32>
    %448 = arith.index_cast %c12_i32 : i32 to index
    %c0_171 = arith.constant 0 : index
    %449 = vector.load %arg20[%448, %c0_171] : memref<24x512xf32, #tpu.memory_space<vmem>>, vector<1x512xf32>
    tpu.vector_store %arg20[%448, %c0_171], %447 {strides = array<i32>} : memref<24x512xf32, #tpu.memory_space<vmem>>, vector<1x512xf32>,
    %450 = arith.index_cast %441 : i32 to index
    %c0_172 = arith.constant 0 : index
    %451 = vector.load %arg19[%450, %c0_172] : memref<24x1024xf32, #tpu.memory_space<vmem>>, vector<1x1024xf32>
    %452 = vector.extract_strided_slice %451 {offsets = [0, 0], sizes = [1, 512], strides = [1, 1]} : vector<1x1024xf32> to vector<1x512xf32>
    %453 = arith.mulf %452, %438 : vector<1x512xf32>
    %454 = vector.extract_strided_slice %451 {offsets = [0, 512], sizes = [1, 512], strides = [1, 1]} : vector<1x1024xf32> to vector<1x512xf32>
    %455 = arith.addf %453, %454 : vector<1x512xf32>
    %456 = arith.index_cast %441 : i32 to index
    %c0_173 = arith.constant 0 : index
    %457 = vector.load %arg21[%456, %c0_173] : memref<24x512xf32, #tpu.memory_space<vmem>>, vector<1x512xf32>
    tpu.vector_store %arg21[%456, %c0_173], %455 {strides = array<i32>} : memref<24x512xf32, #tpu.memory_space<vmem>>, vector<1x512xf32>,
    %c13_i32 = arith.constant 13 : i32
    %c23_i32_174 = arith.constant 23 : i32
    %458 = arith.subi %c23_i32_174, %c13_i32 : i32
    %459 = arith.index_cast %c13_i32 : i32 to index
    %c0_175 = arith.constant 0 : index
    %460 = vector.load %arg18[%459, %c0_175] : memref<24x1024xf32, #tpu.memory_space<vmem>>, vector<1x1024xf32>
    %461 = vector.extract_strided_slice %460 {offsets = [0, 0], sizes = [1, 512], strides = [1, 1]} : vector<1x1024xf32> to vector<1x512xf32>
    %462 = arith.mulf %461, %447 : vector<1x512xf32>
    %463 = vector.extract_strided_slice %460 {offsets = [0, 512], sizes = [1, 512], strides = [1, 1]} : vector<1x1024xf32> to vector<1x512xf32>
    %464 = arith.addf %462, %463 : vector<1x512xf32>
    %465 = arith.index_cast %c13_i32 : i32 to index
    %c0_176 = arith.constant 0 : index
    %466 = vector.load %arg20[%465, %c0_176] : memref<24x512xf32, #tpu.memory_space<vmem>>, vector<1x512xf32>
    tpu.vector_store %arg20[%465, %c0_176], %464 {strides = array<i32>} : memref<24x512xf32, #tpu.memory_space<vmem>>, vector<1x512xf32>,
    %467 = arith.index_cast %458 : i32 to index
    %c0_177 = arith.constant 0 : index
    %468 = vector.load %arg19[%467, %c0_177] : memref<24x1024xf32, #tpu.memory_space<vmem>>, vector<1x1024xf32>
    %469 = vector.extract_strided_slice %468 {offsets = [0, 0], sizes = [1, 512], strides = [1, 1]} : vector<1x1024xf32> to vector<1x512xf32>
    %470 = arith.mulf %469, %455 : vector<1x512xf32>
    %471 = vector.extract_strided_slice %468 {offsets = [0, 512], sizes = [1, 512], strides = [1, 1]} : vector<1x1024xf32> to vector<1x512xf32>
    %472 = arith.addf %470, %471 : vector<1x512xf32>
    %473 = arith.index_cast %458 : i32 to index
    %c0_178 = arith.constant 0 : index
    %474 = vector.load %arg21[%473, %c0_178] : memref<24x512xf32, #tpu.memory_space<vmem>>, vector<1x512xf32>
    tpu.vector_store %arg21[%473, %c0_178], %472 {strides = array<i32>} : memref<24x512xf32, #tpu.memory_space<vmem>>, vector<1x512xf32>,
    %c14_i32 = arith.constant 14 : i32
    %c23_i32_179 = arith.constant 23 : i32
    %475 = arith.subi %c23_i32_179, %c14_i32 : i32
    %476 = arith.index_cast %c14_i32 : i32 to index
    %c0_180 = arith.constant 0 : index
    %477 = vector.load %arg18[%476, %c0_180] : memref<24x1024xf32, #tpu.memory_space<vmem>>, vector<1x1024xf32>
    %478 = vector.extract_strided_slice %477 {offsets = [0, 0], sizes = [1, 512], strides = [1, 1]} : vector<1x1024xf32> to vector<1x512xf32>
    %479 = arith.mulf %478, %464 : vector<1x512xf32>
    %480 = vector.extract_strided_slice %477 {offsets = [0, 512], sizes = [1, 512], strides = [1, 1]} : vector<1x1024xf32> to vector<1x512xf32>
    %481 = arith.addf %479, %480 : vector<1x512xf32>
    %482 = arith.index_cast %c14_i32 : i32 to index
    %c0_181 = arith.constant 0 : index
    %483 = vector.load %arg20[%482, %c0_181] : memref<24x512xf32, #tpu.memory_space<vmem>>, vector<1x512xf32>
    tpu.vector_store %arg20[%482, %c0_181], %481 {strides = array<i32>} : memref<24x512xf32, #tpu.memory_space<vmem>>, vector<1x512xf32>,
    %484 = arith.index_cast %475 : i32 to index
    %c0_182 = arith.constant 0 : index
    %485 = vector.load %arg19[%484, %c0_182] : memref<24x1024xf32, #tpu.memory_space<vmem>>, vector<1x1024xf32>
    %486 = vector.extract_strided_slice %485 {offsets = [0, 0], sizes = [1, 512], strides = [1, 1]} : vector<1x1024xf32> to vector<1x512xf32>
    %487 = arith.mulf %486, %472 : vector<1x512xf32>
    %488 = vector.extract_strided_slice %485 {offsets = [0, 512], sizes = [1, 512], strides = [1, 1]} : vector<1x1024xf32> to vector<1x512xf32>
    %489 = arith.addf %487, %488 : vector<1x512xf32>
    %490 = arith.index_cast %475 : i32 to index
    %c0_183 = arith.constant 0 : index
    %491 = vector.load %arg21[%490, %c0_183] : memref<24x512xf32, #tpu.memory_space<vmem>>, vector<1x512xf32>
    tpu.vector_store %arg21[%490, %c0_183], %489 {strides = array<i32>} : memref<24x512xf32, #tpu.memory_space<vmem>>, vector<1x512xf32>,
    %c15_i32 = arith.constant 15 : i32
    %c23_i32_184 = arith.constant 23 : i32
    %492 = arith.subi %c23_i32_184, %c15_i32 : i32
    %493 = arith.index_cast %c15_i32 : i32 to index
    %c0_185 = arith.constant 0 : index
    %494 = vector.load %arg18[%493, %c0_185] : memref<24x1024xf32, #tpu.memory_space<vmem>>, vector<1x1024xf32>
    %495 = vector.extract_strided_slice %494 {offsets = [0, 0], sizes = [1, 512], strides = [1, 1]} : vector<1x1024xf32> to vector<1x512xf32>
    %496 = arith.mulf %495, %481 : vector<1x512xf32>
    %497 = vector.extract_strided_slice %494 {offsets = [0, 512], sizes = [1, 512], strides = [1, 1]} : vector<1x1024xf32> to vector<1x512xf32>
    %498 = arith.addf %496, %497 : vector<1x512xf32>
    %499 = arith.index_cast %c15_i32 : i32 to index
    %c0_186 = arith.constant 0 : index
    %500 = vector.load %arg20[%499, %c0_186] : memref<24x512xf32, #tpu.memory_space<vmem>>, vector<1x512xf32>
    tpu.vector_store %arg20[%499, %c0_186], %498 {strides = array<i32>} : memref<24x512xf32, #tpu.memory_space<vmem>>, vector<1x512xf32>,
    %501 = arith.index_cast %492 : i32 to index
    %c0_187 = arith.constant 0 : index
    %502 = vector.load %arg19[%501, %c0_187] : memref<24x1024xf32, #tpu.memory_space<vmem>>, vector<1x1024xf32>
    %503 = vector.extract_strided_slice %502 {offsets = [0, 0], sizes = [1, 512], strides = [1, 1]} : vector<1x1024xf32> to vector<1x512xf32>
    %504 = arith.mulf %503, %489 : vector<1x512xf32>
    %505 = vector.extract_strided_slice %502 {offsets = [0, 512], sizes = [1, 512], strides = [1, 1]} : vector<1x1024xf32> to vector<1x512xf32>
    %506 = arith.addf %504, %505 : vector<1x512xf32>
    %507 = arith.index_cast %492 : i32 to index
    %c0_188 = arith.constant 0 : index
    %508 = vector.load %arg21[%507, %c0_188] : memref<24x512xf32, #tpu.memory_space<vmem>>, vector<1x512xf32>
    tpu.vector_store %arg21[%507, %c0_188], %506 {strides = array<i32>} : memref<24x512xf32, #tpu.memory_space<vmem>>, vector<1x512xf32>,
    %c16_i32 = arith.constant 16 : i32
    %c23_i32_189 = arith.constant 23 : i32
    %509 = arith.subi %c23_i32_189, %c16_i32 : i32
    %510 = arith.index_cast %c16_i32 : i32 to index
    %c0_190 = arith.constant 0 : index
    %511 = vector.load %arg18[%510, %c0_190] : memref<24x1024xf32, #tpu.memory_space<vmem>>, vector<1x1024xf32>
    %512 = vector.extract_strided_slice %511 {offsets = [0, 0], sizes = [1, 512], strides = [1, 1]} : vector<1x1024xf32> to vector<1x512xf32>
    %513 = arith.mulf %512, %498 : vector<1x512xf32>
    %514 = vector.extract_strided_slice %511 {offsets = [0, 512], sizes = [1, 512], strides = [1, 1]} : vector<1x1024xf32> to vector<1x512xf32>
    %515 = arith.addf %513, %514 : vector<1x512xf32>
    %516 = arith.index_cast %c16_i32 : i32 to index
    %c0_191 = arith.constant 0 : index
    %517 = vector.load %arg20[%516, %c0_191] : memref<24x512xf32, #tpu.memory_space<vmem>>, vector<1x512xf32>
    tpu.vector_store %arg20[%516, %c0_191], %515 {strides = array<i32>} : memref<24x512xf32, #tpu.memory_space<vmem>>, vector<1x512xf32>,
    %518 = arith.index_cast %509 : i32 to index
    %c0_192 = arith.constant 0 : index
    %519 = vector.load %arg19[%518, %c0_192] : memref<24x1024xf32, #tpu.memory_space<vmem>>, vector<1x1024xf32>
    %520 = vector.extract_strided_slice %519 {offsets = [0, 0], sizes = [1, 512], strides = [1, 1]} : vector<1x1024xf32> to vector<1x512xf32>
    %521 = arith.mulf %520, %506 : vector<1x512xf32>
    %522 = vector.extract_strided_slice %519 {offsets = [0, 512], sizes = [1, 512], strides = [1, 1]} : vector<1x1024xf32> to vector<1x512xf32>
    %523 = arith.addf %521, %522 : vector<1x512xf32>
    %524 = arith.index_cast %509 : i32 to index
    %c0_193 = arith.constant 0 : index
    %525 = vector.load %arg21[%524, %c0_193] : memref<24x512xf32, #tpu.memory_space<vmem>>, vector<1x512xf32>
    tpu.vector_store %arg21[%524, %c0_193], %523 {strides = array<i32>} : memref<24x512xf32, #tpu.memory_space<vmem>>, vector<1x512xf32>,
    %c17_i32 = arith.constant 17 : i32
    %c23_i32_194 = arith.constant 23 : i32
    %526 = arith.subi %c23_i32_194, %c17_i32 : i32
    %527 = arith.index_cast %c17_i32 : i32 to index
    %c0_195 = arith.constant 0 : index
    %528 = vector.load %arg18[%527, %c0_195] : memref<24x1024xf32, #tpu.memory_space<vmem>>, vector<1x1024xf32>
    %529 = vector.extract_strided_slice %528 {offsets = [0, 0], sizes = [1, 512], strides = [1, 1]} : vector<1x1024xf32> to vector<1x512xf32>
    %530 = arith.mulf %529, %515 : vector<1x512xf32>
    %531 = vector.extract_strided_slice %528 {offsets = [0, 512], sizes = [1, 512], strides = [1, 1]} : vector<1x1024xf32> to vector<1x512xf32>
    %532 = arith.addf %530, %531 : vector<1x512xf32>
    %533 = arith.index_cast %c17_i32 : i32 to index
    %c0_196 = arith.constant 0 : index
    %534 = vector.load %arg20[%533, %c0_196] : memref<24x512xf32, #tpu.memory_space<vmem>>, vector<1x512xf32>
    tpu.vector_store %arg20[%533, %c0_196], %532 {strides = array<i32>} : memref<24x512xf32, #tpu.memory_space<vmem>>, vector<1x512xf32>,
    %535 = arith.index_cast %526 : i32 to index
    %c0_197 = arith.constant 0 : index
    %536 = vector.load %arg19[%535, %c0_197] : memref<24x1024xf32, #tpu.memory_space<vmem>>, vector<1x1024xf32>
    %537 = vector.extract_strided_slice %536 {offsets = [0, 0], sizes = [1, 512], strides = [1, 1]} : vector<1x1024xf32> to vector<1x512xf32>
    %538 = arith.mulf %537, %523 : vector<1x512xf32>
    %539 = vector.extract_strided_slice %536 {offsets = [0, 512], sizes = [1, 512], strides = [1, 1]} : vector<1x1024xf32> to vector<1x512xf32>
    %540 = arith.addf %538, %539 : vector<1x512xf32>
    %541 = arith.index_cast %526 : i32 to index
    %c0_198 = arith.constant 0 : index
    %542 = vector.load %arg21[%541, %c0_198] : memref<24x512xf32, #tpu.memory_space<vmem>>, vector<1x512xf32>
    tpu.vector_store %arg21[%541, %c0_198], %540 {strides = array<i32>} : memref<24x512xf32, #tpu.memory_space<vmem>>, vector<1x512xf32>,
    %c18_i32 = arith.constant 18 : i32
    %c23_i32_199 = arith.constant 23 : i32
    %543 = arith.subi %c23_i32_199, %c18_i32 : i32
    %544 = arith.index_cast %c18_i32 : i32 to index
    %c0_200 = arith.constant 0 : index
    %545 = vector.load %arg18[%544, %c0_200] : memref<24x1024xf32, #tpu.memory_space<vmem>>, vector<1x1024xf32>
    %546 = vector.extract_strided_slice %545 {offsets = [0, 0], sizes = [1, 512], strides = [1, 1]} : vector<1x1024xf32> to vector<1x512xf32>
    %547 = arith.mulf %546, %532 : vector<1x512xf32>
    %548 = vector.extract_strided_slice %545 {offsets = [0, 512], sizes = [1, 512], strides = [1, 1]} : vector<1x1024xf32> to vector<1x512xf32>
    %549 = arith.addf %547, %548 : vector<1x512xf32>
    %550 = arith.index_cast %c18_i32 : i32 to index
    %c0_201 = arith.constant 0 : index
    %551 = vector.load %arg20[%550, %c0_201] : memref<24x512xf32, #tpu.memory_space<vmem>>, vector<1x512xf32>
    tpu.vector_store %arg20[%550, %c0_201], %549 {strides = array<i32>} : memref<24x512xf32, #tpu.memory_space<vmem>>, vector<1x512xf32>,
    %552 = arith.index_cast %543 : i32 to index
    %c0_202 = arith.constant 0 : index
    %553 = vector.load %arg19[%552, %c0_202] : memref<24x1024xf32, #tpu.memory_space<vmem>>, vector<1x1024xf32>
    %554 = vector.extract_strided_slice %553 {offsets = [0, 0], sizes = [1, 512], strides = [1, 1]} : vector<1x1024xf32> to vector<1x512xf32>
    %555 = arith.mulf %554, %540 : vector<1x512xf32>
    %556 = vector.extract_strided_slice %553 {offsets = [0, 512], sizes = [1, 512], strides = [1, 1]} : vector<1x1024xf32> to vector<1x512xf32>
    %557 = arith.addf %555, %556 : vector<1x512xf32>
    %558 = arith.index_cast %543 : i32 to index
    %c0_203 = arith.constant 0 : index
    %559 = vector.load %arg21[%558, %c0_203] : memref<24x512xf32, #tpu.memory_space<vmem>>, vector<1x512xf32>
    tpu.vector_store %arg21[%558, %c0_203], %557 {strides = array<i32>} : memref<24x512xf32, #tpu.memory_space<vmem>>, vector<1x512xf32>,
    %c19_i32 = arith.constant 19 : i32
    %c23_i32_204 = arith.constant 23 : i32
    %560 = arith.subi %c23_i32_204, %c19_i32 : i32
    %561 = arith.index_cast %c19_i32 : i32 to index
    %c0_205 = arith.constant 0 : index
    %562 = vector.load %arg18[%561, %c0_205] : memref<24x1024xf32, #tpu.memory_space<vmem>>, vector<1x1024xf32>
    %563 = vector.extract_strided_slice %562 {offsets = [0, 0], sizes = [1, 512], strides = [1, 1]} : vector<1x1024xf32> to vector<1x512xf32>
    %564 = arith.mulf %563, %549 : vector<1x512xf32>
    %565 = vector.extract_strided_slice %562 {offsets = [0, 512], sizes = [1, 512], strides = [1, 1]} : vector<1x1024xf32> to vector<1x512xf32>
    %566 = arith.addf %564, %565 : vector<1x512xf32>
    %567 = arith.index_cast %c19_i32 : i32 to index
    %c0_206 = arith.constant 0 : index
    %568 = vector.load %arg20[%567, %c0_206] : memref<24x512xf32, #tpu.memory_space<vmem>>, vector<1x512xf32>
    tpu.vector_store %arg20[%567, %c0_206], %566 {strides = array<i32>} : memref<24x512xf32, #tpu.memory_space<vmem>>, vector<1x512xf32>,
    %569 = arith.index_cast %560 : i32 to index
    %c0_207 = arith.constant 0 : index
    %570 = vector.load %arg19[%569, %c0_207] : memref<24x1024xf32, #tpu.memory_space<vmem>>, vector<1x1024xf32>
    %571 = vector.extract_strided_slice %570 {offsets = [0, 0], sizes = [1, 512], strides = [1, 1]} : vector<1x1024xf32> to vector<1x512xf32>
    %572 = arith.mulf %571, %557 : vector<1x512xf32>
    %573 = vector.extract_strided_slice %570 {offsets = [0, 512], sizes = [1, 512], strides = [1, 1]} : vector<1x1024xf32> to vector<1x512xf32>
    %574 = arith.addf %572, %573 : vector<1x512xf32>
    %575 = arith.index_cast %560 : i32 to index
    %c0_208 = arith.constant 0 : index
    %576 = vector.load %arg21[%575, %c0_208] : memref<24x512xf32, #tpu.memory_space<vmem>>, vector<1x512xf32>
    tpu.vector_store %arg21[%575, %c0_208], %574 {strides = array<i32>} : memref<24x512xf32, #tpu.memory_space<vmem>>, vector<1x512xf32>,
    %c20_i32 = arith.constant 20 : i32
    %c23_i32_209 = arith.constant 23 : i32
    %577 = arith.subi %c23_i32_209, %c20_i32 : i32
    %578 = arith.index_cast %c20_i32 : i32 to index
    %c0_210 = arith.constant 0 : index
    %579 = vector.load %arg18[%578, %c0_210] : memref<24x1024xf32, #tpu.memory_space<vmem>>, vector<1x1024xf32>
    %580 = vector.extract_strided_slice %579 {offsets = [0, 0], sizes = [1, 512], strides = [1, 1]} : vector<1x1024xf32> to vector<1x512xf32>
    %581 = arith.mulf %580, %566 : vector<1x512xf32>
    %582 = vector.extract_strided_slice %579 {offsets = [0, 512], sizes = [1, 512], strides = [1, 1]} : vector<1x1024xf32> to vector<1x512xf32>
    %583 = arith.addf %581, %582 : vector<1x512xf32>
    %584 = arith.index_cast %c20_i32 : i32 to index
    %c0_211 = arith.constant 0 : index
    %585 = vector.load %arg20[%584, %c0_211] : memref<24x512xf32, #tpu.memory_space<vmem>>, vector<1x512xf32>
    tpu.vector_store %arg20[%584, %c0_211], %583 {strides = array<i32>} : memref<24x512xf32, #tpu.memory_space<vmem>>, vector<1x512xf32>,
    %586 = arith.index_cast %577 : i32 to index
    %c0_212 = arith.constant 0 : index
    %587 = vector.load %arg19[%586, %c0_212] : memref<24x1024xf32, #tpu.memory_space<vmem>>, vector<1x1024xf32>
    %588 = vector.extract_strided_slice %587 {offsets = [0, 0], sizes = [1, 512], strides = [1, 1]} : vector<1x1024xf32> to vector<1x512xf32>
    %589 = arith.mulf %588, %574 : vector<1x512xf32>
    %590 = vector.extract_strided_slice %587 {offsets = [0, 512], sizes = [1, 512], strides = [1, 1]} : vector<1x1024xf32> to vector<1x512xf32>
    %591 = arith.addf %589, %590 : vector<1x512xf32>
    %592 = arith.index_cast %577 : i32 to index
    %c0_213 = arith.constant 0 : index
    %593 = vector.load %arg21[%592, %c0_213] : memref<24x512xf32, #tpu.memory_space<vmem>>, vector<1x512xf32>
    tpu.vector_store %arg21[%592, %c0_213], %591 {strides = array<i32>} : memref<24x512xf32, #tpu.memory_space<vmem>>, vector<1x512xf32>,
    %c21_i32 = arith.constant 21 : i32
    %c23_i32_214 = arith.constant 23 : i32
    %594 = arith.subi %c23_i32_214, %c21_i32 : i32
    %595 = arith.index_cast %c21_i32 : i32 to index
    %c0_215 = arith.constant 0 : index
    %596 = vector.load %arg18[%595, %c0_215] : memref<24x1024xf32, #tpu.memory_space<vmem>>, vector<1x1024xf32>
    %597 = vector.extract_strided_slice %596 {offsets = [0, 0], sizes = [1, 512], strides = [1, 1]} : vector<1x1024xf32> to vector<1x512xf32>
    %598 = arith.mulf %597, %583 : vector<1x512xf32>
    %599 = vector.extract_strided_slice %596 {offsets = [0, 512], sizes = [1, 512], strides = [1, 1]} : vector<1x1024xf32> to vector<1x512xf32>
    %600 = arith.addf %598, %599 : vector<1x512xf32>
    %601 = arith.index_cast %c21_i32 : i32 to index
    %c0_216 = arith.constant 0 : index
    %602 = vector.load %arg20[%601, %c0_216] : memref<24x512xf32, #tpu.memory_space<vmem>>, vector<1x512xf32>
    tpu.vector_store %arg20[%601, %c0_216], %600 {strides = array<i32>} : memref<24x512xf32, #tpu.memory_space<vmem>>, vector<1x512xf32>,
    %603 = arith.index_cast %594 : i32 to index
    %c0_217 = arith.constant 0 : index
    %604 = vector.load %arg19[%603, %c0_217] : memref<24x1024xf32, #tpu.memory_space<vmem>>, vector<1x1024xf32>
    %605 = vector.extract_strided_slice %604 {offsets = [0, 0], sizes = [1, 512], strides = [1, 1]} : vector<1x1024xf32> to vector<1x512xf32>
    %606 = arith.mulf %605, %591 : vector<1x512xf32>
    %607 = vector.extract_strided_slice %604 {offsets = [0, 512], sizes = [1, 512], strides = [1, 1]} : vector<1x1024xf32> to vector<1x512xf32>
    %608 = arith.addf %606, %607 : vector<1x512xf32>
    %609 = arith.index_cast %594 : i32 to index
    %c0_218 = arith.constant 0 : index
    %610 = vector.load %arg21[%609, %c0_218] : memref<24x512xf32, #tpu.memory_space<vmem>>, vector<1x512xf32>
    tpu.vector_store %arg21[%609, %c0_218], %608 {strides = array<i32>} : memref<24x512xf32, #tpu.memory_space<vmem>>, vector<1x512xf32>,
    %c22_i32 = arith.constant 22 : i32
    %c23_i32_219 = arith.constant 23 : i32
    %611 = arith.subi %c23_i32_219, %c22_i32 : i32
    %612 = arith.index_cast %c22_i32 : i32 to index
    %c0_220 = arith.constant 0 : index
    %613 = vector.load %arg18[%612, %c0_220] : memref<24x1024xf32, #tpu.memory_space<vmem>>, vector<1x1024xf32>
    %614 = vector.extract_strided_slice %613 {offsets = [0, 0], sizes = [1, 512], strides = [1, 1]} : vector<1x1024xf32> to vector<1x512xf32>
    %615 = arith.mulf %614, %600 : vector<1x512xf32>
    %616 = vector.extract_strided_slice %613 {offsets = [0, 512], sizes = [1, 512], strides = [1, 1]} : vector<1x1024xf32> to vector<1x512xf32>
    %617 = arith.addf %615, %616 : vector<1x512xf32>
    %618 = arith.index_cast %c22_i32 : i32 to index
    %c0_221 = arith.constant 0 : index
    %619 = vector.load %arg20[%618, %c0_221] : memref<24x512xf32, #tpu.memory_space<vmem>>, vector<1x512xf32>
    tpu.vector_store %arg20[%618, %c0_221], %617 {strides = array<i32>} : memref<24x512xf32, #tpu.memory_space<vmem>>, vector<1x512xf32>,
    %620 = arith.index_cast %611 : i32 to index
    %c0_222 = arith.constant 0 : index
    %621 = vector.load %arg19[%620, %c0_222] : memref<24x1024xf32, #tpu.memory_space<vmem>>, vector<1x1024xf32>
    %622 = vector.extract_strided_slice %621 {offsets = [0, 0], sizes = [1, 512], strides = [1, 1]} : vector<1x1024xf32> to vector<1x512xf32>
    %623 = arith.mulf %622, %608 : vector<1x512xf32>
    %624 = vector.extract_strided_slice %621 {offsets = [0, 512], sizes = [1, 512], strides = [1, 1]} : vector<1x1024xf32> to vector<1x512xf32>
    %625 = arith.addf %623, %624 : vector<1x512xf32>
    %626 = arith.index_cast %611 : i32 to index
    %c0_223 = arith.constant 0 : index
    %627 = vector.load %arg21[%626, %c0_223] : memref<24x512xf32, #tpu.memory_space<vmem>>, vector<1x512xf32>
    tpu.vector_store %arg21[%626, %c0_223], %625 {strides = array<i32>} : memref<24x512xf32, #tpu.memory_space<vmem>>, vector<1x512xf32>,
    %c23_i32_224 = arith.constant 23 : i32
    %c23_i32_225 = arith.constant 23 : i32
    %628 = arith.subi %c23_i32_225, %c23_i32_224 : i32
    %629 = arith.index_cast %c23_i32_224 : i32 to index
    %c0_226 = arith.constant 0 : index
    %630 = vector.load %arg18[%629, %c0_226] : memref<24x1024xf32, #tpu.memory_space<vmem>>, vector<1x1024xf32>
    %631 = vector.extract_strided_slice %630 {offsets = [0, 0], sizes = [1, 512], strides = [1, 1]} : vector<1x1024xf32> to vector<1x512xf32>
    %632 = arith.mulf %631, %617 : vector<1x512xf32>
    %633 = vector.extract_strided_slice %630 {offsets = [0, 512], sizes = [1, 512], strides = [1, 1]} : vector<1x1024xf32> to vector<1x512xf32>
    %634 = arith.addf %632, %633 : vector<1x512xf32>
    %635 = arith.index_cast %c23_i32_224 : i32 to index
    %c0_227 = arith.constant 0 : index
    %636 = vector.load %arg20[%635, %c0_227] : memref<24x512xf32, #tpu.memory_space<vmem>>, vector<1x512xf32>
    tpu.vector_store %arg20[%635, %c0_227], %634 {strides = array<i32>} : memref<24x512xf32, #tpu.memory_space<vmem>>, vector<1x512xf32>,
    %637 = arith.index_cast %628 : i32 to index
    %c0_228 = arith.constant 0 : index
    %638 = vector.load %arg19[%637, %c0_228] : memref<24x1024xf32, #tpu.memory_space<vmem>>, vector<1x1024xf32>
    %639 = vector.extract_strided_slice %638 {offsets = [0, 0], sizes = [1, 512], strides = [1, 1]} : vector<1x1024xf32> to vector<1x512xf32>
    %640 = arith.mulf %639, %625 : vector<1x512xf32>
    %641 = vector.extract_strided_slice %638 {offsets = [0, 512], sizes = [1, 512], strides = [1, 1]} : vector<1x1024xf32> to vector<1x512xf32>
    %642 = arith.addf %640, %641 : vector<1x512xf32>
    %643 = arith.index_cast %628 : i32 to index
    %c0_229 = arith.constant 0 : index
    %644 = vector.load %arg21[%643, %c0_229] : memref<24x512xf32, #tpu.memory_space<vmem>>, vector<1x512xf32>
    tpu.vector_store %arg21[%643, %c0_229], %642 {strides = array<i32>} : memref<24x512xf32, #tpu.memory_space<vmem>>, vector<1x512xf32>,
    %c24_i32 = arith.constant 24 : i32
    %c0_230 = arith.constant 0 : index
    %c0_231 = arith.constant 0 : index
    %c0_232 = arith.constant 0 : index
    %645 = vector.load %arg14[%c0_230, %c0_231, %c0_232] : memref<1x1x128xf32, #tpu.memory_space<vmem>>, vector<1x1x128xf32>
    %646 = vector.shape_cast %645 : vector<1x1x128xf32> to vector<1x128xf32>
    %647 = vector.extract_strided_slice %67 {offsets = [0, 0], sizes = [24, 64], strides = [1, 1]} : vector<24x128xf32> to vector<24x64xf32>
    %648 = vector.extract_strided_slice %646 {offsets = [0, 0], sizes = [1, 64], strides = [1, 1]} : vector<1x128xf32> to vector<1x64xf32>
    %649 = vector.broadcast %648 : vector<1x64xf32> to vector<24x64xf32>
    %650 = arith.mulf %647, %649 : vector<24x64xf32>
    %651 = vector.extract_strided_slice %67 {offsets = [0, 64], sizes = [24, 64], strides = [1, 1]} : vector<24x128xf32> to vector<24x64xf32>
    %652 = vector.extract_strided_slice %646 {offsets = [0, 64], sizes = [1, 64], strides = [1, 1]} : vector<1x128xf32> to vector<1x64xf32>
    %653 = vector.broadcast %652 : vector<1x64xf32> to vector<24x64xf32>
    %654 = arith.mulf %651, %653 : vector<24x64xf32>
    %655 = vector.extract_strided_slice %86 {offsets = [0, 0], sizes = [24, 1], strides = [1, 1]} : vector<24x8xf32> to vector<24x1xf32>
    %c0_233 = arith.constant 0 : index
    %c0_234 = arith.constant 0 : index
    %656 = vector.load %arg20[%c0_233, %c0_234] : memref<24x512xf32, #tpu.memory_space<vmem>>, vector<24x64xf32>
    %657 = vector.broadcast %655 : vector<24x1xf32> to vector<24x64xf32>
    %658 = arith.mulf %657, %656 : vector<24x64xf32>
    %659 = arith.addf %650, %658 : vector<24x64xf32>
    %660 = vector.extract_strided_slice %88 {offsets = [0, 0], sizes = [24, 1], strides = [1, 1]} : vector<24x8xf32> to vector<24x1xf32>
    %c0_235 = arith.constant 0 : index
    %c0_236 = arith.constant 0 : index
    %661 = vector.load %arg21[%c0_235, %c0_236] : memref<24x512xf32, #tpu.memory_space<vmem>>, vector<24x64xf32>
    %662 = vector.broadcast %660 : vector<24x1xf32> to vector<24x64xf32>
    %663 = arith.mulf %662, %661 : vector<24x64xf32>
    %664 = arith.addf %654, %663 : vector<24x64xf32>
    %665 = vector.extract_strided_slice %86 {offsets = [0, 1], sizes = [24, 1], strides = [1, 1]} : vector<24x8xf32> to vector<24x1xf32>
    %c0_237 = arith.constant 0 : index
    %c64_238 = arith.constant 64 : index
    %666 = vector.load %arg20[%c0_237, %c64_238] : memref<24x512xf32, #tpu.memory_space<vmem>>, vector<24x64xf32>
    %667 = vector.broadcast %665 : vector<24x1xf32> to vector<24x64xf32>
    %668 = arith.mulf %667, %666 : vector<24x64xf32>
    %669 = arith.addf %659, %668 : vector<24x64xf32>
    %670 = vector.extract_strided_slice %88 {offsets = [0, 1], sizes = [24, 1], strides = [1, 1]} : vector<24x8xf32> to vector<24x1xf32>
    %c0_239 = arith.constant 0 : index
    %c64_240 = arith.constant 64 : index
    %671 = vector.load %arg21[%c0_239, %c64_240] : memref<24x512xf32, #tpu.memory_space<vmem>>, vector<24x64xf32>
    %672 = vector.broadcast %670 : vector<24x1xf32> to vector<24x64xf32>
    %673 = arith.mulf %672, %671 : vector<24x64xf32>
    %674 = arith.addf %664, %673 : vector<24x64xf32>
    %675 = vector.extract_strided_slice %86 {offsets = [0, 2], sizes = [24, 1], strides = [1, 1]} : vector<24x8xf32> to vector<24x1xf32>
    %c0_241 = arith.constant 0 : index
    %c128_242 = arith.constant 128 : index
    %676 = vector.load %arg20[%c0_241, %c128_242] : memref<24x512xf32, #tpu.memory_space<vmem>>, vector<24x64xf32>
    %677 = vector.broadcast %675 : vector<24x1xf32> to vector<24x64xf32>
    %678 = arith.mulf %677, %676 : vector<24x64xf32>
    %679 = arith.addf %669, %678 : vector<24x64xf32>
    %680 = vector.extract_strided_slice %88 {offsets = [0, 2], sizes = [24, 1], strides = [1, 1]} : vector<24x8xf32> to vector<24x1xf32>
    %c0_243 = arith.constant 0 : index
    %c128_244 = arith.constant 128 : index
    %681 = vector.load %arg21[%c0_243, %c128_244] : memref<24x512xf32, #tpu.memory_space<vmem>>, vector<24x64xf32>
    %682 = vector.broadcast %680 : vector<24x1xf32> to vector<24x64xf32>
    %683 = arith.mulf %682, %681 : vector<24x64xf32>
    %684 = arith.addf %674, %683 : vector<24x64xf32>
    %685 = vector.extract_strided_slice %86 {offsets = [0, 3], sizes = [24, 1], strides = [1, 1]} : vector<24x8xf32> to vector<24x1xf32>
    %c0_245 = arith.constant 0 : index
    %c192_246 = arith.constant 192 : index
    %686 = vector.load %arg20[%c0_245, %c192_246] : memref<24x512xf32, #tpu.memory_space<vmem>>, vector<24x64xf32>
    %687 = vector.broadcast %685 : vector<24x1xf32> to vector<24x64xf32>
    %688 = arith.mulf %687, %686 : vector<24x64xf32>
    %689 = arith.addf %679, %688 : vector<24x64xf32>
    %690 = vector.extract_strided_slice %88 {offsets = [0, 3], sizes = [24, 1], strides = [1, 1]} : vector<24x8xf32> to vector<24x1xf32>
    %c0_247 = arith.constant 0 : index
    %c192_248 = arith.constant 192 : index
    %691 = vector.load %arg21[%c0_247, %c192_248] : memref<24x512xf32, #tpu.memory_space<vmem>>, vector<24x64xf32>
    %692 = vector.broadcast %690 : vector<24x1xf32> to vector<24x64xf32>
    %693 = arith.mulf %692, %691 : vector<24x64xf32>
    %694 = arith.addf %684, %693 : vector<24x64xf32>
    %695 = vector.extract_strided_slice %86 {offsets = [0, 4], sizes = [24, 1], strides = [1, 1]} : vector<24x8xf32> to vector<24x1xf32>
    %c0_249 = arith.constant 0 : index
    %c256_250 = arith.constant 256 : index
    %696 = vector.load %arg20[%c0_249, %c256_250] : memref<24x512xf32, #tpu.memory_space<vmem>>, vector<24x64xf32>
    %697 = vector.broadcast %695 : vector<24x1xf32> to vector<24x64xf32>
    %698 = arith.mulf %697, %696 : vector<24x64xf32>
    %699 = arith.addf %689, %698 : vector<24x64xf32>
    %700 = vector.extract_strided_slice %88 {offsets = [0, 4], sizes = [24, 1], strides = [1, 1]} : vector<24x8xf32> to vector<24x1xf32>
    %c0_251 = arith.constant 0 : index
    %c256_252 = arith.constant 256 : index
    %701 = vector.load %arg21[%c0_251, %c256_252] : memref<24x512xf32, #tpu.memory_space<vmem>>, vector<24x64xf32>
    %702 = vector.broadcast %700 : vector<24x1xf32> to vector<24x64xf32>
    %703 = arith.mulf %702, %701 : vector<24x64xf32>
    %704 = arith.addf %694, %703 : vector<24x64xf32>
    %705 = vector.extract_strided_slice %86 {offsets = [0, 5], sizes = [24, 1], strides = [1, 1]} : vector<24x8xf32> to vector<24x1xf32>
    %c0_253 = arith.constant 0 : index
    %c320_254 = arith.constant 320 : index
    %706 = vector.load %arg20[%c0_253, %c320_254] : memref<24x512xf32, #tpu.memory_space<vmem>>, vector<24x64xf32>
    %707 = vector.broadcast %705 : vector<24x1xf32> to vector<24x64xf32>
    %708 = arith.mulf %707, %706 : vector<24x64xf32>
    %709 = arith.addf %699, %708 : vector<24x64xf32>
    %710 = vector.extract_strided_slice %88 {offsets = [0, 5], sizes = [24, 1], strides = [1, 1]} : vector<24x8xf32> to vector<24x1xf32>
    %c0_255 = arith.constant 0 : index
    %c320_256 = arith.constant 320 : index
    %711 = vector.load %arg21[%c0_255, %c320_256] : memref<24x512xf32, #tpu.memory_space<vmem>>, vector<24x64xf32>
    %712 = vector.broadcast %710 : vector<24x1xf32> to vector<24x64xf32>
    %713 = arith.mulf %712, %711 : vector<24x64xf32>
    %714 = arith.addf %704, %713 : vector<24x64xf32>
    %715 = vector.extract_strided_slice %86 {offsets = [0, 6], sizes = [24, 1], strides = [1, 1]} : vector<24x8xf32> to vector<24x1xf32>
    %c0_257 = arith.constant 0 : index
    %c384_258 = arith.constant 384 : index
    %716 = vector.load %arg20[%c0_257, %c384_258] : memref<24x512xf32, #tpu.memory_space<vmem>>, vector<24x64xf32>
    %717 = vector.broadcast %715 : vector<24x1xf32> to vector<24x64xf32>
    %718 = arith.mulf %717, %716 : vector<24x64xf32>
    %719 = arith.addf %709, %718 : vector<24x64xf32>
    %720 = vector.extract_strided_slice %88 {offsets = [0, 6], sizes = [24, 1], strides = [1, 1]} : vector<24x8xf32> to vector<24x1xf32>
    %c0_259 = arith.constant 0 : index
    %c384_260 = arith.constant 384 : index
    %721 = vector.load %arg21[%c0_259, %c384_260] : memref<24x512xf32, #tpu.memory_space<vmem>>, vector<24x64xf32>
    %722 = vector.broadcast %720 : vector<24x1xf32> to vector<24x64xf32>
    %723 = arith.mulf %722, %721 : vector<24x64xf32>
    %724 = arith.addf %714, %723 : vector<24x64xf32>
    %725 = vector.extract_strided_slice %86 {offsets = [0, 7], sizes = [24, 1], strides = [1, 1]} : vector<24x8xf32> to vector<24x1xf32>
    %c0_261 = arith.constant 0 : index
    %c448_262 = arith.constant 448 : index
    %726 = vector.load %arg20[%c0_261, %c448_262] : memref<24x512xf32, #tpu.memory_space<vmem>>, vector<24x64xf32>
    %727 = vector.broadcast %725 : vector<24x1xf32> to vector<24x64xf32>
    %728 = arith.mulf %727, %726 : vector<24x64xf32>
    %729 = arith.addf %719, %728 : vector<24x64xf32>
    %730 = vector.extract_strided_slice %88 {offsets = [0, 7], sizes = [24, 1], strides = [1, 1]} : vector<24x8xf32> to vector<24x1xf32>
    %c0_263 = arith.constant 0 : index
    %c448_264 = arith.constant 448 : index
    %731 = vector.load %arg21[%c0_263, %c448_264] : memref<24x512xf32, #tpu.memory_space<vmem>>, vector<24x64xf32>
    %732 = vector.broadcast %730 : vector<24x1xf32> to vector<24x64xf32>
    %733 = arith.mulf %732, %731 : vector<24x64xf32>
    %734 = arith.addf %724, %733 : vector<24x64xf32>
    %cst_265 = arith.constant 0.000000e+00 : f32
    %735 = vector.broadcast %cst_265 : f32 to vector<24x64xf32>
    %736 = arith.subf %735, %24 : vector<24x64xf32>
    %737 = math.exp %736 : vector<24x64xf32>
    %cst_266 = arith.constant 1.000000e+00 : f32
    %738 = vector.broadcast %cst_266 : f32 to vector<24x64xf32>
    %739 = arith.addf %738, %737 : vector<24x64xf32>
    %cst_267 = arith.constant 1.000000e+00 : f32
    %740 = vector.broadcast %cst_267 : f32 to vector<24x64xf32>
    %741 = arith.divf %740, %739 : vector<24x64xf32>
    %742 = arith.mulf %24, %741 : vector<24x64xf32>
    %743 = arith.addf %729, %734 : vector<24x64xf32>
    %744 = arith.mulf %743, %742 : vector<24x64xf32>
    %c0_268 = arith.constant 0 : index
    %c0_269 = arith.constant 0 : index
    %c0_270 = arith.constant 0 : index
    %745 = vector.load %arg15[%c0_268, %c0_269, %c0_270] : memref<1x64x32xf32, #tpu.memory_space<vmem>>, vector<1x64x32xf32>
    %746 = vector.shape_cast %745 : vector<1x64x32xf32> to vector<64x32xf32>
    %cst_271 = arith.constant dense<0.000000e+00> : vector<24x32xf32>
    %747 = tpu.matmul %744, %746, %cst_271 {dimension_numbers = #tpu.dot_dimension_numbers<[1], [0], [0], [1], [0, 0, 1, 1], [], []>} : vector<24x64xf32>, vector<64x32xf32>, vector<24x32xf32> -> vector<24x32xf32>
    %c0_272 = arith.constant 0 : index
    %c0_273 = arith.constant 0 : index
    %748 = vector.load %arg22[%c0_272, %c0_273] : memref<24x32xf32, #tpu.memory_space<vmem>>, vector<24x32xf32>
    tpu.vector_store %arg22[%c0_272, %c0_273], %747 {strides = array<i32>} : memref<24x32xf32, #tpu.memory_space<vmem>>, vector<24x32xf32>,
    %c0_274 = arith.constant 0 : index
    %c0_275 = arith.constant 0 : index
    %749 = vector.load %arg23[%c0_274, %c0_275] : memref<24x32xf32, #tpu.memory_space<vmem>>, vector<24x32xf32>
    tpu.vector_store %arg23[%c0_274, %c0_275], %5 {strides = array<i32>} : memref<24x32xf32, #tpu.memory_space<vmem>>, vector<24x32xf32>,
    %c1_i32_276 = arith.constant 1 : i32
    %750 = arith.cmpi eq, %arg1, %c1_i32_276 : i32
    %751 = arith.extui %750 : i1 to i32
    %c0_i32_277 = arith.constant 0 : i32
    %752 = arith.cmpi ne, %751, %c0_i32_277 : i32
    scf.if %752 {
      %753 = arith.addf %747, %5 : vector<24x32xf32>
      %754 = arith.mulf %753, %753 : vector<24x32xf32>
      %cst_278 = arith.constant dense<0.000000e+00> : vector<24xf32>
      %755 = vector.multi_reduction <add>, %754, %cst_278 [1] : vector<24x32xf32> to vector<24xf32>
      %756 = vector.shape_cast %755 : vector<24xf32> to vector<24x1xf32>
      %cst_279 = arith.constant 3.200000e+01 : f32
      %757 = vector.broadcast %cst_279 : f32 to vector<24x1xf32>
      %758 = arith.divf %756, %757 : vector<24x1xf32>
      %cst_280 = arith.constant 9.99999974E-6 : f32
      %759 = vector.broadcast %cst_280 : f32 to vector<24x1xf32>
      %760 = arith.addf %758, %759 : vector<24x1xf32>
      %761 = math.rsqrt %760 : vector<24x1xf32>
      %762 = vector.broadcast %761 : vector<24x1xf32> to vector<24x32xf32>
      %763 = arith.mulf %753, %762 : vector<24x32xf32>
      %c0_281 = arith.constant 0 : index
      %c0_282 = arith.constant 0 : index
      %764 = vector.load %arg6[%c0_281, %c0_282] : memref<1x32xf32, #tpu.memory_space<vmem>>, vector<1x32xf32>
      %765 = vector.broadcast %764 : vector<1x32xf32> to vector<24x32xf32>
      %766 = arith.mulf %763, %765 : vector<24x32xf32>
      %c0_283 = arith.constant 0 : index
      %c0_284 = arith.constant 0 : index
      %c0_285 = arith.constant 0 : index
      %767 = vector.load %arg16[%c0_283, %c0_284, %c0_285] : memref<1x24x32xf32, #tpu.memory_space<vmem>>, vector<1x24x32xf32>
      %768 = vector.shape_cast %767 : vector<1x24x32xf32> to vector<24x32xf32>
      %769 = vector.shape_cast %766 : vector<24x32xf32> to vector<1x24x32xf32>
      tpu.vector_store %arg16[%c0_283, %c0_284, %c0_285], %769 {strides = array<i32>} : memref<1x24x32xf32, #tpu.memory_space<vmem>>, vector<1x24x32xf32>,
    } else {
    }
    return
  }
  func.func @transform_0(%arg0: i32, %arg1: i32) -> (i32, i32, i32) {
    %c0_i32 = arith.constant 0 : i32
    %c0_i32_0 = arith.constant 0 : i32
    %c0_i32_1 = arith.constant 0 : i32
    return %arg0, %c0_i32, %c0_i32_0 : i32, i32, i32
  }
  func.func @transform_1(%arg0: i32, %arg1: i32) -> (i32, i32) {
    %c0_i32 = arith.constant 0 : i32
    %c0_i32_0 = arith.constant 0 : i32
    %c0_i32_1 = arith.constant 0 : i32
    return %c0_i32, %c0_i32_0 : i32, i32
  }
  func.func @transform_2(%arg0: i32, %arg1: i32) -> (i32, i32) {
    %c0_i32 = arith.constant 0 : i32
    %c0_i32_0 = arith.constant 0 : i32
    %c0_i32_1 = arith.constant 0 : i32
    return %c0_i32, %c0_i32_0 : i32, i32
  }
  func.func @transform_3(%arg0: i32, %arg1: i32) -> (i32, i32) {
    %c0_i32 = arith.constant 0 : i32
    %c0_i32_0 = arith.constant 0 : i32
    %c0_i32_1 = arith.constant 0 : i32
    return %c0_i32, %c0_i32_0 : i32, i32
  }
  func.func @transform_4(%arg0: i32, %arg1: i32) -> (i32, i32) {
    %c0_i32 = arith.constant 0 : i32
    %c0_i32_0 = arith.constant 0 : i32
    %c0_i32_1 = arith.constant 0 : i32
    return %c0_i32, %c0_i32_0 : i32, i32
  }
  func.func @transform_5(%arg0: i32, %arg1: i32) -> (i32, i32, i32) {
    %c0_i32 = arith.constant 0 : i32
    %c0_i32_0 = arith.constant 0 : i32
    %c0_i32_1 = arith.constant 0 : i32
    return %arg1, %c0_i32, %c0_i32_0 : i32, i32, i32
  }
  func.func @transform_6(%arg0: i32, %arg1: i32) -> (i32, i32, i32) {
    %c0_i32 = arith.constant 0 : i32
    %c0_i32_0 = arith.constant 0 : i32
    %c0_i32_1 = arith.constant 0 : i32
    return %arg1, %c0_i32, %c0_i32_0 : i32, i32, i32
  }
  func.func @transform_7(%arg0: i32, %arg1: i32) -> (i32, i32, i32) {
    %c0_i32 = arith.constant 0 : i32
    %c0_i32_0 = arith.constant 0 : i32
    %c0_i32_1 = arith.constant 0 : i32
    return %arg1, %c0_i32, %c0_i32_0 : i32, i32, i32
  }
  func.func @transform_8(%arg0: i32, %arg1: i32) -> (i32, i32, i32) {
    %c0_i32 = arith.constant 0 : i32
    %c0_i32_0 = arith.constant 0 : i32
    %c0_i32_1 = arith.constant 0 : i32
    return %arg1, %c0_i32, %c0_i32_0 : i32, i32, i32
  }
  func.func @transform_9(%arg0: i32, %arg1: i32) -> (i32, i32, i32) {
    %c0_i32 = arith.constant 0 : i32
    %c0_i32_0 = arith.constant 0 : i32
    %c0_i32_1 = arith.constant 0 : i32
    return %arg1, %c0_i32, %c0_i32_0 : i32, i32, i32
  }
  func.func @transform_10(%arg0: i32, %arg1: i32) -> (i32, i32, i32) {
    %c0_i32 = arith.constant 0 : i32
    %c0_i32_0 = arith.constant 0 : i32
    %c0_i32_1 = arith.constant 0 : i32
    return %arg1, %c0_i32, %c0_i32_0 : i32, i32, i32
  }
  func.func @transform_11(%arg0: i32, %arg1: i32) -> (i32, i32, i32) {
    %c0_i32 = arith.constant 0 : i32
    %c0_i32_0 = arith.constant 0 : i32
    %c0_i32_1 = arith.constant 0 : i32
    return %arg1, %c0_i32, %c0_i32_0 : i32, i32, i32
  }
  func.func @transform_12(%arg0: i32, %arg1: i32) -> (i32, i32, i32) {
    %c0_i32 = arith.constant 0 : i32
    %c0_i32_0 = arith.constant 0 : i32
    %c0_i32_1 = arith.constant 0 : i32
    return %arg1, %c0_i32, %c0_i32_0 : i32, i32, i32
  }
  func.func @transform_13(%arg0: i32, %arg1: i32) -> (i32, i32, i32) {
    %c0_i32 = arith.constant 0 : i32
    %c0_i32_0 = arith.constant 0 : i32
    %c0_i32_1 = arith.constant 0 : i32
    return %arg1, %c0_i32, %c0_i32_0 : i32, i32, i32
  }
  func.func @transform_14(%arg0: i32, %arg1: i32) -> (i32, i32, i32) {
    %c0_i32 = arith.constant 0 : i32
    %c0_i32_0 = arith.constant 0 : i32
    %c0_i32_1 = arith.constant 0 : i32
    return %arg0, %c0_i32, %c0_i32_0 : i32, i32, i32
  }
}

</mosaic_0001>

<llo_original>
// kernel: _lambda_.1
$region0: #{_lambda_.1}
  #allocation0 [shape = 'u32[]', space=smem, size = 0x4, offset = 0x4, fixed_abs, tag = 'smem constant byte address 0x4 - core index']
  #allocation1 [shape = 'u32[144,128]{1,0:T(1,128)}', space=vmem, size = 0x12000, scoped, tag = 'internal scratch']
  #allocation2 [shape = 'f32[27,128]{1,0:T(8,128)}', space=vmem, size = 0x4000, scoped, tag = 'scratch operand']
  #allocation3 [shape = 'f32[24,1024]{1,0:T(8,128)}', space=vmem, size = 0x18000, scoped, tag = 'scratch operand']
  #allocation4 [shape = 'f32[24,1024]{1,0:T(8,128)}', space=vmem, size = 0x18000, scoped, tag = 'scratch operand']
  #allocation5 [shape = 'f32[24,512]{1,0:T(8,128)}', space=vmem, size = 0xc000, scoped, tag = 'scratch operand']
  #allocation6 [shape = 'f32[24,512]{1,0:T(8,128)}', space=vmem, size = 0xc000, scoped, tag = 'scratch operand']
  #allocation7 [shape = 'f32[24,32]{1,0:T(8,128)}', space=vmem, size = 0x3000, scoped, tag = 'scratch operand']
  #allocation8 [shape = 'f32[24,32]{1,0:T(8,128)}', space=vmem, size = 0x3000, scoped, tag = 'scratch operand']
  %s0 = inlined_call_operand.vmem [shape: f32[2,24,192], index: 0, kind: input, shape index: {}]
  %s1 = inlined_call_operand.vmem [shape: f32[24,32], index: 1, kind: input, shape index: {}]
  %s2 = inlined_call_operand.vmem [shape: f32[192,32], index: 2, kind: input, shape index: {}]
  %s3 = inlined_call_operand.vmem [shape: f32[1,32], index: 3, kind: input, shape index: {}]
  %s4 = inlined_call_operand.vmem [shape: f32[1,32], index: 4, kind: input, shape index: {}]
  %s5 = inlined_call_operand.vmem [shape: f32[2,1,32], index: 5, kind: input, shape index: {}]
  %s6 = inlined_call_operand.vmem [shape: f32[2,32,128], index: 6, kind: input, shape index: {}]
  %s7 = inlined_call_operand.vmem [shape: f32[2,4,128], index: 7, kind: input, shape index: {}]
  %s8 = inlined_call_operand.vmem [shape: f32[2,1,128], index: 8, kind: input, shape index: {}]
  %s9 = inlined_call_operand.vmem [shape: f32[2,128,160], index: 9, kind: input, shape index: {}]
  %s10 = inlined_call_operand.vmem [shape: f32[2,1,160], index: 10, kind: input, shape index: {}]
  %s11 = inlined_call_operand.vmem [shape: f32[2,8,128], index: 11, kind: input, shape index: {}]
  %s12 = inlined_call_operand.vmem [shape: f32[2,1,128], index: 12, kind: input, shape index: {}]
  %s13 = inlined_call_operand.vmem [shape: f32[2,64,32], index: 13, kind: input, shape index: {}]
  %s14 = inlined_call_operand.hbm [shape: f32[2,24,32], index: 14, kind: output, shape index: {}]
  %s15 = sld [smem:[#allocation0]]
  $region97: #{_lambda_.1} parent=0
    _
  %s17 = ssub.s32 1, %s15
  %s18 = scalar_select 0, %s17, %s15
  $region1: #{_lambda_.1} parent=0
    #allocation9 [shape = 'u8[24576]{0}', space=vmem, size = 0x6000, scoped, tag = 'output window, operand 0']
    #allocation10 [shape = 's32[2]{0}', space=sflag, size = 0x8, scoped, tag = 'scoped memory for _lambda_.1']
    %19 = vsyncpa [#allocation10], 0
    %s20 = scalar_lea.sflag [#allocation10], 1
    %21 = vsyncpa %s20, 0
    loop: start=0, step=1, limit=6
    $region2: #{_lambda_.1} parent=1 // loop_pre_header
      _
    $region3: #{_lambda_.1} parent=1 // loop_header
      %s23 = sphi 0, %s27
      %p24 = scmp.ge.s32.totalorder %s23, 6
      %s30 = sphi 0, %s42
      %s31 = sphi 0, %s38
      %s32 = sphi 0, %s30
      %s33 = sphi 0, %s31
      %s34 = sphi 0, %s32
      %s35 = sphi 0, %s33
      %s45 = sphi 0, %s47
      %s48 = sphi 0, %s45
      %s49 = sphi 0, %s48
      %s65 = sphi 0, %s49
      %s69 = sphi 0, %s69
      %s71 = sphi 0, %s69
      %s72 = sphi 0, %s71
      %s86 = sphi 0, %s72
      %s90 = sphi 0, %s90
      %s92 = sphi 0, %s90
      %s93 = sphi 0, %s92
      %s107 = sphi 0, %s93
      %s111 = sphi 0, %s111
      %s113 = sphi 0, %s111
      %s114 = sphi 0, %s113
      %s128 = sphi 0, %s114
      %s132 = sphi 0, %s132
      %s134 = sphi 0, %s132
      %s135 = sphi 0, %s134
      %s149 = sphi 0, %s135
      %s155 = sphi 0, %s157
      %s158 = sphi 0, %s155
      %s159 = sphi 0, %s158
      %s175 = sphi 0, %s159
      %s181 = sphi 0, %s183
      %s184 = sphi 0, %s181
      %s185 = sphi 0, %s184
      %s201 = sphi 0, %s185
      %s207 = sphi 0, %s209
      %s210 = sphi 0, %s207
      %s211 = sphi 0, %s210
      %s227 = sphi 0, %s211
      %s233 = sphi 0, %s235
      %s236 = sphi 0, %s233
      %s237 = sphi 0, %s236
      %s253 = sphi 0, %s237
      %s259 = sphi 0, %s261
      %s262 = sphi 0, %s259
      %s263 = sphi 0, %s262
      %s279 = sphi 0, %s263
      %s285 = sphi 0, %s287
      %s288 = sphi 0, %s285
      %s289 = sphi 0, %s288
      %s305 = sphi 0, %s289
      %s311 = sphi 0, %s313
      %s314 = sphi 0, %s311
      %s315 = sphi 0, %s314
      %s331 = sphi 0, %s315
      %s337 = sphi 0, %s339
      %s340 = sphi 0, %s337
      %s341 = sphi 0, %s340
      %s357 = sphi 0, %s341
      %s363 = sphi 0, %s365
      %s366 = sphi 0, %s363
      %s367 = sphi 0, %s366
      %s383 = sphi 0, %s367
      %s389 = sphi 0, %s391
      %s392 = sphi 0, %s389
      %s393 = sphi 0, %s392
      %s409 = sphi 0, %s393
    $region4: #{_lambda_.1} parent=1 // loop_header_branch
      %26 = sbr.rel (%p24) target = $region8
    $region5: #{_lambda_.1} parent=1 // loop_body
      %s28 = ssub.s32 %s23, 1
      %s29 = ssub.s32 %s23, 2
      %s36 = sadd.s32 1, %s31
      %p37 = scmp.ge.s32.totalorder %s36, 2
      %s38 = scalar_select %p37, 0, %s36
      %s39 = sadd.s32 1, %s30
      %s40 = scalar_select %p37, %s39, %s30
      %p41 = scmp.ge.s32.totalorder %s40, 2
      %s42 = scalar_select %p41, 0, %s40
      %s43 = ssub.s32 %s30, %s42
      %p44 = scmp.eq.s32.totalorder %s43, 0
      %s46 = sadd.s32 %s45, 1
      %s47 = scalar_select %p44, %s45, %s46
      %p50 = pneg %p44
      %p51 = scmp.eq.s32.totalorder %s23, 3
      %p52 = por %p50, %p51
      %p53 = scmp.ne.s32.totalorder %s45, %s48
      %p54 = scmp.eq.s32.totalorder %s23, 0
      %p55 = por %p53, %p54
      %p56 = scmp.ne.s32.totalorder %s45, %s48
      %p57 = scmp.eq.s32.totalorder %s28, 3
      %p58 = por %p56, %p57
      %p59 = scmp.ne.s32.totalorder %s48, %s49
      %p60 = scmp.eq.s32.totalorder %s28, 0
      %p61 = por %p59, %p60
      %p62 = scmp.ne.s32.totalorder %s48, %s49
      %p63 = scmp.eq.s32.totalorder %s29, 3
      %p64 = por %p62, %p63
      %p66 = scmp.ne.s32.totalorder %s49, %s65
      %p67 = scmp.eq.s32.totalorder %s29, 0
      %p68 = por %p66, %p67
      %s70 = sadd.s32 %s69, 1
      %p73 = scmp.eq.s32.totalorder %s23, 3
      %p74 = scmp.ne.s32.totalorder %s69, %s71
      %p75 = scmp.eq.s32.totalorder %s23, 0
      %p76 = por %p74, %p75
      %p77 = scmp.ne.s32.totalorder %s69, %s71
      %p78 = scmp.eq.s32.totalorder %s28, 3
      %p79 = por %p77, %p78
      %p80 = scmp.ne.s32.totalorder %s71, %s72
      %p81 = scmp.eq.s32.totalorder %s28, 0
      %p82 = por %p80, %p81
      %p83 = scmp.ne.s32.totalorder %s71, %s72
      %p84 = scmp.eq.s32.totalorder %s29, 3
      %p85 = por %p83, %p84
      %p87 = scmp.ne.s32.totalorder %s72, %s86
      %p88 = scmp.eq.s32.totalorder %s29, 0
      %p89 = por %p87, %p88
      %s91 = sadd.s32 %s90, 1
      %p94 = scmp.eq.s32.totalorder %s23, 3
      %p95 = scmp.ne.s32.totalorder %s90, %s92
      %p96 = scmp.eq.s32.totalorder %s23, 0
      %p97 = por %p95, %p96
      %p98 = scmp.ne.s32.totalorder %s90, %s92
      %p99 = scmp.eq.s32.totalorder %s28, 3
      %p100 = por %p98, %p99
      %p101 = scmp.ne.s32.totalorder %s92, %s93
      %p102 = scmp.eq.s32.totalorder %s28, 0
      %p103 = por %p101, %p102
      %p104 = scmp.ne.s32.totalorder %s92, %s93
      %p105 = scmp.eq.s32.totalorder %s29, 3
      %p106 = por %p104, %p105
      %p108 = scmp.ne.s32.totalorder %s93, %s107
      %p109 = scmp.eq.s32.totalorder %s29, 0
      %p110 = por %p108, %p109
      %s112 = sadd.s32 %s111, 1
      %p115 = scmp.eq.s32.totalorder %s23, 3
      %p116 = scmp.ne.s32.totalorder %s111, %s113
      %p117 = scmp.eq.s32.totalorder %s23, 0
      %p118 = por %p116, %p117
      %p119 = scmp.ne.s32.totalorder %s111, %s113
      %p120 = scmp.eq.s32.totalorder %s28, 3
      %p121 = por %p119, %p120
      %p122 = scmp.ne.s32.totalorder %s113, %s114
      %p123 = scmp.eq.s32.totalorder %s28, 0
      %p124 = por %p122, %p123
      %p125 = scmp.ne.s32.totalorder %s113, %s114
      %p126 = scmp.eq.s32.totalorder %s29, 3
      %p127 = por %p125, %p126
      %p129 = scmp.ne.s32.totalorder %s114, %s128
      %p130 = scmp.eq.s32.totalorder %s29, 0
      %p131 = por %p129, %p130
      %s133 = sadd.s32 %s132, 1
      %p136 = scmp.eq.s32.totalorder %s23, 3
      %p137 = scmp.ne.s32.totalorder %s132, %s134
      %p138 = scmp.eq.s32.totalorder %s23, 0
      %p139 = por %p137, %p138
      %p140 = scmp.ne.s32.totalorder %s132, %s134
      %p141 = scmp.eq.s32.totalorder %s28, 3
      %p142 = por %p140, %p141
      %p143 = scmp.ne.s32.totalorder %s134, %s135
      %p144 = scmp.eq.s32.totalorder %s28, 0
      %p145 = por %p143, %p144
      %p146 = scmp.ne.s32.totalorder %s134, %s135
      %p147 = scmp.eq.s32.totalorder %s29, 3
      %p148 = por %p146, %p147
      %p150 = scmp.ne.s32.totalorder %s135, %s149
      %p151 = scmp.eq.s32.totalorder %s29, 0
      %p152 = por %p150, %p151
      %s153 = ssub.s32 %s31, %s38
      %p154 = scmp.eq.s32.totalorder %s153, 0
      %s156 = sadd.s32 %s155, 1
      %s157 = scalar_select %p154, %s155, %s156
      %p160 = pneg %p154
      %p161 = scmp.eq.s32.totalorder %s23, 3
      %p162 = por %p160, %p161
      %p163 = scmp.ne.s32.totalorder %s155, %s158
      %p164 = scmp.eq.s32.totalorder %s23, 0
      %p165 = por %p163, %p164
      %p166 = scmp.ne.s32.totalorder %s155, %s158
      %p167 = scmp.eq.s32.totalorder %s28, 3
      %p168 = por %p166, %p167
      %p169 = scmp.ne.s32.totalorder %s158, %s159
      %p170 = scmp.eq.s32.totalorder %s28, 0
      %p171 = por %p169, %p170
      %p172 = scmp.ne.s32.totalorder %s158, %s159
      %p173 = scmp.eq.s32.totalorder %s29, 3
      %p174 = por %p172, %p173
      %p176 = scmp.ne.s32.totalorder %s159, %s175
      %p177 = scmp.eq.s32.totalorder %s29, 0
      %p178 = por %p176, %p177
      %s179 = ssub.s32 %s31, %s38
      %p180 = scmp.eq.s32.totalorder %s179, 0
      %s182 = sadd.s32 %s181, 1
      %s183 = scalar_select %p180, %s181, %s182
      %p186 = pneg %p180
      %p187 = scmp.eq.s32.totalorder %s23, 3
      %p188 = por %p186, %p187
      %p189 = scmp.ne.s32.totalorder %s181, %s184
      %p190 = scmp.eq.s32.totalorder %s23, 0
      %p191 = por %p189, %p190
      %p192 = scmp.ne.s32.totalorder %s181, %s184
      %p193 = scmp.eq.s32.totalorder %s28, 3
      %p194 = por %p192, %p193
      %p195 = scmp.ne.s32.totalorder %s184, %s185
      %p196 = scmp.eq.s32.totalorder %s28, 0
      %p197 = por %p195, %p196
      %p198 = scmp.ne.s32.totalorder %s184, %s185
      %p199 = scmp.eq.s32.totalorder %s29, 3
      %p200 = por %p198, %p199
      %p202 = scmp.ne.s32.totalorder %s185, %s201
      %p203 = scmp.eq.s32.totalorder %s29, 0
      %p204 = por %p202, %p203
      %s205 = ssub.s32 %s31, %s38
      %p206 = scmp.eq.s32.totalorder %s205, 0
      %s208 = sadd.s32 %s207, 1
      %s209 = scalar_select %p206, %s207, %s208
      %p212 = pneg %p206
      %p213 = scmp.eq.s32.totalorder %s23, 3
      %p214 = por %p212, %p213
      %p215 = scmp.ne.s32.totalorder %s207, %s210
      %p216 = scmp.eq.s32.totalorder %s23, 0
      %p217 = por %p215, %p216
      %p218 = scmp.ne.s32.totalorder %s207, %s210
      %p219 = scmp.eq.s32.totalorder %s28, 3
      %p220 = por %p218, %p219
      %p221 = scmp.ne.s32.totalorder %s210, %s211
      %p222 = scmp.eq.s32.totalorder %s28, 0
      %p223 = por %p221, %p222
      %p224 = scmp.ne.s32.totalorder %s210, %s211
      %p225 = scmp.eq.s32.totalorder %s29, 3
      %p226 = por %p224, %p225
      %p228 = scmp.ne.s32.totalorder %s211, %s227
      %p229 = scmp.eq.s32.totalorder %s29, 0
      %p230 = por %p228, %p229
      %s231 = ssub.s32 %s31, %s38
      %p232 = scmp.eq.s32.totalorder %s231, 0
      %s234 = sadd.s32 %s233, 1
      %s235 = scalar_select %p232, %s233, %s234
      %p238 = pneg %p232
      %p239 = scmp.eq.s32.totalorder %s23, 3
      %p240 = por %p238, %p239
      %p241 = scmp.ne.s32.totalorder %s233, %s236
      %p242 = scmp.eq.s32.totalorder %s23, 0
      %p243 = por %p241, %p242
      %p244 = scmp.ne.s32.totalorder %s233, %s236
      %p245 = scmp.eq.s32.totalorder %s28, 3
      %p246 = por %p244, %p245
      %p247 = scmp.ne.s32.totalorder %s236, %s237
      %p248 = scmp.eq.s32.totalorder %s28, 0
      %p249 = por %p247, %p248
      %p250 = scmp.ne.s32.totalorder %s236, %s237
      %p251 = scmp.eq.s32.totalorder %s29, 3
      %p252 = por %p250, %p251
      %p254 = scmp.ne.s32.totalorder %s237, %s253
      %p255 = scmp.eq.s32.totalorder %s29, 0
      %p256 = por %p254, %p255
      %s257 = ssub.s32 %s31, %s38
      %p258 = scmp.eq.s32.totalorder %s257, 0
      %s260 = sadd.s32 %s259, 1
      %s261 = scalar_select %p258, %s259, %s260
      %p264 = pneg %p258
      %p265 = scmp.eq.s32.totalorder %s23, 3
      %p266 = por %p264, %p265
      %p267 = scmp.ne.s32.totalorder %s259, %s262
      %p268 = scmp.eq.s32.totalorder %s23, 0
      %p269 = por %p267, %p268
      %p270 = scmp.ne.s32.totalorder %s259, %s262
      %p271 = scmp.eq.s32.totalorder %s28, 3
      %p272 = por %p270, %p271
      %p273 = scmp.ne.s32.totalorder %s262, %s263
      %p274 = scmp.eq.s32.totalorder %s28, 0
      %p275 = por %p273, %p274
      %p276 = scmp.ne.s32.totalorder %s262, %s263
      %p277 = scmp.eq.s32.totalorder %s29, 3
      %p278 = por %p276, %p277
      %p280 = scmp.ne.s32.totalorder %s263, %s279
      %p281 = scmp.eq.s32.totalorder %s29, 0
      %p282 = por %p280, %p281
      %s283 = ssub.s32 %s31, %s38
      %p284 = scmp.eq.s32.totalorder %s283, 0
      %s286 = sadd.s32 %s285, 1
      %s287 = scalar_select %p284, %s285, %s286
      %p290 = pneg %p284
      %p291 = scmp.eq.s32.totalorder %s23, 3
      %p292 = por %p290, %p291
      %p293 = scmp.ne.s32.totalorder %s285, %s288
      %p294 = scmp.eq.s32.totalorder %s23, 0
      %p295 = por %p293, %p294
      %p296 = scmp.ne.s32.totalorder %s285, %s288
      %p297 = scmp.eq.s32.totalorder %s28, 3
      %p298 = por %p296, %p297
      %p299 = scmp.ne.s32.totalorder %s288, %s289
      %p300 = scmp.eq.s32.totalorder %s28, 0
      %p301 = por %p299, %p300
      %p302 = scmp.ne.s32.totalorder %s288, %s289
      %p303 = scmp.eq.s32.totalorder %s29, 3
      %p304 = por %p302, %p303
      %p306 = scmp.ne.s32.totalorder %s289, %s305
      %p307 = scmp.eq.s32.totalorder %s29, 0
      %p308 = por %p306, %p307
      %s309 = ssub.s32 %s31, %s38
      %p310 = scmp.eq.s32.totalorder %s309, 0
      %s312 = sadd.s32 %s311, 1
      %s313 = scalar_select %p310, %s311, %s312
      %p316 = pneg %p310
      %p317 = scmp.eq.s32.totalorder %s23, 3
      %p318 = por %p316, %p317
      %p319 = scmp.ne.s32.totalorder %s311, %s314
      %p320 = scmp.eq.s32.totalorder %s23, 0
      %p321 = por %p319, %p320
      %p322 = scmp.ne.s32.totalorder %s311, %s314
      %p323 = scmp.eq.s32.totalorder %s28, 3
      %p324 = por %p322, %p323
      %p325 = scmp.ne.s32.totalorder %s314, %s315
      %p326 = scmp.eq.s32.totalorder %s28, 0
      %p327 = por %p325, %p326
      %p328 = scmp.ne.s32.totalorder %s314, %s315
      %p329 = scmp.eq.s32.totalorder %s29, 3
      %p330 = por %p328, %p329
      %p332 = scmp.ne.s32.totalorder %s315, %s331
      %p333 = scmp.eq.s32.totalorder %s29, 0
      %p334 = por %p332, %p333
      %s335 = ssub.s32 %s31, %s38
      %p336 = scmp.eq.s32.totalorder %s335, 0
      %s338 = sadd.s32 %s337, 1
      %s339 = scalar_select %p336, %s337, %s338
      %p342 = pneg %p336
      %p343 = scmp.eq.s32.totalorder %s23, 3
      %p344 = por %p342, %p343
      %p345 = scmp.ne.s32.totalorder %s337, %s340
      %p346 = scmp.eq.s32.totalorder %s23, 0
      %p347 = por %p345, %p346
      %p348 = scmp.ne.s32.totalorder %s337, %s340
      %p349 = scmp.eq.s32.totalorder %s28, 3
      %p350 = por %p348, %p349
      %p351 = scmp.ne.s32.totalorder %s340, %s341
      %p352 = scmp.eq.s32.totalorder %s28, 0
      %p353 = por %p351, %p352
      %p354 = scmp.ne.s32.totalorder %s340, %s341
      %p355 = scmp.eq.s32.totalorder %s29, 3
      %p356 = por %p354, %p355
      %p358 = scmp.ne.s32.totalorder %s341, %s357
      %p359 = scmp.eq.s32.totalorder %s29, 0
      %p360 = por %p358, %p359
      %s361 = ssub.s32 %s31, %s38
      %p362 = scmp.eq.s32.totalorder %s361, 0
      %s364 = sadd.s32 %s363, 1
      %s365 = scalar_select %p362, %s363, %s364
      %p368 = pneg %p362
      %p369 = scmp.eq.s32.totalorder %s23, 3
      %p370 = por %p368, %p369
      %p371 = scmp.ne.s32.totalorder %s363, %s366
      %p372 = scmp.eq.s32.totalorder %s23, 0
      %p373 = por %p371, %p372
      %p374 = scmp.ne.s32.totalorder %s363, %s366
      %p375 = scmp.eq.s32.totalorder %s28, 3
      %p376 = por %p374, %p375
      %p377 = scmp.ne.s32.totalorder %s366, %s367
      %p378 = scmp.eq.s32.totalorder %s28, 0
      %p379 = por %p377, %p378
      %p380 = scmp.ne.s32.totalorder %s366, %s367
      %p381 = scmp.eq.s32.totalorder %s29, 3
      %p382 = por %p380, %p381
      %p384 = scmp.ne.s32.totalorder %s367, %s383
      %p385 = scmp.eq.s32.totalorder %s29, 0
      %p386 = por %p384, %p385
      %s387 = ssub.s32 %s30, %s42
      %p388 = scmp.eq.s32.totalorder %s387, 0
      %s390 = sadd.s32 %s389, 1
      %s391 = scalar_select %p388, %s389, %s390
      %p394 = pneg %p388
      %p395 = scmp.eq.s32.totalorder %s23, 3
      %p396 = por %p394, %p395
      %p397 = scmp.ne.s32.totalorder %s389, %s392
      %p398 = scmp.eq.s32.totalorder %s23, 0
      %p399 = por %p397, %p398
      %p400 = scmp.ne.s32.totalorder %s389, %s392
      %p401 = scmp.eq.s32.totalorder %s28, 3
      %p402 = por %p400, %p401
      %p403 = scmp.ne.s32.totalorder %s392, %s393
      %p404 = scmp.eq.s32.totalorder %s28, 0
      %p405 = por %p403, %p404
      %p406 = scmp.ne.s32.totalorder %s392, %s393
      %p407 = scmp.eq.s32.totalorder %s29, 3
      %p408 = por %p406, %p407
      %p410 = scmp.ne.s32.totalorder %s393, %s409
      %p411 = scmp.eq.s32.totalorder %s29, 0
      %p412 = por %p410, %p411
      %p413 = scmp.le.s32.totalorder 1, %s23
      %p414 = scmp.lt.s32.totalorder %s23, 5
      %p415 = pnand %p413, %p414
      %p416 = pneg %p415
      // Predicated region
      $region9: #{_lambda_.1} parent=5 // pred_check
        _
      $region10: #{_lambda_.1} parent=5 // pred_check_branch
        %418 = sbr.rel (%p415) target = $region12
      $region11: #{_lambda_.1} parent=5 // pred_region
        %s419 = ssub.s32 %s23, 1
        // Predicated region
        $region13: #{_lambda_.1} parent=11 // pred_check
          %p420 = pneg %p82
        $region14: #{_lambda_.1} parent=11 // pred_check_branch
          %422 = sbr.rel (%p420) target = $region16
        $region15: #{_lambda_.1} parent=11 // pred_region
          _
        $region16: #{_lambda_.1} parent=11 // pred_fallthru
          _
        // Predicated region
        $region17: #{_lambda_.1} parent=11 // pred_check
          %p423 = pneg %p103
        $region18: #{_lambda_.1} parent=11 // pred_check_branch
          %425 = sbr.rel (%p423) target = $region20
        $region19: #{_lambda_.1} parent=11 // pred_region
          _
        $region20: #{_lambda_.1} parent=11 // pred_fallthru
          _
        // Predicated region
        $region21: #{_lambda_.1} parent=11 // pred_check
          %p426 = pneg %p124
        $region22: #{_lambda_.1} parent=11 // pred_check_branch
          %428 = sbr.rel (%p426) target = $region24
        $region23: #{_lambda_.1} parent=11 // pred_region
          _
        $region24: #{_lambda_.1} parent=11 // pred_fallthru
          _
        // Predicated region
        $region25: #{_lambda_.1} parent=11 // pred_check
          %p429 = pneg %p145
        $region26: #{_lambda_.1} parent=11 // pred_check_branch
          %431 = sbr.rel (%p429) target = $region28
        $region27: #{_lambda_.1} parent=11 // pred_region
          _
        $region28: #{_lambda_.1} parent=11 // pred_fallthru
          _
      $region12: #{_lambda_.1} parent=5 // pred_fallthru
        _
      %p432 = scmp.lt.s32.totalorder %s23, 4
      // Predicated region
      $region29: #{_lambda_.1} parent=5 // pred_check
        %p433 = pneg %p432
      $region30: #{_lambda_.1} parent=5 // pred_check_branch
        %435 = sbr.rel (%p433) target = $region32
      $region31: #{_lambda_.1} parent=5 // pred_region
        // Predicated region
        $region33: #{_lambda_.1} parent=31 // pred_check
          %p436 = pneg %p55
        $region34: #{_lambda_.1} parent=31 // pred_check_branch
          %438 = sbr.rel (%p436) target = $region36
        $region35: #{_lambda_.1} parent=31 // pred_region
          %p439 = scmp.lt.s32.totalorder %s30, 1
          %s440 = scalar_select %p439, %s30, 1
          %s441 = smul.addr %s440, 6
          %s442 = smul.addr %s441, 8
          %s443 = scalar_lea.vmem %s0, %s442
        $region36: #{_lambda_.1} parent=31 // pred_fallthru
          _
        // Predicated region
        $region37: #{_lambda_.1} parent=31 // pred_check
          %p444 = pneg %p165
        $region38: #{_lambda_.1} parent=31 // pred_check_branch
          %446 = sbr.rel (%p444) target = $region40
        $region39: #{_lambda_.1} parent=31 // pred_region
          %p447 = scmp.lt.s32.totalorder %s31, 1
          %s448 = scalar_select %p447, %s31, 1
          %s449 = scalar_lea.vmem %s5, %s448
        $region40: #{_lambda_.1} parent=31 // pred_fallthru
          _
        // Predicated region
        $region41: #{_lambda_.1} parent=31 // pred_check
          %p450 = pneg %p191
        $region42: #{_lambda_.1} parent=31 // pred_check_branch
          %452 = sbr.rel (%p450) target = $region44
        $region43: #{_lambda_.1} parent=31 // pred_region
          %p453 = scmp.lt.s32.totalorder %s31, 1
          %s454 = scalar_select %p453, %s31, 1
          %s455 = smul.addr %s454, 4
          %s456 = smul.addr %s455, 8
          %s457 = scalar_lea.vmem %s6, %s456
        $region44: #{_lambda_.1} parent=31 // pred_fallthru
          _
        // Predicated region
        $region45: #{_lambda_.1} parent=31 // pred_check
          %p458 = pneg %p217
        $region46: #{_lambda_.1} parent=31 // pred_check_branch
          %460 = sbr.rel (%p458) target = $region48
        $region47: #{_lambda_.1} parent=31 // pred_region
          %p461 = scmp.lt.s32.totalorder %s31, 1
          %s462 = scalar_select %p461, %s31, 1
          %s463 = smul.addr %s462, 4
          %s464 = scalar_lea.vmem %s7, %s463
        $region48: #{_lambda_.1} parent=31 // pred_fallthru
          _
        // Predicated region
        $region49: #{_lambda_.1} parent=31 // pred_check
          %p465 = pneg %p243
        $region50: #{_lambda_.1} parent=31 // pred_check_branch
          %467 = sbr.rel (%p465) target = $region52
        $region51: #{_lambda_.1} parent=31 // pred_region
          %p468 = scmp.lt.s32.totalorder %s31, 1
          %s469 = scalar_select %p468, %s31, 1
          %s470 = scalar_lea.vmem %s8, %s469
        $region52: #{_lambda_.1} parent=31 // pred_fallthru
          _
        // Predicated region
        $region53: #{_lambda_.1} parent=31 // pred_check
          %p471 = pneg %p269
        $region54: #{_lambda_.1} parent=31 // pred_check_branch
          %473 = sbr.rel (%p471) target = $region56
        $region55: #{_lambda_.1} parent=31 // pred_region
          %p474 = scmp.lt.s32.totalorder %s31, 1
          %s475 = scalar_select %p474, %s31, 1
          %s476 = smul.addr %s475, 32
          %s477 = smul.addr %s476, 8
          %s478 = scalar_lea.vmem %s9, %s477
        $region56: #{_lambda_.1} parent=31 // pred_fallthru
          _
        // Predicated region
        $region57: #{_lambda_.1} parent=31 // pred_check
          %p479 = pneg %p295
        $region58: #{_lambda_.1} parent=31 // pred_check_branch
          %481 = sbr.rel (%p479) target = $region60
        $region59: #{_lambda_.1} parent=31 // pred_region
          %p482 = scmp.lt.s32.totalorder %s31, 1
          %s483 = scalar_select %p482, %s31, 1
          %s484 = smul.addr %s483, 2
          %s485 = scalar_lea.vmem %s10, %s484
        $region60: #{_lambda_.1} parent=31 // pred_fallthru
          _
        // Predicated region
        $region61: #{_lambda_.1} parent=31 // pred_check
          %p486 = pneg %p321
        $region62: #{_lambda_.1} parent=31 // pred_check_branch
          %488 = sbr.rel (%p486) target = $region64
        $region63: #{_lambda_.1} parent=31 // pred_region
          %p489 = scmp.lt.s32.totalorder %s31, 1
          %s490 = scalar_select %p489, %s31, 1
          %s491 = smul.addr %s490, 8
          %s492 = scalar_lea.vmem %s11, %s491
        $region64: #{_lambda_.1} parent=31 // pred_fallthru
          _
        // Predicated region
        $region65: #{_lambda_.1} parent=31 // pred_check
          %p493 = pneg %p347
        $region66: #{_lambda_.1} parent=31 // pred_check_branch
          %495 = sbr.rel (%p493) target = $region68
        $region67: #{_lambda_.1} parent=31 // pred_region
          %p496 = scmp.lt.s32.totalorder %s31, 1
          %s497 = scalar_select %p496, %s31, 1
          %s498 = scalar_lea.vmem %s12, %s497
        $region68: #{_lambda_.1} parent=31 // pred_fallthru
          _
        // Predicated region
        $region69: #{_lambda_.1} parent=31 // pred_check
          %p499 = pneg %p373
        $region70: #{_lambda_.1} parent=31 // pred_check_branch
          %501 = sbr.rel (%p499) target = $region72
        $region71: #{_lambda_.1} parent=31 // pred_region
          %p502 = scmp.lt.s32.totalorder %s31, 1
          %s503 = scalar_select %p502, %s31, 1
          %s504 = smul.addr %s503, 8
          %s505 = smul.addr %s504, 8
          %s506 = scalar_lea.vmem %s13, %s505
        $region72: #{_lambda_.1} parent=31 // pred_fallthru
          _
      $region32: #{_lambda_.1} parent=5 // pred_fallthru
        _
      %p507 = scmp.le.s32.totalorder 1, %s23
      %p508 = scmp.lt.s32.totalorder %s23, 5
      %p509 = pnand %p507, %p508
      %p510 = pneg %p509
      // Predicated region
      $region73: #{_lambda_.1} parent=5 // pred_check
        _
      $region74: #{_lambda_.1} parent=5 // pred_check_branch
        %512 = sbr.rel (%p509) target = $region76
      $region75: #{_lambda_.1} parent=5 // pred_region
        %s513 = ssub.s32 %s23, 1
        %p514 = scmp.lt.s32.totalorder %s32, 1
        %s515 = scalar_select %p514, %s32, 1
        %s516 = smul.addr %s515, 6
        %s517 = smul.addr %s516, 8
        %s518 = scalar_lea.vmem %s0, %s517
        %p519 = pneg %p61
        %p520 = pneg %p58
        %p521 = pneg %p82
        %p522 = pneg %p79
        %p523 = pneg %p103
        %p524 = pneg %p100
        %p525 = pneg %p124
        %p526 = pneg %p121
        %p527 = pneg %p145
        %p528 = pneg %p142
        %p529 = scmp.lt.s32.totalorder %s33, 1
        %s530 = scalar_select %p529, %s33, 1
        %s531 = scalar_lea.vmem %s5, %s530
        %p532 = pneg %p171
        %p533 = pneg %p168
        %p534 = scmp.lt.s32.totalorder %s33, 1
        %s535 = scalar_select %p534, %s33, 1
        %s536 = smul.addr %s535, 4
        %s537 = smul.addr %s536, 8
        %s538 = scalar_lea.vmem %s6, %s537
        %p539 = pneg %p197
        %p540 = pneg %p194
        %p541 = scmp.lt.s32.totalorder %s33, 1
        %s542 = scalar_select %p541, %s33, 1
        %s543 = smul.addr %s542, 4
        %s544 = scalar_lea.vmem %s7, %s543
        %p545 = pneg %p223
        %p546 = pneg %p220
        %p547 = scmp.lt.s32.totalorder %s33, 1
        %s548 = scalar_select %p547, %s33, 1
        %s549 = scalar_lea.vmem %s8, %s548
        %p550 = pneg %p249
        %p551 = pneg %p246
        %p552 = scmp.lt.s32.totalorder %s33, 1
        %s553 = scalar_select %p552, %s33, 1
        %s554 = smul.addr %s553, 32
        %s555 = smul.addr %s554, 8
        %s556 = scalar_lea.vmem %s9, %s555
        %p557 = pneg %p275
        %p558 = pneg %p272
        %p559 = scmp.lt.s32.totalorder %s33, 1
        %s560 = scalar_select %p559, %s33, 1
        %s561 = smul.addr %s560, 2
        %s562 = scalar_lea.vmem %s10, %s561
        %p563 = pneg %p301
        %p564 = pneg %p298
        %p565 = scmp.lt.s32.totalorder %s33, 1
        %s566 = scalar_select %p565, %s33, 1
        %s567 = smul.addr %s566, 8
        %s568 = scalar_lea.vmem %s11, %s567
        %p569 = pneg %p327
        %p570 = pneg %p324
        %p571 = scmp.lt.s32.totalorder %s33, 1
        %s572 = scalar_select %p571, %s33, 1
        %s573 = scalar_lea.vmem %s12, %s572
        %p574 = pneg %p353
        %p575 = pneg %p350
        %p576 = scmp.lt.s32.totalorder %s33, 1
        %s577 = scalar_select %p576, %s33, 1
        %s578 = smul.addr %s577, 8
        %s579 = smul.addr %s578, 8
        %s580 = scalar_lea.vmem %s13, %s579
        %p581 = pneg %p379
        %p582 = pneg %p376
        %p583 = pneg %p405
        %p584 = pneg %p402
        %s585 = sand.u32 %s392, 1
        %s586 = scalar_lea.sflag [#allocation10], %s585
        %s587 = sand.u32 %s392, 1
        %s588 = smul.addr %s587, 24
        %s589 = scalar_lea.vmem [#allocation9], %s588
        %p590 = scmp.lt.s32.totalorder %s32, 1
        %s591 = scalar_select %p590, %s32, 1
        %s592 = smul.addr %s591, 6
        %s593 = smul.addr %s592, 8
        %s594 = scalar_lea.vmem %s0, %s593
        %p595 = scmp.lt.s32.totalorder %s33, 1
        %s596 = scalar_select %p595, %s33, 1
        %s597 = scalar_lea.vmem %s5, %s596
        %p598 = scmp.lt.s32.totalorder %s33, 1
        %s599 = scalar_select %p598, %s33, 1
        %s600 = smul.addr %s599, 4
        %s601 = smul.addr %s600, 8
        %s602 = scalar_lea.vmem %s6, %s601
        %p603 = scmp.lt.s32.totalorder %s33, 1
        %s604 = scalar_select %p603, %s33, 1
        %s605 = smul.addr %s604, 4
        %s606 = scalar_lea.vmem %s7, %s605
        %p607 = scmp.lt.s32.totalorder %s33, 1
        %s608 = scalar_select %p607, %s33, 1
        %s609 = scalar_lea.vmem %s8, %s608
        %p610 = scmp.lt.s32.totalorder %s33, 1
        %s611 = scalar_select %p610, %s33, 1
        %s612 = smul.addr %s611, 32
        %s613 = smul.addr %s612, 8
        %s614 = scalar_lea.vmem %s9, %s613
        %p615 = scmp.lt.s32.totalorder %s33, 1
        %s616 = scalar_select %p615, %s33, 1
        %s617 = smul.addr %s616, 2
        %s618 = scalar_lea.vmem %s10, %s617
        %p619 = scmp.lt.s32.totalorder %s33, 1
        %s620 = scalar_select %p619, %s33, 1
        %s621 = smul.addr %s620, 8
        %s622 = scalar_lea.vmem %s11, %s621
        %p623 = scmp.lt.s32.totalorder %s33, 1
        %s624 = scalar_select %p623, %s33, 1
        %s625 = scalar_lea.vmem %s12, %s624
        %p626 = scmp.lt.s32.totalorder %s33, 1
        %s627 = scalar_select %p626, %s33, 1
        %s628 = smul.addr %s627, 8
        %s629 = smul.addr %s628, 8
        %s630 = scalar_lea.vmem %s13, %s629
        %p631 = scmp.eq.s32.totalorder %s33, 0
        // Predicated region
        $region77: #{_lambda_.1} parent=75 // pred_check
          %p632 = pneg %p631
        $region78: #{_lambda_.1} parent=75 // pred_check_branch
          %634 = sbr.rel (%p632) target = $region80
        $region79: #{_lambda_.1} parent=75 // pred_region
          %v635 = vld [vmem:[%s594] sm:$0xff]
          %v636 = vld [vmem:[%s594 + $0x8] sm:$0xff]
          %v637 = vld [vmem:[%s594 + $0x10] sm:$0xff]
          %v638 = vld [vmem:[%s594 + $0x18] sm:$0xff]
          %v639 = vld [vmem:[%s594 + $0x20] sm:$0xff]
          %v640 = vld [vmem:[%s594 + $0x28] sm:$0xff]
          %v641 = vld [vmem:[%s2] sm:$0xff]
          %v642 = vld [vmem:[%s2 + $0x8] sm:$0xff]
          %v643 = vld [vmem:[%s2 + $0x10] sm:$0xff]
          %v644 = vld [vmem:[%s2 + $0x18] sm:$0xff]
          %v645 = vld [vmem:[%s2 + $0x20] sm:$0xff]
          %v646 = vld [vmem:[%s2 + $0x28] sm:$0xff]
          %v647 = vld [vmem:[%s2 + $0x30] sm:$0xff]
          %v648 = vld [vmem:[%s2 + $0x38] sm:$0xff]
          %v649 = vld [vmem:[%s2 + $0x40] sm:$0xff]
          %v650 = vld [vmem:[%s2 + $0x48] sm:$0xff]
          %v651 = vld [vmem:[%s2 + $0x50] sm:$0xff]
          %v652 = vld [vmem:[%s2 + $0x58] sm:$0xff]
          %v653 = vld [vmem:[%s2 + $0x60] sm:$0xff]
          %v654 = vld [vmem:[%s2 + $0x68] sm:$0xff]
          %v655 = vld [vmem:[%s2 + $0x70] sm:$0xff]
          %v656 = vld [vmem:[%s2 + $0x78] sm:$0xff]
          %v657 = vld [vmem:[%s2 + $0x80] sm:$0xff]
          %v658 = vld [vmem:[%s2 + $0x88] sm:$0xff]
          %v659 = vld [vmem:[%s2 + $0x90] sm:$0xff]
          %v660 = vld [vmem:[%s2 + $0x98] sm:$0xff]
          %v661 = vld [vmem:[%s2 + $0xa0] sm:$0xff]
          %v662 = vld [vmem:[%s2 + $0xa8] sm:$0xff]
          %v663 = vld [vmem:[%s2 + $0xb0] sm:$0xff]
          %v664 = vld [vmem:[%s2 + $0xb8] sm:$0xff]
          %v665 = vld [vmem:[%s3] sm:$0x1]
          %v667 = vlaneseq
          %v668 = vshrl.u32 %v667, 7
          %v669 = vsub.s32 0, %v668
          %v670 = vrot.slane %v665, %v669
          %vm672 = vcmask 523264
          %v674 = vsel %vm672, %v636, 0
          %v677 = vsel %vm672, %v638, 0
          %v680 = vsel %vm672, %v640, 0
          %682 = vmatprep.subr.mxu0 0.0
          %683 = vmatpush1.msra.mxu0 %v656
          %684 = vmatprep.subr.mxu0 0.0
          %685 = vmatpush1.msra.mxu0 %v655
          %686 = vmatprep.subr.mxu0 0.0
          %687 = vmatpush1.msra.mxu0 %v654
          %688 = vmatprep.subr.mxu0 0.0
          %689 = vmatpush1.msra.mxu0 %v653
          %690 = vmatprep.subr.mxu0 0.0
          %691 = vmatpush1.msra.mxu0 %v652
          %692 = vmatprep.subr.mxu0 0.0
          %693 = vmatpush1.msra.mxu0 %v651
          %694 = vmatprep.subr.mxu0 0.0
          %695 = vmatpush1.msra.mxu0 %v650
          %696 = vmatprep.subr.mxu0 0.0
          %697 = vmatpush1.msra.mxu0 %v649
          %698 = vmatprep.subr.mxu0 0.0
          %699 = vmatpush1.msra.mxu0 %v648
          %700 = vmatprep.subr.mxu0 0.0
          %701 = vmatpush1.msra.mxu0 %v647
          %702 = vmatprep.subr.mxu0 0.0
          %703 = vmatpush1.msra.mxu0 %v646
          %704 = vmatprep.subr.mxu0 0.0
          %705 = vmatpush1.msra.mxu0 %v645
          %706 = vmatprep.subr.mxu0 0.0
          %707 = vmatpush1.msra.mxu0 %v644
          %708 = vmatprep.subr.mxu0 0.0
          %709 = vmatpush1.msra.mxu0 %v643
          %710 = vmatprep.subr.mxu0 0.0
          %711 = vmatpush1.msra.mxu0 %v642
          %712 = vmatprep.subr.mxu0 0.0
          %713 = vmatpush1.msra.mxu0 %v641
          %714 = vmatprep.subr.mxu0 0.0
          %715 = vmatpush2.msra.mxu0 0.0
          %716 = vmatprep.subr.mxu0 0.0
          %717 = vmatpush2.msra.mxu0 0.0
          %718 = vmatprep.subr.mxu0 0.0
          %719 = vmatpush2.msra.mxu0 0.0
          %720 = vmatprep.subr.mxu0 0.0
          %721 = vmatpush2.msra.mxu0 0.0
          %722 = vmatprep.subr.mxu0 0.0
          %723 = vmatpush2.msra.mxu0 0.0
          %724 = vmatprep.subr.mxu0 0.0
          %725 = vmatpush2.msra.mxu0 0.0
          %726 = vmatprep.subr.mxu0 0.0
          %727 = vmatpush2.msra.mxu0 0.0
          %728 = vmatprep.subr.mxu0 0.0
          %729 = vmatpush2.msra.mxu0 0.0
          %730 = vmatprep.subr.mxu0 0.0
          %731 = vmatpush2.msra.mxu0 %v664
          %732 = vmatprep.subr.mxu0 0.0
          %733 = vmatpush2.msra.mxu0 %v663
          %734 = vmatprep.subr.mxu0 0.0
          %735 = vmatpush2.msra.mxu0 %v662
          %736 = vmatprep.subr.mxu0 0.0
          %737 = vmatpush2.msra.mxu0 %v661
          %738 = vmatprep.subr.mxu0 0.0
          %739 = vmatpush2.msra.mxu0 %v660
          %740 = vmatprep.subr.mxu0 0.0
          %741 = vmatpush2.msra.mxu0 %v659
          %742 = vmatprep.subr.mxu0 0.0
          %743 = vmatpush2.msra.mxu0 %v658
          %744 = vmatprep.subr.mxu0 0.0
          %745 = vmatpush2.msra.mxu0 %v657
          %746 = vmatprep.mubr.f32.mxu0 %v674
          %747 = vmatmul.mubr.f32.gmra.mxu0 %v635
          %v748 = vpop.f32.mrf.mxu0
          %v749 = vadd.f32 %v670, %v748
          %v750 = vpop.f32.mrf.mxu0
          %751 = vmatprep.mubr.f32.mxu0 %v677
          %752 = vmatmul.mubr.f32.gmra.mxu0 %v637
          %v753 = vpop.f32.mrf.mxu0
          %v754 = vadd.f32 %v670, %v753
          %v755 = vpop.f32.mrf.mxu0
          %756 = vmatprep.mubr.f32.mxu0 %v680
          %757 = vmatmul.mubr.f32.gmra.mxu0 %v639
          %v758 = vpop.f32.mrf.mxu0
          %v759 = vadd.f32 %v670, %v758
          %v760 = vpop.f32.mrf.mxu0
          %761 = vdwg.mxu0
          %v762 = vld [vmem:[%s1] sm:$0xff]
          %v763 = vld [vmem:[%s1 + $0x8] sm:$0xff]
          %v764 = vld [vmem:[%s1 + $0x10] sm:$0xff]
          %v765 = vadd.f32 %v749, %v762
          %v766 = vadd.f32 %v754, %v763
          %v767 = vadd.f32 %v759, %v764
          %vm768 = vcmask 261120
          %769 = vst.msk [vmem:[#allocation7] sm:$0xff] %vm768, %v765
          %770 = vst.msk [vmem:[#allocation7 + $0x8] sm:$0xff] %vm768, %v766
          %771 = vst.msk [vmem:[#allocation7 + $0x10] sm:$0xff] %vm768, %v767
          %772 = vst.msk [vmem:[#allocation8] sm:$0xff] %vm768, 0.0
          %773 = vst.msk [vmem:[#allocation8 + $0x8] sm:$0xff] %vm768, 0.0
          %774 = vst.msk [vmem:[#allocation8 + $0x10] sm:$0xff] %vm768, 0.0
        $region80: #{_lambda_.1} parent=75 // pred_fallthru
          _
        %v775 = vld [vmem:[#allocation7] sm:$0xff]
        %v776 = vld [vmem:[#allocation7 + $0x8] sm:$0xff]
        %v777 = vld [vmem:[#allocation7 + $0x10] sm:$0xff]
        %v778 = vld [vmem:[#allocation8] sm:$0xff]
        %v779 = vld [vmem:[#allocation8 + $0x8] sm:$0xff]
        %v780 = vld [vmem:[#allocation8 + $0x10] sm:$0xff]
        %v781 = vadd.f32 %v775, %v778
        %v782 = vadd.f32 %v776, %v779
        %v783 = vadd.f32 %v777, %v780
        %v784 = vmul.f32 %v781, %v781
        %v785 = vmul.f32 %v782, %v782
        %v786 = vmul.f32 %v783, %v783
        %vm787 = vcmask 261120
        %v788 = vsel %vm787, %v784, 0.0
        %789 = vadd.xlane.f32.xlu0 %v788
        %v790 = vpop.xlane.xlu0 %789
        %v791 = vsel %vm787, %v785, 0.0
        %792 = vadd.xlane.f32.xlu0 %v791
        %v793 = vpop.xlane.xlu0 %792
        %v794 = vsel %vm787, %v786, 0.0
        %795 = vadd.xlane.f32.xlu0 %v794
        %v796 = vpop.xlane.xlu0 %795
        %v797 = vrcp.pop 32.0
        %v798 = vmul.f32 %v790, %v797
        %v799 = vmul.f32 %v793, %v797
        %v800 = vmul.f32 %v796, %v797
        %v801 = vadd.f32 %v798, 1e-05
        %v802 = vadd.f32 %v799, 1e-05
        %v803 = vadd.f32 %v800, 1e-05
        %v804 = vrsqrt.pop %v801
        %v805 = vrsqrt.pop %v802
        %v806 = vrsqrt.pop %v803
        %v807 = vmul.f32 %v781, %v804
        %v808 = vmul.f32 %v782, %v805
        %v809 = vmul.f32 %v783, %v806
        %v810 = vld [vmem:[%s597] sm:$0x1]
        %v812 = vlaneseq
        %v813 = vshrl.u32 %v812, 7
        %v814 = vsub.s32 0, %v813
        %v815 = vrot.slane %v810, %v814
        %v817 = vmul.f32 %v807, %v815
        %v818 = vmul.f32 %v808, %v815
        %v819 = vmul.f32 %v809, %v815
        %v820 = vld [vmem:[%s602] sm:$0xff]
        %v821 = vld [vmem:[%s602 + $0x8] sm:$0xff]
        %v822 = vld [vmem:[%s602 + $0x10] sm:$0xff]
        %v823 = vld [vmem:[%s602 + $0x18] sm:$0xff]
        %v825 = vsel %vm787, %v817, 0
        %v828 = vsel %vm787, %v818, 0
        %v831 = vsel %vm787, %v819, 0
        %833 = vmatprep.subr.mxu0 0.0
        %834 = vmatpush1.msra.mxu0 0.0
        %835 = vmatprep.subr.mxu0 0.0
        %836 = vmatpush1.msra.mxu0 0.0
        %837 = vmatprep.subr.mxu0 0.0
        %838 = vmatpush1.msra.mxu0 0.0
        %839 = vmatprep.subr.mxu0 0.0
        %840 = vmatpush1.msra.mxu0 0.0
        %841 = vmatprep.subr.mxu0 0.0
        %842 = vmatpush1.msra.mxu0 0.0
        %843 = vmatprep.subr.mxu0 0.0
        %844 = vmatpush1.msra.mxu0 0.0
        %845 = vmatprep.subr.mxu0 0.0
        %846 = vmatpush1.msra.mxu0 0.0
        %847 = vmatprep.subr.mxu0 0.0
        %848 = vmatpush1.msra.mxu0 0.0
        %849 = vmatprep.subr.mxu0 0.0
        %850 = vmatpush1.msra.mxu0 0.0
        %851 = vmatprep.subr.mxu0 0.0
        %852 = vmatpush1.msra.mxu0 0.0
        %853 = vmatprep.subr.mxu0 0.0
        %854 = vmatpush1.msra.mxu0 0.0
        %855 = vmatprep.subr.mxu0 0.0
        %856 = vmatpush1.msra.mxu0 0.0
        %857 = vmatprep.subr.mxu0 0.0
        %858 = vmatpush1.msra.mxu0 %v823
        %859 = vmatprep.subr.mxu0 0.0
        %860 = vmatpush1.msra.mxu0 %v822
        %861 = vmatprep.subr.mxu0 0.0
        %862 = vmatpush1.msra.mxu0 %v821
        %863 = vmatprep.subr.mxu0 0.0
        %864 = vmatpush1.msra.mxu0 %v820
        %865 = vmatprep.subr.mxu0 0.0
        %866 = vmatpush2.msra.mxu0 0.0
        %867 = vmatprep.subr.mxu0 0.0
        %868 = vmatpush2.msra.mxu0 0.0
        %869 = vmatprep.subr.mxu0 0.0
        %870 = vmatpush2.msra.mxu0 0.0
        %871 = vmatprep.subr.mxu0 0.0
        %872 = vmatpush2.msra.mxu0 0.0
        %873 = vmatprep.subr.mxu0 0.0
        %874 = vmatpush2.msra.mxu0 0.0
        %875 = vmatprep.subr.mxu0 0.0
        %876 = vmatpush2.msra.mxu0 0.0
        %877 = vmatprep.subr.mxu0 0.0
        %878 = vmatpush2.msra.mxu0 0.0
        %879 = vmatprep.subr.mxu0 0.0
        %880 = vmatpush2.msra.mxu0 0.0
        %881 = vmatprep.subr.mxu0 0.0
        %882 = vmatpush2.msra.mxu0 0.0
        %883 = vmatprep.subr.mxu0 0.0
        %884 = vmatpush2.msra.mxu0 0.0
        %885 = vmatprep.subr.mxu0 0.0
        %886 = vmatpush2.msra.mxu0 0.0
        %887 = vmatprep.subr.mxu0 0.0
        %888 = vmatpush2.msra.mxu0 0.0
        %889 = vmatprep.subr.mxu0 0.0
        %890 = vmatpush2.msra.mxu0 0.0
        %891 = vmatprep.subr.mxu0 0.0
        %892 = vmatpush2.msra.mxu0 0.0
        %893 = vmatprep.subr.mxu0 0.0
        %894 = vmatpush2.msra.mxu0 0.0
        %895 = vmatprep.subr.mxu0 0.0
        %896 = vmatpush2.msra.mxu0 0.0
        %897 = vmatprep.mubr.f32.mxu0 0.0
        %898 = vmatmul.mubr.f32.gmra.mxu0 %v825
        %v899 = vpop.f32.mrf.mxu0
        %v900 = vadd.f32 0.0, %v899
        %v901 = vpop.f32.mrf.mxu0
        %902 = vmatprep.mubr.f32.mxu0 0.0
        %903 = vmatmul.mubr.f32.gmra.mxu0 %v828
        %v904 = vpop.f32.mrf.mxu0
        %v905 = vadd.f32 0.0, %v904
        %v906 = vpop.f32.mrf.mxu0
        %907 = vmatprep.mubr.f32.mxu0 0.0
        %908 = vmatmul.mubr.f32.gmra.mxu0 %v831
        %v909 = vpop.f32.mrf.mxu0
        %v910 = vadd.f32 0.0, %v909
        %v911 = vpop.f32.mrf.mxu0
        %912 = vdwg.mxu0
        %913 = vst [vmem:[#allocation2] sm:$0x7] 0.0
        %914 = vst [vmem:[#allocation2 + $0x18] sm:$0x7] 0.0
        %vm915 = vcmask 523264
        %916 = vst.msk [vmem:[#allocation2 + $0x3] sm:$0xff] %vm915, %v900
        %917 = vst.msk [vmem:[#allocation2 + $0xb] sm:$0xff] %vm915, %v905
        %918 = vst.msk [vmem:[#allocation2 + $0x13] sm:$0xff] %vm915, %v910
        %922 = vrot.lane.b32.xlu0 %v900, 64
        %v923 = vpop.permute.xlu0 %922
        %924 = vrot.lane.b32.xlu0 %v905, 64
        %v925 = vpop.permute.xlu0 %924
        %926 = vrot.lane.b32.xlu0 %v910, 64
        %v927 = vpop.permute.xlu0 %926
        %vm931 = vcmask 1048064
        %932 = vst.msk [vmem:[#allocation2] sm:$0xff] %vm931, %v923
        %933 = vst.msk [vmem:[#allocation2 + $0x8] sm:$0xff] %vm931, %v925
        %934 = vst.msk [vmem:[#allocation2 + $0x10] sm:$0xff] %vm931, %v927
        %v935 = vld [vmem:[#allocation2] sm:$0xff]
        %v936 = vld [vmem:[#allocation2 + $0x8] sm:$0xff]
        %v937 = vld [vmem:[#allocation2 + $0x10] sm:$0xff]
        %v938 = vld [vmem:[%s606] sm:$0x1]
        %v939 = vlaneseq
        %v940 = vshrl.u32 %v939, 7
        %v941 = vsub.s32 0, %v940
        %v942 = vrot.slane %v938, %v941
        %v943 = vmul.f32 %v935, %v942
        %v944 = vmul.f32 %v936, %v942
        %v945 = vmul.f32 %v937, %v942
        %v946 = vadd.f32 %v943, 0.0
        %v947 = vadd.f32 %v944, 0.0
        %v948 = vadd.f32 %v945, 0.0
        %v949 = vld [vmem:[#allocation2 + $0x1] sm:$0xff]
        %v950 = vld [vmem:[#allocation2 + $0x9] sm:$0xff]
        %v951 = vld [vmem:[#allocation2 + $0x11] sm:$0xff]
        %v952 = vld [vmem:[%s606 + $0x1] sm:$0x1]
        %v953 = vlaneseq
        %v954 = vshrl.u32 %v953, 7
        %v955 = vsub.s32 0, %v954
        %v956 = vrot.slane %v952, %v955
        %v957 = vmul.f32 %v949, %v956
        %v958 = vmul.f32 %v950, %v956
        %v959 = vmul.f32 %v951, %v956
        %v960 = vadd.f32 %v946, %v957
        %v961 = vadd.f32 %v947, %v958
        %v962 = vadd.f32 %v948, %v959
        %v963 = vld [vmem:[#allocation2 + $0x2] sm:$0xff]
        %v964 = vld [vmem:[#allocation2 + $0xa] sm:$0xff]
        %v965 = vld [vmem:[#allocation2 + $0x12] sm:$0xff]
        %v966 = vld [vmem:[%s606 + $0x2] sm:$0x1]
        %v967 = vlaneseq
        %v968 = vshrl.u32 %v967, 7
        %v969 = vsub.s32 0, %v968
        %v970 = vrot.slane %v966, %v969
        %v971 = vmul.f32 %v963, %v970
        %v972 = vmul.f32 %v964, %v970
        %v973 = vmul.f32 %v965, %v970
        %v974 = vadd.f32 %v960, %v971
        %v975 = vadd.f32 %v961, %v972
        %v976 = vadd.f32 %v962, %v973
        %v977 = vld [vmem:[#allocation2 + $0x3] sm:$0xff]
        %v978 = vld [vmem:[#allocation2 + $0xb] sm:$0xff]
        %v979 = vld [vmem:[#allocation2 + $0x13] sm:$0xff]
        %v980 = vld [vmem:[%s606 + $0x3] sm:$0x1]
        %v981 = vlaneseq
        %v982 = vshrl.u32 %v981, 7
        %v983 = vsub.s32 0, %v982
        %v984 = vrot.slane %v980, %v983
        %v985 = vmul.f32 %v977, %v984
        %v986 = vmul.f32 %v978, %v984
        %v987 = vmul.f32 %v979, %v984
        %v988 = vadd.f32 %v974, %v985
        %v989 = vadd.f32 %v975, %v986
        %v990 = vadd.f32 %v976, %v987
        %v991 = vld [vmem:[%s609] sm:$0x1]
        %v993 = vlaneseq
        %v994 = vshrl.u32 %v993, 7
        %v995 = vsub.s32 0, %v994
        %v996 = vrot.slane %v991, %v995
        %v998 = vadd.f32 %v988, %v996
        %v999 = vadd.f32 %v989, %v996
        %v1000 = vadd.f32 %v990, %v996
        %v1001 = vsub.f32 0.0, %v998
        %v1002 = vsub.f32 0.0, %v999
        %v1003 = vsub.f32 0.0, %v1000
        %v1004 = vmul.f32 %v1001, 1.442695
        %v1005 = vpow.pop %v1004
        %v1006 = vmul.f32 %v1002, 1.442695
        %v1007 = vpow.pop %v1006
        %v1008 = vmul.f32 %v1003, 1.442695
        %v1009 = vpow.pop %v1008
        %v1010 = vadd.f32 %v1005, 1.0
        %v1011 = vadd.f32 %v1007, 1.0
        %v1012 = vadd.f32 %v1009, 1.0
        %v1013 = vrcp.pop %v1010
        %v1014 = vmul.f32 1.0, %v1013
        %v1015 = vrcp.pop %v1011
        %v1016 = vmul.f32 1.0, %v1015
        %v1017 = vrcp.pop %v1012
        %v1018 = vmul.f32 1.0, %v1017
        %v1019 = vmul.f32 %v998, %v1014
        %v1020 = vmul.f32 %v999, %v1016
        %v1021 = vmul.f32 %v1000, %v1018
        %v1022 = vld [vmem:[%s614] sm:$0xff]
        %v1023 = vld [vmem:[%s614 + $0x8] sm:$0xff]
        %v1024 = vld [vmem:[%s614 + $0x10] sm:$0xff]
        %v1025 = vld [vmem:[%s614 + $0x18] sm:$0xff]
        %v1026 = vld [vmem:[%s614 + $0x20] sm:$0xff]
        %v1027 = vld [vmem:[%s614 + $0x28] sm:$0xff]
        %v1028 = vld [vmem:[%s614 + $0x30] sm:$0xff]
        %v1029 = vld [vmem:[%s614 + $0x38] sm:$0xff]
        %v1030 = vld [vmem:[%s614 + $0x40] sm:$0xff]
        %v1031 = vld [vmem:[%s614 + $0x48] sm:$0xff]
        %v1032 = vld [vmem:[%s614 + $0x50] sm:$0xff]
        %v1033 = vld [vmem:[%s614 + $0x58] sm:$0xff]
        %v1034 = vld [vmem:[%s614 + $0x60] sm:$0xff]
        %v1035 = vld [vmem:[%s614 + $0x68] sm:$0xff]
        %v1036 = vld [vmem:[%s614 + $0x70] sm:$0xff]
        %v1037 = vld [vmem:[%s614 + $0x78] sm:$0xff]
        %v1038 = vld [vmem:[%s614 + $0x80] sm:$0xff]
        %v1039 = vld [vmem:[%s614 + $0x88] sm:$0xff]
        %v1040 = vld [vmem:[%s614 + $0x90] sm:$0xff]
        %v1041 = vld [vmem:[%s614 + $0x98] sm:$0xff]
        %v1042 = vld [vmem:[%s614 + $0xa0] sm:$0xff]
        %v1043 = vld [vmem:[%s614 + $0xa8] sm:$0xff]
        %v1044 = vld [vmem:[%s614 + $0xb0] sm:$0xff]
        %v1045 = vld [vmem:[%s614 + $0xb8] sm:$0xff]
        %v1046 = vld [vmem:[%s614 + $0xc0] sm:$0xff]
        %v1047 = vld [vmem:[%s614 + $0xc8] sm:$0xff]
        %v1048 = vld [vmem:[%s614 + $0xd0] sm:$0xff]
        %v1049 = vld [vmem:[%s614 + $0xd8] sm:$0xff]
        %v1050 = vld [vmem:[%s614 + $0xe0] sm:$0xff]
        %v1051 = vld [vmem:[%s614 + $0xe8] sm:$0xff]
        %v1052 = vld [vmem:[%s614 + $0xf0] sm:$0xff]
        %v1053 = vld [vmem:[%s614 + $0xf8] sm:$0xff]
        %v1054 = vld [vmem:[%s618] sm:$0x3]
        %v1056 = vlaneseq
        %v1057 = vshrl.u32 %v1056, 7
        %v1058 = vsub.s32 0, %v1057
        %v1059 = vrot.slane %v1054, %v1058
        %v1060 = vlaneseq
        %v1061 = vshrl.u32 %v1060, 7
        %v1062 = vsub.s32 1, %v1061
        %v1063 = vrot.slane %v1054, %v1062
        %1066 = vmatprep.subr.mxu0 %v1053
        %1067 = vmatpush1.msra.mxu0 %v1052
        %1068 = vmatprep.subr.mxu0 %v1051
        %1069 = vmatpush1.msra.mxu0 %v1050
        %1070 = vmatprep.subr.mxu0 %v1049
        %1071 = vmatpush1.msra.mxu0 %v1048
        %1072 = vmatprep.subr.mxu0 %v1047
        %1073 = vmatpush1.msra.mxu0 %v1046
        %1074 = vmatprep.subr.mxu0 %v1045
        %1075 = vmatpush1.msra.mxu0 %v1044
        %1076 = vmatprep.subr.mxu0 %v1043
        %1077 = vmatpush1.msra.mxu0 %v1042
        %1078 = vmatprep.subr.mxu0 %v1041
        %1079 = vmatpush1.msra.mxu0 %v1040
        %1080 = vmatprep.subr.mxu0 %v1039
        %1081 = vmatpush1.msra.mxu0 %v1038
        %1082 = vmatprep.subr.mxu0 %v1037
        %1083 = vmatpush1.msra.mxu0 %v1036
        %1084 = vmatprep.subr.mxu0 %v1035
        %1085 = vmatpush1.msra.mxu0 %v1034
        %1086 = vmatprep.subr.mxu0 %v1033
        %1087 = vmatpush1.msra.mxu0 %v1032
        %1088 = vmatprep.subr.mxu0 %v1031
        %1089 = vmatpush1.msra.mxu0 %v1030
        %1090 = vmatprep.subr.mxu0 %v1029
        %1091 = vmatpush1.msra.mxu0 %v1028
        %1092 = vmatprep.subr.mxu0 %v1027
        %1093 = vmatpush1.msra.mxu0 %v1026
        %1094 = vmatprep.subr.mxu0 %v1025
        %1095 = vmatpush1.msra.mxu0 %v1024
        %1096 = vmatprep.subr.mxu0 %v1023
        %1097 = vmatpush1.msra.mxu0 %v1022
        %1098 = vmatprep.subr.mxu0 0.0
        %1099 = vmatpush2.msra.mxu0 0.0
        %1100 = vmatprep.subr.mxu0 0.0
        %1101 = vmatpush2.msra.mxu0 0.0
        %1102 = vmatprep.subr.mxu0 0.0
        %1103 = vmatpush2.msra.mxu0 0.0
        %1104 = vmatprep.subr.mxu0 0.0
        %1105 = vmatpush2.msra.mxu0 0.0
        %1106 = vmatprep.subr.mxu0 0.0
        %1107 = vmatpush2.msra.mxu0 0.0
        %1108 = vmatprep.subr.mxu0 0.0
        %1109 = vmatpush2.msra.mxu0 0.0
        %1110 = vmatprep.subr.mxu0 0.0
        %1111 = vmatpush2.msra.mxu0 0.0
        %1112 = vmatprep.subr.mxu0 0.0
        %1113 = vmatpush2.msra.mxu0 0.0
        %1114 = vmatprep.subr.mxu0 0.0
        %1115 = vmatpush2.msra.mxu0 0.0
        %1116 = vmatprep.subr.mxu0 0.0
        %1117 = vmatpush2.msra.mxu0 0.0
        %1118 = vmatprep.subr.mxu0 0.0
        %1119 = vmatpush2.msra.mxu0 0.0
        %1120 = vmatprep.subr.mxu0 0.0
        %1121 = vmatpush2.msra.mxu0 0.0
        %1122 = vmatprep.subr.mxu0 0.0
        %1123 = vmatpush2.msra.mxu0 0.0
        %1124 = vmatprep.subr.mxu0 0.0
        %1125 = vmatpush2.msra.mxu0 0.0
        %1126 = vmatprep.subr.mxu0 0.0
        %1127 = vmatpush2.msra.mxu0 0.0
        %1128 = vmatprep.subr.mxu0 0.0
        %1129 = vmatpush2.msra.mxu0 0.0
        %1130 = vmatprep.mubr.f32.mxu0 0.0
        %1131 = vmatmul.mubr.f32.gmra.mxu0 %v1019
        %v1132 = vpop.f32.mrf.mxu0
        %v1133 = vadd.f32 %v1059, %v1132
        %v1134 = vpop.f32.mrf.mxu0
        %v1135 = vadd.f32 %v1063, %v1134
        %1136 = vmatprep.mubr.f32.mxu0 0.0
        %1137 = vmatmul.mubr.f32.gmra.mxu0 %v1020
        %v1138 = vpop.f32.mrf.mxu0
        %v1139 = vadd.f32 %v1059, %v1138
        %v1140 = vpop.f32.mrf.mxu0
        %v1141 = vadd.f32 %v1063, %v1140
        %1142 = vmatprep.mubr.f32.mxu0 0.0
        %1143 = vmatmul.mubr.f32.gmra.mxu0 %v1021
        %v1144 = vpop.f32.mrf.mxu0
        %v1145 = vadd.f32 %v1059, %v1144
        %v1146 = vpop.f32.mrf.mxu0
        %v1147 = vadd.f32 %v1063, %v1146
        %1148 = vdwg.mxu0
        %vm1149 = vcmp.gt.f32.partialorder %v1133, 20.0
        %vm1150 = vcmp.gt.f32.partialorder %v1139, 20.0
        %vm1151 = vcmp.gt.f32.partialorder %v1145, 20.0
        %v1152 = vmin.f32 %v1133, 20.0
        %v1153 = vmin.f32 %v1139, 20.0
        %v1154 = vmin.f32 %v1145, 20.0
        %v1155 = vmul.f32 %v1152, 1.442695
        %v1156 = vpow.pop %v1155
        %v1157 = vmul.f32 %v1153, 1.442695
        %v1158 = vpow.pop %v1157
        %v1159 = vmul.f32 %v1154, 1.442695
        %v1160 = vpow.pop %v1159
        %v1161 = vadd.f32 %v1156, 1.0
        %v1162 = vadd.f32 %v1158, 1.0
        %v1163 = vadd.f32 %v1160, 1.0
        %v1164 = vlog2.pop %v1161
        %v1165 = vmul.f32 %v1164, 0.6931472
        %v1166 = vlog2.pop %v1162
        %v1167 = vmul.f32 %v1166, 0.6931472
        %v1168 = vlog2.pop %v1163
        %v1169 = vmul.f32 %v1168, 0.6931472
        %v1170 = vsel %vm1149, %v1133, %v1165
        %v1171 = vsel %vm1150, %v1139, %v1167
        %v1172 = vsel %vm1151, %v1145, %v1169
        %v1173 = vld [vmem:[%s622] sm:$0xff]
        %v1174 = vmul.f32 %v1170, %v1019
        %v1175 = vmul.f32 %v1171, %v1020
        %v1176 = vmul.f32 %v1172, %v1021
        %v1177 = vlaneseq
        %v1178 = vshrl.u32 %v1177, 7
        %v1179 = vsub.s32 0, %v1178
        %v1180 = vrot.slane %v1173, %v1179
        %v1181 = vmul.f32 %v1170, %v1180
        %v1182 = vmul.f32 %v1171, %v1180
        %v1183 = vmul.f32 %v1172, %v1180
        %v1184 = vmul.f32 %v1181, 1.442695
        %v1185 = vpow.pop %v1184
        %v1186 = vmul.f32 %v1182, 1.442695
        %v1187 = vpow.pop %v1186
        %v1188 = vmul.f32 %v1183, 1.442695
        %v1189 = vpow.pop %v1188
        %1190 = vst.msk [vmem:[#allocation3] sm:$0xff] %vm915, %v1185
        %1191 = vst.msk [vmem:[#allocation3 + $0x40] sm:$0xff] %vm915, %v1187
        %1192 = vst.msk [vmem:[#allocation3 + $0x80] sm:$0xff] %vm915, %v1189
        %1196 = vrot.lane.b32.xlu0 %v1185, 64
        %v1197 = vpop.permute.xlu0 %1196
        %1198 = vrot.lane.b32.xlu0 %v1187, 64
        %v1199 = vpop.permute.xlu0 %1198
        %1200 = vrot.lane.b32.xlu0 %v1189, 64
        %v1201 = vpop.permute.xlu0 %1200
        %1205 = vst.msk [vmem:[#allocation4] sm:$0xff] %vm915, %v1197
        %1206 = vst.msk [vmem:[#allocation4 + $0x40] sm:$0xff] %vm915, %v1199
        %1207 = vst.msk [vmem:[#allocation4 + $0x80] sm:$0xff] %vm915, %v1201
        %1209 = vset.pattern.permute.xlu0 0
        %1210 = vperm.xlu0 %1209, %v1135
        %v1211 = vpop.permute.xlu0 %1210
        %1214 = vset.pattern.permute.xlu0 0
        %1215 = vperm.xlu0 %1214, %v1141
        %v1216 = vpop.permute.xlu0 %1215
        %1219 = vset.pattern.permute.xlu0 0
        %1220 = vperm.xlu0 %1219, %v1147
        %v1221 = vpop.permute.xlu0 %1220
        %v1223 = vmul.f32 %v1174, %v1211
        %v1224 = vmul.f32 %v1175, %v1216
        %v1225 = vmul.f32 %v1176, %v1221
        %1226 = vst.msk [vmem:[#allocation3 + $0x20] sm:$0xff] %vm915, %v1223
        %1227 = vst.msk [vmem:[#allocation3 + $0x60] sm:$0xff] %vm915, %v1224
        %1228 = vst.msk [vmem:[#allocation3 + $0xa0] sm:$0xff] %vm915, %v1225
        %1229 = vset.pattern.permute.xlu0 16
        %1230 = vperm.xlu0 %1229, %v1135
        %v1231 = vpop.permute.xlu0 %1230
        %1233 = vset.pattern.permute.xlu0 16
        %1234 = vperm.xlu0 %1233, %v1141
        %v1235 = vpop.permute.xlu0 %1234
        %1237 = vset.pattern.permute.xlu0 16
        %1238 = vperm.xlu0 %1237, %v1147
        %v1239 = vpop.permute.xlu0 %1238
        %v1241 = vmul.f32 %v1174, %v1231
        %v1242 = vmul.f32 %v1175, %v1235
        %v1243 = vmul.f32 %v1176, %v1239
        %1247 = vrot.lane.b32.xlu0 %v1241, 64
        %v1248 = vpop.permute.xlu0 %1247
        %1249 = vrot.lane.b32.xlu0 %v1242, 64
        %v1250 = vpop.permute.xlu0 %1249
        %1251 = vrot.lane.b32.xlu0 %v1243, 64
        %v1252 = vpop.permute.xlu0 %1251
        %1256 = vst.msk [vmem:[#allocation4 + $0x20] sm:$0xff] %vm915, %v1248
        %1257 = vst.msk [vmem:[#allocation4 + $0x60] sm:$0xff] %vm915, %v1250
        %1258 = vst.msk [vmem:[#allocation4 + $0xa0] sm:$0xff] %vm915, %v1252
        %v1259 = vlaneseq
        %v1260 = vshrl.u32 %v1259, 7
        %v1261 = vsub.s32 1, %v1260
        %v1262 = vrot.slane %v1173, %v1261
        %v1263 = vmul.f32 %v1170, %v1262
        %v1264 = vmul.f32 %v1171, %v1262
        %v1265 = vmul.f32 %v1172, %v1262
        %v1266 = vmul.f32 %v1263, 1.442695
        %v1267 = vpow.pop %v1266
        %v1268 = vmul.f32 %v1264, 1.442695
        %v1269 = vpow.pop %v1268
        %v1270 = vmul.f32 %v1265, 1.442695
        %v1271 = vpow.pop %v1270
        %1275 = vrot.lane.b32.xlu0 %v1267, 64
        %v1276 = vpop.permute.xlu0 %1275
        %1277 = vrot.lane.b32.xlu0 %v1269, 64
        %v1278 = vpop.permute.xlu0 %1277
        %1279 = vrot.lane.b32.xlu0 %v1271, 64
        %v1280 = vpop.permute.xlu0 %1279
        %1284 = vst.msk [vmem:[#allocation3] sm:$0xff] %vm931, %v1276
        %1285 = vst.msk [vmem:[#allocation3 + $0x40] sm:$0xff] %vm931, %v1278
        %1286 = vst.msk [vmem:[#allocation3 + $0x80] sm:$0xff] %vm931, %v1280
        %1287 = vst.msk [vmem:[#allocation4] sm:$0xff] %vm931, %v1267
        %1288 = vst.msk [vmem:[#allocation4 + $0x40] sm:$0xff] %vm931, %v1269
        %1289 = vst.msk [vmem:[#allocation4 + $0x80] sm:$0xff] %vm931, %v1271
        %1290 = vset.pattern.permute.xlu0 1
        %1291 = vperm.xlu0 %1290, %v1135
        %v1292 = vpop.permute.xlu0 %1291
        %1294 = vset.pattern.permute.xlu0 1
        %1295 = vperm.xlu0 %1294, %v1141
        %v1296 = vpop.permute.xlu0 %1295
        %1298 = vset.pattern.permute.xlu0 1
        %1299 = vperm.xlu0 %1298, %v1147
        %v1300 = vpop.permute.xlu0 %1299
        %v1302 = vmul.f32 %v1174, %v1292
        %v1303 = vmul.f32 %v1175, %v1296
        %v1304 = vmul.f32 %v1176, %v1300
        %1308 = vrot.lane.b32.xlu0 %v1302, 64
        %v1309 = vpop.permute.xlu0 %1308
        %1310 = vrot.lane.b32.xlu0 %v1303, 64
        %v1311 = vpop.permute.xlu0 %1310
        %1312 = vrot.lane.b32.xlu0 %v1304, 64
        %v1313 = vpop.permute.xlu0 %1312
        %1317 = vst.msk [vmem:[#allocation3 + $0x20] sm:$0xff] %vm931, %v1309
        %1318 = vst.msk [vmem:[#allocation3 + $0x60] sm:$0xff] %vm931, %v1311
        %1319 = vst.msk [vmem:[#allocation3 + $0xa0] sm:$0xff] %vm931, %v1313
        %1320 = vset.pattern.permute.xlu0 17
        %1321 = vperm.xlu0 %1320, %v1135
        %v1322 = vpop.permute.xlu0 %1321
        %1324 = vset.pattern.permute.xlu0 17
        %1325 = vperm.xlu0 %1324, %v1141
        %v1326 = vpop.permute.xlu0 %1325
        %1328 = vset.pattern.permute.xlu0 17
        %1329 = vperm.xlu0 %1328, %v1147
        %v1330 = vpop.permute.xlu0 %1329
        %v1332 = vmul.f32 %v1174, %v1322
        %v1333 = vmul.f32 %v1175, %v1326
        %v1334 = vmul.f32 %v1176, %v1330
        %1335 = vst.msk [vmem:[#allocation4 + $0x20] sm:$0xff] %vm931, %v1332
        %1336 = vst.msk [vmem:[#allocation4 + $0x60] sm:$0xff] %vm931, %v1333
        %1337 = vst.msk [vmem:[#allocation4 + $0xa0] sm:$0xff] %vm931, %v1334
        %v1338 = vlaneseq
        %v1339 = vshrl.u32 %v1338, 7
        %v1340 = vsub.s32 2, %v1339
        %v1341 = vrot.slane %v1173, %v1340
        %v1342 = vmul.f32 %v1170, %v1341
        %v1343 = vmul.f32 %v1171, %v1341
        %v1344 = vmul.f32 %v1172, %v1341
        %v1345 = vmul.f32 %v1342, 1.442695
        %v1346 = vpow.pop %v1345
        %v1347 = vmul.f32 %v1343, 1.442695
        %v1348 = vpow.pop %v1347
        %v1349 = vmul.f32 %v1344, 1.442695
        %v1350 = vpow.pop %v1349
        %1351 = vst.msk [vmem:[#allocation3 + $0x8] sm:$0xff] %vm915, %v1346
        %1352 = vst.msk [vmem:[#allocation3 + $0x48] sm:$0xff] %vm915, %v1348
        %1353 = vst.msk [vmem:[#allocation3 + $0x88] sm:$0xff] %vm915, %v1350
        %1357 = vrot.lane.b32.xlu0 %v1346, 64
        %v1358 = vpop.permute.xlu0 %1357
        %1359 = vrot.lane.b32.xlu0 %v1348, 64
        %v1360 = vpop.permute.xlu0 %1359
        %1361 = vrot.lane.b32.xlu0 %v1350, 64
        %v1362 = vpop.permute.xlu0 %1361
        %1366 = vst.msk [vmem:[#allocation4 + $0x8] sm:$0xff] %vm915, %v1358
        %1367 = vst.msk [vmem:[#allocation4 + $0x48] sm:$0xff] %vm915, %v1360
        %1368 = vst.msk [vmem:[#allocation4 + $0x88] sm:$0xff] %vm915, %v1362
        %1369 = vset.pattern.permute.xlu0 2
        %1370 = vperm.xlu0 %1369, %v1135
        %v1371 = vpop.permute.xlu0 %1370
        %1373 = vset.pattern.permute.xlu0 2
        %1374 = vperm.xlu0 %1373, %v1141
        %v1375 = vpop.permute.xlu0 %1374
        %1377 = vset.pattern.permute.xlu0 2
        %1378 = vperm.xlu0 %1377, %v1147
        %v1379 = vpop.permute.xlu0 %1378
        %v1381 = vmul.f32 %v1174, %v1371
        %v1382 = vmul.f32 %v1175, %v1375
        %v1383 = vmul.f32 %v1176, %v1379
        %1384 = vst.msk [vmem:[#allocation3 + $0x28] sm:$0xff] %vm915, %v1381
        %1385 = vst.msk [vmem:[#allocation3 + $0x68] sm:$0xff] %vm915, %v1382
        %1386 = vst.msk [vmem:[#allocation3 + $0xa8] sm:$0xff] %vm915, %v1383
        %1387 = vset.pattern.permute.xlu0 18
        %1388 = vperm.xlu0 %1387, %v1135
        %v1389 = vpop.permute.xlu0 %1388
        %1391 = vset.pattern.permute.xlu0 18
        %1392 = vperm.xlu0 %1391, %v1141
        %v1393 = vpop.permute.xlu0 %1392
        %1395 = vset.pattern.permute.xlu0 18
        %1396 = vperm.xlu0 %1395, %v1147
        %v1397 = vpop.permute.xlu0 %1396
        %v1399 = vmul.f32 %v1174, %v1389
        %v1400 = vmul.f32 %v1175, %v1393
        %v1401 = vmul.f32 %v1176, %v1397
        %1405 = vrot.lane.b32.xlu0 %v1399, 64
        %v1406 = vpop.permute.xlu0 %1405
        %1407 = vrot.lane.b32.xlu0 %v1400, 64
        %v1408 = vpop.permute.xlu0 %1407
        %1409 = vrot.lane.b32.xlu0 %v1401, 64
        %v1410 = vpop.permute.xlu0 %1409
        %1414 = vst.msk [vmem:[#allocation4 + $0x28] sm:$0xff] %vm915, %v1406
        %1415 = vst.msk [vmem:[#allocation4 + $0x68] sm:$0xff] %vm915, %v1408
        %1416 = vst.msk [vmem:[#allocation4 + $0xa8] sm:$0xff] %vm915, %v1410
        %v1417 = vlaneseq
        %v1418 = vshrl.u32 %v1417, 7
        %v1419 = vsub.s32 3, %v1418
        %v1420 = vrot.slane %v1173, %v1419
        %v1421 = vmul.f32 %v1170, %v1420
        %v1422 = vmul.f32 %v1171, %v1420
        %v1423 = vmul.f32 %v1172, %v1420
        %v1424 = vmul.f32 %v1421, 1.442695
        %v1425 = vpow.pop %v1424
        %v1426 = vmul.f32 %v1422, 1.442695
        %v1427 = vpow.pop %v1426
        %v1428 = vmul.f32 %v1423, 1.442695
        %v1429 = vpow.pop %v1428
        %1433 = vrot.lane.b32.xlu0 %v1425, 64
        %v1434 = vpop.permute.xlu0 %1433
        %1435 = vrot.lane.b32.xlu0 %v1427, 64
        %v1436 = vpop.permute.xlu0 %1435
        %1437 = vrot.lane.b32.xlu0 %v1429, 64
        %v1438 = vpop.permute.xlu0 %1437
        %1442 = vst.msk [vmem:[#allocation3 + $0x8] sm:$0xff] %vm931, %v1434
        %1443 = vst.msk [vmem:[#allocation3 + $0x48] sm:$0xff] %vm931, %v1436
        %1444 = vst.msk [vmem:[#allocation3 + $0x88] sm:$0xff] %vm931, %v1438
        %1445 = vst.msk [vmem:[#allocation4 + $0x8] sm:$0xff] %vm931, %v1425
        %1446 = vst.msk [vmem:[#allocation4 + $0x48] sm:$0xff] %vm931, %v1427
        %1447 = vst.msk [vmem:[#allocation4 + $0x88] sm:$0xff] %vm931, %v1429
        %1448 = vset.pattern.permute.xlu0 3
        %1449 = vperm.xlu0 %1448, %v1135
        %v1450 = vpop.permute.xlu0 %1449
        %1452 = vset.pattern.permute.xlu0 3
        %1453 = vperm.xlu0 %1452, %v1141
        %v1454 = vpop.permute.xlu0 %1453
        %1456 = vset.pattern.permute.xlu0 3
        %1457 = vperm.xlu0 %1456, %v1147
        %v1458 = vpop.permute.xlu0 %1457
        %v1460 = vmul.f32 %v1174, %v1450
        %v1461 = vmul.f32 %v1175, %v1454
        %v1462 = vmul.f32 %v1176, %v1458
        %1466 = vrot.lane.b32.xlu0 %v1460, 64
        %v1467 = vpop.permute.xlu0 %1466
        %1468 = vrot.lane.b32.xlu0 %v1461, 64
        %v1469 = vpop.permute.xlu0 %1468
        %1470 = vrot.lane.b32.xlu0 %v1462, 64
        %v1471 = vpop.permute.xlu0 %1470
        %1475 = vst.msk [vmem:[#allocation3 + $0x28] sm:$0xff] %vm931, %v1467
        %1476 = vst.msk [vmem:[#allocation3 + $0x68] sm:$0xff] %vm931, %v1469
        %1477 = vst.msk [vmem:[#allocation3 + $0xa8] sm:$0xff] %vm931, %v1471
        %1478 = vset.pattern.permute.xlu0 19
        %1479 = vperm.xlu0 %1478, %v1135
        %v1480 = vpop.permute.xlu0 %1479
        %1482 = vset.pattern.permute.xlu0 19
        %1483 = vperm.xlu0 %1482, %v1141
        %v1484 = vpop.permute.xlu0 %1483
        %1486 = vset.pattern.permute.xlu0 19
        %1487 = vperm.xlu0 %1486, %v1147
        %v1488 = vpop.permute.xlu0 %1487
        %v1490 = vmul.f32 %v1174, %v1480
        %v1491 = vmul.f32 %v1175, %v1484
        %v1492 = vmul.f32 %v1176, %v1488
        %1493 = vst.msk [vmem:[#allocation4 + $0x28] sm:$0xff] %vm931, %v1490
        %1494 = vst.msk [vmem:[#allocation4 + $0x68] sm:$0xff] %vm931, %v1491
        %1495 = vst.msk [vmem:[#allocation4 + $0xa8] sm:$0xff] %vm931, %v1492
        %v1496 = vlaneseq
        %v1497 = vshrl.u32 %v1496, 7
        %v1498 = vsub.s32 4, %v1497
        %v1499 = vrot.slane %v1173, %v1498
        %v1500 = vmul.f32 %v1170, %v1499
        %v1501 = vmul.f32 %v1171, %v1499
        %v1502 = vmul.f32 %v1172, %v1499
        %v1503 = vmul.f32 %v1500, 1.442695
        %v1504 = vpow.pop %v1503
        %v1505 = vmul.f32 %v1501, 1.442695
        %v1506 = vpow.pop %v1505
        %v1507 = vmul.f32 %v1502, 1.442695
        %v1508 = vpow.pop %v1507
        %1509 = vst.msk [vmem:[#allocation3 + $0x10] sm:$0xff] %vm915, %v1504
        %1510 = vst.msk [vmem:[#allocation3 + $0x50] sm:$0xff] %vm915, %v1506
        %1511 = vst.msk [vmem:[#allocation3 + $0x90] sm:$0xff] %vm915, %v1508
        %1515 = vrot.lane.b32.xlu0 %v1504, 64
        %v1516 = vpop.permute.xlu0 %1515
        %1517 = vrot.lane.b32.xlu0 %v1506, 64
        %v1518 = vpop.permute.xlu0 %1517
        %1519 = vrot.lane.b32.xlu0 %v1508, 64
        %v1520 = vpop.permute.xlu0 %1519
        %1524 = vst.msk [vmem:[#allocation4 + $0x10] sm:$0xff] %vm915, %v1516
        %1525 = vst.msk [vmem:[#allocation4 + $0x50] sm:$0xff] %vm915, %v1518
        %1526 = vst.msk [vmem:[#allocation4 + $0x90] sm:$0xff] %vm915, %v1520
        %1527 = vset.pattern.permute.xlu0 4
        %1528 = vperm.xlu0 %1527, %v1135
        %v1529 = vpop.permute.xlu0 %1528
        %1531 = vset.pattern.permute.xlu0 4
        %1532 = vperm.xlu0 %1531, %v1141
        %v1533 = vpop.permute.xlu0 %1532
        %1535 = vset.pattern.permute.xlu0 4
        %1536 = vperm.xlu0 %1535, %v1147
        %v1537 = vpop.permute.xlu0 %1536
        %v1539 = vmul.f32 %v1174, %v1529
        %v1540 = vmul.f32 %v1175, %v1533
        %v1541 = vmul.f32 %v1176, %v1537
        %1542 = vst.msk [vmem:[#allocation3 + $0x30] sm:$0xff] %vm915, %v1539
        %1543 = vst.msk [vmem:[#allocation3 + $0x70] sm:$0xff] %vm915, %v1540
        %1544 = vst.msk [vmem:[#allocation3 + $0xb0] sm:$0xff] %vm915, %v1541
        %1545 = vset.pattern.permute.xlu0 20
        %1546 = vperm.xlu0 %1545, %v1135
        %v1547 = vpop.permute.xlu0 %1546
        %1549 = vset.pattern.permute.xlu0 20
        %1550 = vperm.xlu0 %1549, %v1141
        %v1551 = vpop.permute.xlu0 %1550
        %1553 = vset.pattern.permute.xlu0 20
        %1554 = vperm.xlu0 %1553, %v1147
        %v1555 = vpop.permute.xlu0 %1554
        %v1557 = vmul.f32 %v1174, %v1547
        %v1558 = vmul.f32 %v1175, %v1551
        %v1559 = vmul.f32 %v1176, %v1555
        %1563 = vrot.lane.b32.xlu0 %v1557, 64
        %v1564 = vpop.permute.xlu0 %1563
        %1565 = vrot.lane.b32.xlu0 %v1558, 64
        %v1566 = vpop.permute.xlu0 %1565
        %1567 = vrot.lane.b32.xlu0 %v1559, 64
        %v1568 = vpop.permute.xlu0 %1567
        %1572 = vst.msk [vmem:[#allocation4 + $0x30] sm:$0xff] %vm915, %v1564
        %1573 = vst.msk [vmem:[#allocation4 + $0x70] sm:$0xff] %vm915, %v1566
        %1574 = vst.msk [vmem:[#allocation4 + $0xb0] sm:$0xff] %vm915, %v1568
        %v1575 = vlaneseq
        %v1576 = vshrl.u32 %v1575, 7
        %v1577 = vsub.s32 5, %v1576
        %v1578 = vrot.slane %v1173, %v1577
        %v1579 = vmul.f32 %v1170, %v1578
        %v1580 = vmul.f32 %v1171, %v1578
        %v1581 = vmul.f32 %v1172, %v1578
        %v1582 = vmul.f32 %v1579, 1.442695
        %v1583 = vpow.pop %v1582
        %v1584 = vmul.f32 %v1580, 1.442695
        %v1585 = vpow.pop %v1584
        %v1586 = vmul.f32 %v1581, 1.442695
        %v1587 = vpow.pop %v1586
        %1591 = vrot.lane.b32.xlu0 %v1583, 64
        %v1592 = vpop.permute.xlu0 %1591
        %1593 = vrot.lane.b32.xlu0 %v1585, 64
        %v1594 = vpop.permute.xlu0 %1593
        %1595 = vrot.lane.b32.xlu0 %v1587, 64
        %v1596 = vpop.permute.xlu0 %1595
        %1600 = vst.msk [vmem:[#allocation3 + $0x10] sm:$0xff] %vm931, %v1592
        %1601 = vst.msk [vmem:[#allocation3 + $0x50] sm:$0xff] %vm931, %v1594
        %1602 = vst.msk [vmem:[#allocation3 + $0x90] sm:$0xff] %vm931, %v1596
        %1603 = vst.msk [vmem:[#allocation4 + $0x10] sm:$0xff] %vm931, %v1583
        %1604 = vst.msk [vmem:[#allocation4 + $0x50] sm:$0xff] %vm931, %v1585
        %1605 = vst.msk [vmem:[#allocation4 + $0x90] sm:$0xff] %vm931, %v1587
        %1606 = vset.pattern.permute.xlu0 5
        %1607 = vperm.xlu0 %1606, %v1135
        %v1608 = vpop.permute.xlu0 %1607
        %1610 = vset.pattern.permute.xlu0 5
        %1611 = vperm.xlu0 %1610, %v1141
        %v1612 = vpop.permute.xlu0 %1611
        %1614 = vset.pattern.permute.xlu0 5
        %1615 = vperm.xlu0 %1614, %v1147
        %v1616 = vpop.permute.xlu0 %1615
        %v1618 = vmul.f32 %v1174, %v1608
        %v1619 = vmul.f32 %v1175, %v1612
        %v1620 = vmul.f32 %v1176, %v1616
        %1624 = vrot.lane.b32.xlu0 %v1618, 64
        %v1625 = vpop.permute.xlu0 %1624
        %1626 = vrot.lane.b32.xlu0 %v1619, 64
        %v1627 = vpop.permute.xlu0 %1626
        %1628 = vrot.lane.b32.xlu0 %v1620, 64
        %v1629 = vpop.permute.xlu0 %1628
        %1633 = vst.msk [vmem:[#allocation3 + $0x30] sm:$0xff] %vm931, %v1625
        %1634 = vst.msk [vmem:[#allocation3 + $0x70] sm:$0xff] %vm931, %v1627
        %1635 = vst.msk [vmem:[#allocation3 + $0xb0] sm:$0xff] %vm931, %v1629
        %1636 = vset.pattern.permute.xlu0 21
        %1637 = vperm.xlu0 %1636, %v1135
        %v1638 = vpop.permute.xlu0 %1637
        %1640 = vset.pattern.permute.xlu0 21
        %1641 = vperm.xlu0 %1640, %v1141
        %v1642 = vpop.permute.xlu0 %1641
        %1644 = vset.pattern.permute.xlu0 21
        %1645 = vperm.xlu0 %1644, %v1147
        %v1646 = vpop.permute.xlu0 %1645
        %v1648 = vmul.f32 %v1174, %v1638
        %v1649 = vmul.f32 %v1175, %v1642
        %v1650 = vmul.f32 %v1176, %v1646
        %1651 = vst.msk [vmem:[#allocation4 + $0x30] sm:$0xff] %vm931, %v1648
        %1652 = vst.msk [vmem:[#allocation4 + $0x70] sm:$0xff] %vm931, %v1649
        %1653 = vst.msk [vmem:[#allocation4 + $0xb0] sm:$0xff] %vm931, %v1650
        %v1654 = vlaneseq
        %v1655 = vshrl.u32 %v1654, 7
        %v1656 = vsub.s32 6, %v1655
        %v1657 = vrot.slane %v1173, %v1656
        %v1658 = vmul.f32 %v1170, %v1657
        %v1659 = vmul.f32 %v1171, %v1657
        %v1660 = vmul.f32 %v1172, %v1657
        %v1661 = vmul.f32 %v1658, 1.442695
        %v1662 = vpow.pop %v1661
        %v1663 = vmul.f32 %v1659, 1.442695
        %v1664 = vpow.pop %v1663
        %v1665 = vmul.f32 %v1660, 1.442695
        %v1666 = vpow.pop %v1665
        %1667 = vst.msk [vmem:[#allocation3 + $0x18] sm:$0xff] %vm915, %v1662
        %1668 = vst.msk [vmem:[#allocation3 + $0x58] sm:$0xff] %vm915, %v1664
        %1669 = vst.msk [vmem:[#allocation3 + $0x98] sm:$0xff] %vm915, %v1666
        %1673 = vrot.lane.b32.xlu0 %v1662, 64
        %v1674 = vpop.permute.xlu0 %1673
        %1675 = vrot.lane.b32.xlu0 %v1664, 64
        %v1676 = vpop.permute.xlu0 %1675
        %1677 = vrot.lane.b32.xlu0 %v1666, 64
        %v1678 = vpop.permute.xlu0 %1677
        %1682 = vst.msk [vmem:[#allocation4 + $0x18] sm:$0xff] %vm915, %v1674
        %1683 = vst.msk [vmem:[#allocation4 + $0x58] sm:$0xff] %vm915, %v1676
        %1684 = vst.msk [vmem:[#allocation4 + $0x98] sm:$0xff] %vm915, %v1678
        %1685 = vset.pattern.permute.xlu0 6
        %1686 = vperm.xlu0 %1685, %v1135
        %v1687 = vpop.permute.xlu0 %1686
        %1689 = vset.pattern.permute.xlu0 6
        %1690 = vperm.xlu0 %1689, %v1141
        %v1691 = vpop.permute.xlu0 %1690
        %1693 = vset.pattern.permute.xlu0 6
        %1694 = vperm.xlu0 %1693, %v1147
        %v1695 = vpop.permute.xlu0 %1694
        %v1697 = vmul.f32 %v1174, %v1687
        %v1698 = vmul.f32 %v1175, %v1691
        %v1699 = vmul.f32 %v1176, %v1695
        %1700 = vst.msk [vmem:[#allocation3 + $0x38] sm:$0xff] %vm915, %v1697
        %1701 = vst.msk [vmem:[#allocation3 + $0x78] sm:$0xff] %vm915, %v1698
        %1702 = vst.msk [vmem:[#allocation3 + $0xb8] sm:$0xff] %vm915, %v1699
        %1703 = vset.pattern.permute.xlu0 22
        %1704 = vperm.xlu0 %1703, %v1135
        %v1705 = vpop.permute.xlu0 %1704
        %1707 = vset.pattern.permute.xlu0 22
        %1708 = vperm.xlu0 %1707, %v1141
        %v1709 = vpop.permute.xlu0 %1708
        %1711 = vset.pattern.permute.xlu0 22
        %1712 = vperm.xlu0 %1711, %v1147
        %v1713 = vpop.permute.xlu0 %1712
        %v1715 = vmul.f32 %v1174, %v1705
        %v1716 = vmul.f32 %v1175, %v1709
        %v1717 = vmul.f32 %v1176, %v1713
        %1721 = vrot.lane.b32.xlu0 %v1715, 64
        %v1722 = vpop.permute.xlu0 %1721
        %1723 = vrot.lane.b32.xlu0 %v1716, 64
        %v1724 = vpop.permute.xlu0 %1723
        %1725 = vrot.lane.b32.xlu0 %v1717, 64
        %v1726 = vpop.permute.xlu0 %1725
        %1730 = vst.msk [vmem:[#allocation4 + $0x38] sm:$0xff] %vm915, %v1722
        %1731 = vst.msk [vmem:[#allocation4 + $0x78] sm:$0xff] %vm915, %v1724
        %1732 = vst.msk [vmem:[#allocation4 + $0xb8] sm:$0xff] %vm915, %v1726
        %v1733 = vlaneseq
        %v1734 = vshrl.u32 %v1733, 7
        %v1735 = vsub.s32 7, %v1734
        %v1736 = vrot.slane %v1173, %v1735
        %v1737 = vmul.f32 %v1170, %v1736
        %v1738 = vmul.f32 %v1171, %v1736
        %v1739 = vmul.f32 %v1172, %v1736
        %v1740 = vmul.f32 %v1737, 1.442695
        %v1741 = vpow.pop %v1740
        %v1742 = vmul.f32 %v1738, 1.442695
        %v1743 = vpow.pop %v1742
        %v1744 = vmul.f32 %v1739, 1.442695
        %v1745 = vpow.pop %v1744
        %1749 = vrot.lane.b32.xlu0 %v1741, 64
        %v1750 = vpop.permute.xlu0 %1749
        %1751 = vrot.lane.b32.xlu0 %v1743, 64
        %v1752 = vpop.permute.xlu0 %1751
        %1753 = vrot.lane.b32.xlu0 %v1745, 64
        %v1754 = vpop.permute.xlu0 %1753
        %1758 = vst.msk [vmem:[#allocation3 + $0x18] sm:$0xff] %vm931, %v1750
        %1759 = vst.msk [vmem:[#allocation3 + $0x58] sm:$0xff] %vm931, %v1752
        %1760 = vst.msk [vmem:[#allocation3 + $0x98] sm:$0xff] %vm931, %v1754
        %1761 = vst.msk [vmem:[#allocation4 + $0x18] sm:$0xff] %vm931, %v1741
        %1762 = vst.msk [vmem:[#allocation4 + $0x58] sm:$0xff] %vm931, %v1743
        %1763 = vst.msk [vmem:[#allocation4 + $0x98] sm:$0xff] %vm931, %v1745
        %1764 = vset.pattern.permute.xlu0 7
        %1765 = vperm.xlu0 %1764, %v1135
        %v1766 = vpop.permute.xlu0 %1765
        %1768 = vset.pattern.permute.xlu0 7
        %1769 = vperm.xlu0 %1768, %v1141
        %v1770 = vpop.permute.xlu0 %1769
        %1772 = vset.pattern.permute.xlu0 7
        %1773 = vperm.xlu0 %1772, %v1147
        %v1774 = vpop.permute.xlu0 %1773
        %v1776 = vmul.f32 %v1174, %v1766
        %v1777 = vmul.f32 %v1175, %v1770
        %v1778 = vmul.f32 %v1176, %v1774
        %1782 = vrot.lane.b32.xlu0 %v1776, 64
        %v1783 = vpop.permute.xlu0 %1782
        %1784 = vrot.lane.b32.xlu0 %v1777, 64
        %v1785 = vpop.permute.xlu0 %1784
        %1786 = vrot.lane.b32.xlu0 %v1778, 64
        %v1787 = vpop.permute.xlu0 %1786
        %1791 = vst.msk [vmem:[#allocation3 + $0x38] sm:$0xff] %vm931, %v1783
        %1792 = vst.msk [vmem:[#allocation3 + $0x78] sm:$0xff] %vm931, %v1785
        %1793 = vst.msk [vmem:[#allocation3 + $0xb8] sm:$0xff] %vm931, %v1787
        %1794 = vset.pattern.permute.xlu0 23
        %1795 = vperm.xlu0 %1794, %v1135
        %v1796 = vpop.permute.xlu0 %1795
        %1798 = vset.pattern.permute.xlu0 23
        %1799 = vperm.xlu0 %1798, %v1141
        %v1800 = vpop.permute.xlu0 %1799
        %1802 = vset.pattern.permute.xlu0 23
        %1803 = vperm.xlu0 %1802, %v1147
        %v1804 = vpop.permute.xlu0 %1803
        %v1806 = vmul.f32 %v1174, %v1796
        %v1807 = vmul.f32 %v1175, %v1800
        %v1808 = vmul.f32 %v1176, %v1804
        %1809 = vst.msk [vmem:[#allocation4 + $0x38] sm:$0xff] %vm931, %v1806
        %1810 = vst.msk [vmem:[#allocation4 + $0x78] sm:$0xff] %vm931, %v1807
        %1811 = vst.msk [vmem:[#allocation4 + $0xb8] sm:$0xff] %vm931, %v1808
        %v1812 = vld [vmem:[#allocation3] ss:$8 sm:$0xf]
        %v1813 = vld [vmem:[#allocation3] ss:$8 sm:$0xf0]
        %v1814 = vor.u32 %v1812, %v1813
        %v1815 = vmul.f32 %v1814, 0.0
        %v1817 = vrot.slane %v1814, 4
        %v1819 = vadd.f32 %v1815, %v1817
        %v1820 = vlaneseq
        %vm1821 = vcmp.ge.s32.totalorder %v1820, 0
        %vm1822 = vcmp.lt.s32.totalorder %v1820, 512
        %vm1823 = vmand %vm1821, %vm1822
        %1824 = vst.msk [vmem:[#allocation5] ss:$8 sm:$0xf] %vm1823, %v1819
        %1825 = vst.msk [vmem:[#allocation5] ss:$8 sm:$0x0] %vm1823, %v1819
        %s1826 = scalar_lea.vmem [#allocation4], 135
        %v1827 = vld [vmem:[%s1826] ss:$8 sm:$0xf]
        %v1828 = vld [vmem:[%s1826] ss:$8 sm:$0xf0]
        %v1829 = vor.u32 %v1827, %v1828
        %v1830 = vmul.f32 %v1829, 0.0
        %v1832 = vrot.slane %v1829, 4
        %v1834 = vadd.f32 %v1830, %v1832
        %s1835 = scalar_lea.vmem [#allocation6], 71
        %1836 = vst.msk [vmem:[%s1835] ss:$8 sm:$0xf] %vm1823, %v1834
        %1837 = vst.msk [vmem:[%s1835] ss:$8 sm:$0x0] %vm1823, %v1834
        %s1838 = scalar_lea.vmem [#allocation3], 1
        %v1839 = vld [vmem:[%s1838] ss:$8 sm:$0xf]
        %v1840 = vld [vmem:[%s1838] ss:$8 sm:$0xf0]
        %v1841 = vor.u32 %v1839, %v1840
        %v1842 = vmul.f32 %v1841, %v1819
        %v1844 = vrot.slane %v1841, 4
        %v1846 = vadd.f32 %v1842, %v1844
        %s1847 = scalar_lea.vmem [#allocation5], 1
        %1848 = vst.msk [vmem:[%s1847] ss:$8 sm:$0xf] %vm1823, %v1846
        %1849 = vst.msk [vmem:[%s1847] ss:$8 sm:$0x0] %vm1823, %v1846
        %s1850 = scalar_lea.vmem [#allocation4], 134
        %v1851 = vld [vmem:[%s1850] ss:$8 sm:$0xf]
        %v1852 = vld [vmem:[%s1850] ss:$8 sm:$0xf0]
        %v1853 = vor.u32 %v1851, %v1852
        %v1854 = vmul.f32 %v1853, %v1834
        %v1856 = vrot.slane %v1853, 4
        %v1858 = vadd.f32 %v1854, %v1856
        %s1859 = scalar_lea.vmem [#allocation6], 70
        %1860 = vst.msk [vmem:[%s1859] ss:$8 sm:$0xf] %vm1823, %v1858
        %1861 = vst.msk [vmem:[%s1859] ss:$8 sm:$0x0] %vm1823, %v1858
        %s1862 = scalar_lea.vmem [#allocation3], 2
        %v1863 = vld [vmem:[%s1862] ss:$8 sm:$0xf]
        %v1864 = vld [vmem:[%s1862] ss:$8 sm:$0xf0]
        %v1865 = vor.u32 %v1863, %v1864
        %v1866 = vmul.f32 %v1865, %v1846
        %v1868 = vrot.slane %v1865, 4
        %v1870 = vadd.f32 %v1866, %v1868
        %s1871 = scalar_lea.vmem [#allocation5], 2
        %1872 = vst.msk [vmem:[%s1871] ss:$8 sm:$0xf] %vm1823, %v1870
        %1873 = vst.msk [vmem:[%s1871] ss:$8 sm:$0x0] %vm1823, %v1870
        %s1874 = scalar_lea.vmem [#allocation4], 133
        %v1875 = vld [vmem:[%s1874] ss:$8 sm:$0xf]
        %v1876 = vld [vmem:[%s1874] ss:$8 sm:$0xf0]
        %v1877 = vor.u32 %v1875, %v1876
        %v1878 = vmul.f32 %v1877, %v1858
        %v1880 = vrot.slane %v1877, 4
        %v1882 = vadd.f32 %v1878, %v1880
        %s1883 = scalar_lea.vmem [#allocation6], 69
        %1884 = vst.msk [vmem:[%s1883] ss:$8 sm:$0xf] %vm1823, %v1882
        %1885 = vst.msk [vmem:[%s1883] ss:$8 sm:$0x0] %vm1823, %v1882
        %s1886 = scalar_lea.vmem [#allocation3], 3
        %v1887 = vld [vmem:[%s1886] ss:$8 sm:$0xf]
        %v1888 = vld [vmem:[%s1886] ss:$8 sm:$0xf0]
        %v1889 = vor.u32 %v1887, %v1888
        %v1890 = vmul.f32 %v1889, %v1870
        %v1892 = vrot.slane %v1889, 4
        %v1894 = vadd.f32 %v1890, %v1892
        %s1895 = scalar_lea.vmem [#allocation5], 3
        %1896 = vst.msk [vmem:[%s1895] ss:$8 sm:$0xf] %vm1823, %v1894
        %1897 = vst.msk [vmem:[%s1895] ss:$8 sm:$0x0] %vm1823, %v1894
        %s1898 = scalar_lea.vmem [#allocation4], 132
        %v1899 = vld [vmem:[%s1898] ss:$8 sm:$0xf]
        %v1900 = vld [vmem:[%s1898] ss:$8 sm:$0xf0]
        %v1901 = vor.u32 %v1899, %v1900
        %v1902 = vmul.f32 %v1901, %v1882
        %v1904 = vrot.slane %v1901, 4
        %v1906 = vadd.f32 %v1902, %v1904
        %s1907 = scalar_lea.vmem [#allocation6], 68
        %1908 = vst.msk [vmem:[%s1907] ss:$8 sm:$0xf] %vm1823, %v1906
        %1909 = vst.msk [vmem:[%s1907] ss:$8 sm:$0x0] %vm1823, %v1906
        %s1910 = scalar_lea.vmem [#allocation3], 4
        %v1911 = vld [vmem:[%s1910] ss:$8 sm:$0xf]
        %v1912 = vld [vmem:[%s1910] ss:$8 sm:$0xf0]
        %v1913 = vor.u32 %v1911, %v1912
        %v1914 = vmul.f32 %v1913, %v1894
        %v1916 = vrot.slane %v1913, 4
        %v1918 = vadd.f32 %v1914, %v1916
        %s1919 = scalar_lea.vmem [#allocation5], 4
        %1920 = vst.msk [vmem:[%s1919] ss:$8 sm:$0xf] %vm1823, %v1918
        %1921 = vst.msk [vmem:[%s1919] ss:$8 sm:$0x0] %vm1823, %v1918
        %s1922 = scalar_lea.vmem [#allocation4], 131
        %v1923 = vld [vmem:[%s1922] ss:$8 sm:$0xf]
        %v1924 = vld [vmem:[%s1922] ss:$8 sm:$0xf0]
        %v1925 = vor.u32 %v1923, %v1924
        %v1926 = vmul.f32 %v1925, %v1906
        %v1928 = vrot.slane %v1925, 4
        %v1930 = vadd.f32 %v1926, %v1928
        %s1931 = scalar_lea.vmem [#allocation6], 67
        %1932 = vst.msk [vmem:[%s1931] ss:$8 sm:$0xf] %vm1823, %v1930
        %1933 = vst.msk [vmem:[%s1931] ss:$8 sm:$0x0] %vm1823, %v1930
        %s1934 = scalar_lea.vmem [#allocation3], 5
        %v1935 = vld [vmem:[%s1934] ss:$8 sm:$0xf]
        %v1936 = vld [vmem:[%s1934] ss:$8 sm:$0xf0]
        %v1937 = vor.u32 %v1935, %v1936
        %v1938 = vmul.f32 %v1937, %v1918
        %v1940 = vrot.slane %v1937, 4
        %v1942 = vadd.f32 %v1938, %v1940
        %s1943 = scalar_lea.vmem [#allocation5], 5
        %1944 = vst.msk [vmem:[%s1943] ss:$8 sm:$0xf] %vm1823, %v1942
        %1945 = vst.msk [vmem:[%s1943] ss:$8 sm:$0x0] %vm1823, %v1942
        %s1946 = scalar_lea.vmem [#allocation4], 130
        %v1947 = vld [vmem:[%s1946] ss:$8 sm:$0xf]
        %v1948 = vld [vmem:[%s1946] ss:$8 sm:$0xf0]
        %v1949 = vor.u32 %v1947, %v1948
        %v1950 = vmul.f32 %v1949, %v1930
        %v1952 = vrot.slane %v1949, 4
        %v1954 = vadd.f32 %v1950, %v1952
        %s1955 = scalar_lea.vmem [#allocation6], 66
        %1956 = vst.msk [vmem:[%s1955] ss:$8 sm:$0xf] %vm1823, %v1954
        %1957 = vst.msk [vmem:[%s1955] ss:$8 sm:$0x0] %vm1823, %v1954
        %s1958 = scalar_lea.vmem [#allocation3], 6
        %v1959 = vld [vmem:[%s1958] ss:$8 sm:$0xf]
        %v1960 = vld [vmem:[%s1958] ss:$8 sm:$0xf0]
        %v1961 = vor.u32 %v1959, %v1960
        %v1962 = vmul.f32 %v1961, %v1942
        %v1964 = vrot.slane %v1961, 4
        %v1966 = vadd.f32 %v1962, %v1964
        %s1967 = scalar_lea.vmem [#allocation5], 6
        %1968 = vst.msk [vmem:[%s1967] ss:$8 sm:$0xf] %vm1823, %v1966
        %1969 = vst.msk [vmem:[%s1967] ss:$8 sm:$0x0] %vm1823, %v1966
        %s1970 = scalar_lea.vmem [#allocation4], 129
        %v1971 = vld [vmem:[%s1970] ss:$8 sm:$0xf]
        %v1972 = vld [vmem:[%s1970] ss:$8 sm:$0xf0]
        %v1973 = vor.u32 %v1971, %v1972
        %v1974 = vmul.f32 %v1973, %v1954
        %v1976 = vrot.slane %v1973, 4
        %v1978 = vadd.f32 %v1974, %v1976
        %s1979 = scalar_lea.vmem [#allocation6], 65
        %1980 = vst.msk [vmem:[%s1979] ss:$8 sm:$0xf] %vm1823, %v1978
        %1981 = vst.msk [vmem:[%s1979] ss:$8 sm:$0x0] %vm1823, %v1978
        %s1982 = scalar_lea.vmem [#allocation3], 7
        %v1983 = vld [vmem:[%s1982] ss:$8 sm:$0xf]
        %v1984 = vld [vmem:[%s1982] ss:$8 sm:$0xf0]
        %v1985 = vor.u32 %v1983, %v1984
        %v1986 = vmul.f32 %v1985, %v1966
        %v1988 = vrot.slane %v1985, 4
        %v1990 = vadd.f32 %v1986, %v1988
        %s1991 = scalar_lea.vmem [#allocation5], 7
        %1992 = vst.msk [vmem:[%s1991] ss:$8 sm:$0xf] %vm1823, %v1990
        %1993 = vst.msk [vmem:[%s1991] ss:$8 sm:$0x0] %vm1823, %v1990
        %s1994 = scalar_lea.vmem [#allocation4], 128
        %v1995 = vld [vmem:[%s1994] ss:$8 sm:$0xf]
        %v1996 = vld [vmem:[%s1994] ss:$8 sm:$0xf0]
        %v1997 = vor.u32 %v1995, %v1996
        %v1998 = vmul.f32 %v1997, %v1978
        %v2000 = vrot.slane %v1997, 4
        %v2002 = vadd.f32 %v1998, %v2000
        %s2003 = scalar_lea.vmem [#allocation6], 64
        %2004 = vst.msk [vmem:[%s2003] ss:$8 sm:$0xf] %vm1823, %v2002
        %2005 = vst.msk [vmem:[%s2003] ss:$8 sm:$0x0] %vm1823, %v2002
        %s2006 = scalar_lea.vmem [#allocation3], 64
        %v2007 = vld [vmem:[%s2006] ss:$8 sm:$0xf]
        %v2008 = vld [vmem:[%s2006] ss:$8 sm:$0xf0]
        %v2009 = vor.u32 %v2007, %v2008
        %v2010 = vmul.f32 %v2009, %v1990
        %v2012 = vrot.slane %v2009, 4
        %v2014 = vadd.f32 %v2010, %v2012
        %s2015 = scalar_lea.vmem [#allocation5], 32
        %2016 = vst.msk [vmem:[%s2015] ss:$8 sm:$0xf] %vm1823, %v2014
        %2017 = vst.msk [vmem:[%s2015] ss:$8 sm:$0x0] %vm1823, %v2014
        %s2018 = scalar_lea.vmem [#allocation4], 71
        %v2019 = vld [vmem:[%s2018] ss:$8 sm:$0xf]
        %v2020 = vld [vmem:[%s2018] ss:$8 sm:$0xf0]
        %v2021 = vor.u32 %v2019, %v2020
        %v2022 = vmul.f32 %v2021, %v2002
        %v2024 = vrot.slane %v2021, 4
        %v2026 = vadd.f32 %v2022, %v2024
        %s2027 = scalar_lea.vmem [#allocation6], 39
        %2028 = vst.msk [vmem:[%s2027] ss:$8 sm:$0xf] %vm1823, %v2026
        %2029 = vst.msk [vmem:[%s2027] ss:$8 sm:$0x0] %vm1823, %v2026
        %s2030 = scalar_lea.vmem [#allocation3], 65
        %v2031 = vld [vmem:[%s2030] ss:$8 sm:$0xf]
        %v2032 = vld [vmem:[%s2030] ss:$8 sm:$0xf0]
        %v2033 = vor.u32 %v2031, %v2032
        %v2034 = vmul.f32 %v2033, %v2014
        %v2036 = vrot.slane %v2033, 4
        %v2038 = vadd.f32 %v2034, %v2036
        %s2039 = scalar_lea.vmem [#allocation5], 33
        %2040 = vst.msk [vmem:[%s2039] ss:$8 sm:$0xf] %vm1823, %v2038
        %2041 = vst.msk [vmem:[%s2039] ss:$8 sm:$0x0] %vm1823, %v2038
        %s2042 = scalar_lea.vmem [#allocation4], 70
        %v2043 = vld [vmem:[%s2042] ss:$8 sm:$0xf]
        %v2044 = vld [vmem:[%s2042] ss:$8 sm:$0xf0]
        %v2045 = vor.u32 %v2043, %v2044
        %v2046 = vmul.f32 %v2045, %v2026
        %v2048 = vrot.slane %v2045, 4
        %v2050 = vadd.f32 %v2046, %v2048
        %s2051 = scalar_lea.vmem [#allocation6], 38
        %2052 = vst.msk [vmem:[%s2051] ss:$8 sm:$0xf] %vm1823, %v2050
        %2053 = vst.msk [vmem:[%s2051] ss:$8 sm:$0x0] %vm1823, %v2050
        %s2054 = scalar_lea.vmem [#allocation3], 66
        %v2055 = vld [vmem:[%s2054] ss:$8 sm:$0xf]
        %v2056 = vld [vmem:[%s2054] ss:$8 sm:$0xf0]
        %v2057 = vor.u32 %v2055, %v2056
        %v2058 = vmul.f32 %v2057, %v2038
        %v2060 = vrot.slane %v2057, 4
        %v2062 = vadd.f32 %v2058, %v2060
        %s2063 = scalar_lea.vmem [#allocation5], 34
        %2064 = vst.msk [vmem:[%s2063] ss:$8 sm:$0xf] %vm1823, %v2062
        %2065 = vst.msk [vmem:[%s2063] ss:$8 sm:$0x0] %vm1823, %v2062
        %s2066 = scalar_lea.vmem [#allocation4], 69
        %v2067 = vld [vmem:[%s2066] ss:$8 sm:$0xf]
        %v2068 = vld [vmem:[%s2066] ss:$8 sm:$0xf0]
        %v2069 = vor.u32 %v2067, %v2068
        %v2070 = vmul.f32 %v2069, %v2050
        %v2072 = vrot.slane %v2069, 4
        %v2074 = vadd.f32 %v2070, %v2072
        %s2075 = scalar_lea.vmem [#allocation6], 37
        %2076 = vst.msk [vmem:[%s2075] ss:$8 sm:$0xf] %vm1823, %v2074
        %2077 = vst.msk [vmem:[%s2075] ss:$8 sm:$0x0] %vm1823, %v2074
        %s2078 = scalar_lea.vmem [#allocation3], 67
        %v2079 = vld [vmem:[%s2078] ss:$8 sm:$0xf]
        %v2080 = vld [vmem:[%s2078] ss:$8 sm:$0xf0]
        %v2081 = vor.u32 %v2079, %v2080
        %v2082 = vmul.f32 %v2081, %v2062
        %v2084 = vrot.slane %v2081, 4
        %v2086 = vadd.f32 %v2082, %v2084
        %s2087 = scalar_lea.vmem [#allocation5], 35
        %2088 = vst.msk [vmem:[%s2087] ss:$8 sm:$0xf] %vm1823, %v2086
        %2089 = vst.msk [vmem:[%s2087] ss:$8 sm:$0x0] %vm1823, %v2086
        %s2090 = scalar_lea.vmem [#allocation4], 68
        %v2091 = vld [vmem:[%s2090] ss:$8 sm:$0xf]
        %v2092 = vld [vmem:[%s2090] ss:$8 sm:$0xf0]
        %v2093 = vor.u32 %v2091, %v2092
        %v2094 = vmul.f32 %v2093, %v2074
        %v2096 = vrot.slane %v2093, 4
        %v2098 = vadd.f32 %v2094, %v2096
        %s2099 = scalar_lea.vmem [#allocation6], 36
        %2100 = vst.msk [vmem:[%s2099] ss:$8 sm:$0xf] %vm1823, %v2098
        %2101 = vst.msk [vmem:[%s2099] ss:$8 sm:$0x0] %vm1823, %v2098
        %s2102 = scalar_lea.vmem [#allocation3], 68
        %v2103 = vld [vmem:[%s2102] ss:$8 sm:$0xf]
        %v2104 = vld [vmem:[%s2102] ss:$8 sm:$0xf0]
        %v2105 = vor.u32 %v2103, %v2104
        %v2106 = vmul.f32 %v2105, %v2086
        %v2108 = vrot.slane %v2105, 4
        %v2110 = vadd.f32 %v2106, %v2108
        %s2111 = scalar_lea.vmem [#allocation5], 36
        %2112 = vst.msk [vmem:[%s2111] ss:$8 sm:$0xf] %vm1823, %v2110
        %2113 = vst.msk [vmem:[%s2111] ss:$8 sm:$0x0] %vm1823, %v2110
        %s2114 = scalar_lea.vmem [#allocation4], 67
        %v2115 = vld [vmem:[%s2114] ss:$8 sm:$0xf]
        %v2116 = vld [vmem:[%s2114] ss:$8 sm:$0xf0]
        %v2117 = vor.u32 %v2115, %v2116
        %v2118 = vmul.f32 %v2117, %v2098
        %v2120 = vrot.slane %v2117, 4
        %v2122 = vadd.f32 %v2118, %v2120
        %s2123 = scalar_lea.vmem [#allocation6], 35
        %2124 = vst.msk [vmem:[%s2123] ss:$8 sm:$0xf] %vm1823, %v2122
        %2125 = vst.msk [vmem:[%s2123] ss:$8 sm:$0x0] %vm1823, %v2122
        %s2126 = scalar_lea.vmem [#allocation3], 69
        %v2127 = vld [vmem:[%s2126] ss:$8 sm:$0xf]
        %v2128 = vld [vmem:[%s2126] ss:$8 sm:$0xf0]
        %v2129 = vor.u32 %v2127, %v2128
        %v2130 = vmul.f32 %v2129, %v2110
        %v2132 = vrot.slane %v2129, 4
        %v2134 = vadd.f32 %v2130, %v2132
        %s2135 = scalar_lea.vmem [#allocation5], 37
        %2136 = vst.msk [vmem:[%s2135] ss:$8 sm:$0xf] %vm1823, %v2134
        %2137 = vst.msk [vmem:[%s2135] ss:$8 sm:$0x0] %vm1823, %v2134
        %s2138 = scalar_lea.vmem [#allocation4], 66
        %v2139 = vld [vmem:[%s2138] ss:$8 sm:$0xf]
        %v2140 = vld [vmem:[%s2138] ss:$8 sm:$0xf0]
        %v2141 = vor.u32 %v2139, %v2140
        %v2142 = vmul.f32 %v2141, %v2122
        %v2144 = vrot.slane %v2141, 4
        %v2146 = vadd.f32 %v2142, %v2144
        %s2147 = scalar_lea.vmem [#allocation6], 34
        %2148 = vst.msk [vmem:[%s2147] ss:$8 sm:$0xf] %vm1823, %v2146
        %2149 = vst.msk [vmem:[%s2147] ss:$8 sm:$0x0] %vm1823, %v2146
        %s2150 = scalar_lea.vmem [#allocation3], 70
        %v2151 = vld [vmem:[%s2150] ss:$8 sm:$0xf]
        %v2152 = vld [vmem:[%s2150] ss:$8 sm:$0xf0]
        %v2153 = vor.u32 %v2151, %v2152
        %v2154 = vmul.f32 %v2153, %v2134
        %v2156 = vrot.slane %v2153, 4
        %v2158 = vadd.f32 %v2154, %v2156
        %s2159 = scalar_lea.vmem [#allocation5], 38
        %2160 = vst.msk [vmem:[%s2159] ss:$8 sm:$0xf] %vm1823, %v2158
        %2161 = vst.msk [vmem:[%s2159] ss:$8 sm:$0x0] %vm1823, %v2158
        %s2162 = scalar_lea.vmem [#allocation4], 65
        %v2163 = vld [vmem:[%s2162] ss:$8 sm:$0xf]
        %v2164 = vld [vmem:[%s2162] ss:$8 sm:$0xf0]
        %v2165 = vor.u32 %v2163, %v2164
        %v2166 = vmul.f32 %v2165, %v2146
        %v2168 = vrot.slane %v2165, 4
        %v2170 = vadd.f32 %v2166, %v2168
        %s2171 = scalar_lea.vmem [#allocation6], 33
        %2172 = vst.msk [vmem:[%s2171] ss:$8 sm:$0xf] %vm1823, %v2170
        %2173 = vst.msk [vmem:[%s2171] ss:$8 sm:$0x0] %vm1823, %v2170
        %s2174 = scalar_lea.vmem [#allocation3], 71
        %v2175 = vld [vmem:[%s2174] ss:$8 sm:$0xf]
        %v2176 = vld [vmem:[%s2174] ss:$8 sm:$0xf0]
        %v2177 = vor.u32 %v2175, %v2176
        %v2178 = vmul.f32 %v2177, %v2158
        %v2180 = vrot.slane %v2177, 4
        %v2182 = vadd.f32 %v2178, %v2180
        %s2183 = scalar_lea.vmem [#allocation5], 39
        %2184 = vst.msk [vmem:[%s2183] ss:$8 sm:$0xf] %vm1823, %v2182
        %2185 = vst.msk [vmem:[%s2183] ss:$8 sm:$0x0] %vm1823, %v2182
        %s2186 = scalar_lea.vmem [#allocation4], 64
        %v2187 = vld [vmem:[%s2186] ss:$8 sm:$0xf]
        %v2188 = vld [vmem:[%s2186] ss:$8 sm:$0xf0]
        %v2189 = vor.u32 %v2187, %v2188
        %v2190 = vmul.f32 %v2189, %v2170
        %v2192 = vrot.slane %v2189, 4
        %v2194 = vadd.f32 %v2190, %v2192
        %s2195 = scalar_lea.vmem [#allocation6], 32
        %2196 = vst.msk [vmem:[%s2195] ss:$8 sm:$0xf] %vm1823, %v2194
        %2197 = vst.msk [vmem:[%s2195] ss:$8 sm:$0x0] %vm1823, %v2194
        %s2198 = scalar_lea.vmem [#allocation3], 128
        %v2199 = vld [vmem:[%s2198] ss:$8 sm:$0xf]
        %v2200 = vld [vmem:[%s2198] ss:$8 sm:$0xf0]
        %v2201 = vor.u32 %v2199, %v2200
        %v2202 = vmul.f32 %v2201, %v2182
        %v2204 = vrot.slane %v2201, 4
        %v2206 = vadd.f32 %v2202, %v2204
        %s2207 = scalar_lea.vmem [#allocation5], 64
        %2208 = vst.msk [vmem:[%s2207] ss:$8 sm:$0xf] %vm1823, %v2206
        %2209 = vst.msk [vmem:[%s2207] ss:$8 sm:$0x0] %vm1823, %v2206
        %s2210 = scalar_lea.vmem [#allocation4], 7
        %v2211 = vld [vmem:[%s2210] ss:$8 sm:$0xf]
        %v2212 = vld [vmem:[%s2210] ss:$8 sm:$0xf0]
        %v2213 = vor.u32 %v2211, %v2212
        %v2214 = vmul.f32 %v2213, %v2194
        %v2216 = vrot.slane %v2213, 4
        %v2218 = vadd.f32 %v2214, %v2216
        %s2219 = scalar_lea.vmem [#allocation6], 7
        %2220 = vst.msk [vmem:[%s2219] ss:$8 sm:$0xf] %vm1823, %v2218
        %2221 = vst.msk [vmem:[%s2219] ss:$8 sm:$0x0] %vm1823, %v2218
        %s2222 = scalar_lea.vmem [#allocation3], 129
        %v2223 = vld [vmem:[%s2222] ss:$8 sm:$0xf]
        %v2224 = vld [vmem:[%s2222] ss:$8 sm:$0xf0]
        %v2225 = vor.u32 %v2223, %v2224
        %v2226 = vmul.f32 %v2225, %v2206
        %v2228 = vrot.slane %v2225, 4
        %v2230 = vadd.f32 %v2226, %v2228
        %s2231 = scalar_lea.vmem [#allocation5], 65
        %2232 = vst.msk [vmem:[%s2231] ss:$8 sm:$0xf] %vm1823, %v2230
        %2233 = vst.msk [vmem:[%s2231] ss:$8 sm:$0x0] %vm1823, %v2230
        %s2234 = scalar_lea.vmem [#allocation4], 6
        %v2235 = vld [vmem:[%s2234] ss:$8 sm:$0xf]
        %v2236 = vld [vmem:[%s2234] ss:$8 sm:$0xf0]
        %v2237 = vor.u32 %v2235, %v2236
        %v2238 = vmul.f32 %v2237, %v2218
        %v2240 = vrot.slane %v2237, 4
        %v2242 = vadd.f32 %v2238, %v2240
        %s2243 = scalar_lea.vmem [#allocation6], 6
        %2244 = vst.msk [vmem:[%s2243] ss:$8 sm:$0xf] %vm1823, %v2242
        %2245 = vst.msk [vmem:[%s2243] ss:$8 sm:$0x0] %vm1823, %v2242
        %s2246 = scalar_lea.vmem [#allocation3], 130
        %v2247 = vld [vmem:[%s2246] ss:$8 sm:$0xf]
        %v2248 = vld [vmem:[%s2246] ss:$8 sm:$0xf0]
        %v2249 = vor.u32 %v2247, %v2248
        %v2250 = vmul.f32 %v2249, %v2230
        %v2252 = vrot.slane %v2249, 4
        %v2254 = vadd.f32 %v2250, %v2252
        %s2255 = scalar_lea.vmem [#allocation5], 66
        %2256 = vst.msk [vmem:[%s2255] ss:$8 sm:$0xf] %vm1823, %v2254
        %2257 = vst.msk [vmem:[%s2255] ss:$8 sm:$0x0] %vm1823, %v2254
        %s2258 = scalar_lea.vmem [#allocation4], 5
        %v2259 = vld [vmem:[%s2258] ss:$8 sm:$0xf]
        %v2260 = vld [vmem:[%s2258] ss:$8 sm:$0xf0]
        %v2261 = vor.u32 %v2259, %v2260
        %v2262 = vmul.f32 %v2261, %v2242
        %v2264 = vrot.slane %v2261, 4
        %v2266 = vadd.f32 %v2262, %v2264
        %s2267 = scalar_lea.vmem [#allocation6], 5
        %2268 = vst.msk [vmem:[%s2267] ss:$8 sm:$0xf] %vm1823, %v2266
        %2269 = vst.msk [vmem:[%s2267] ss:$8 sm:$0x0] %vm1823, %v2266
        %s2270 = scalar_lea.vmem [#allocation3], 131
        %v2271 = vld [vmem:[%s2270] ss:$8 sm:$0xf]
        %v2272 = vld [vmem:[%s2270] ss:$8 sm:$0xf0]
        %v2273 = vor.u32 %v2271, %v2272
        %v2274 = vmul.f32 %v2273, %v2254
        %v2276 = vrot.slane %v2273, 4
        %v2278 = vadd.f32 %v2274, %v2276
        %s2279 = scalar_lea.vmem [#allocation5], 67
        %2280 = vst.msk [vmem:[%s2279] ss:$8 sm:$0xf] %vm1823, %v2278
        %2281 = vst.msk [vmem:[%s2279] ss:$8 sm:$0x0] %vm1823, %v2278
        %s2282 = scalar_lea.vmem [#allocation4], 4
        %v2283 = vld [vmem:[%s2282] ss:$8 sm:$0xf]
        %v2284 = vld [vmem:[%s2282] ss:$8 sm:$0xf0]
        %v2285 = vor.u32 %v2283, %v2284
        %v2286 = vmul.f32 %v2285, %v2266
        %v2288 = vrot.slane %v2285, 4
        %v2290 = vadd.f32 %v2286, %v2288
        %s2291 = scalar_lea.vmem [#allocation6], 4
        %2292 = vst.msk [vmem:[%s2291] ss:$8 sm:$0xf] %vm1823, %v2290
        %2293 = vst.msk [vmem:[%s2291] ss:$8 sm:$0x0] %vm1823, %v2290
        %s2294 = scalar_lea.vmem [#allocation3], 132
        %v2295 = vld [vmem:[%s2294] ss:$8 sm:$0xf]
        %v2296 = vld [vmem:[%s2294] ss:$8 sm:$0xf0]
        %v2297 = vor.u32 %v2295, %v2296
        %v2298 = vmul.f32 %v2297, %v2278
        %v2300 = vrot.slane %v2297, 4
        %v2302 = vadd.f32 %v2298, %v2300
        %s2303 = scalar_lea.vmem [#allocation5], 68
        %2304 = vst.msk [vmem:[%s2303] ss:$8 sm:$0xf] %vm1823, %v2302
        %2305 = vst.msk [vmem:[%s2303] ss:$8 sm:$0x0] %vm1823, %v2302
        %s2306 = scalar_lea.vmem [#allocation4], 3
        %v2307 = vld [vmem:[%s2306] ss:$8 sm:$0xf]
        %v2308 = vld [vmem:[%s2306] ss:$8 sm:$0xf0]
        %v2309 = vor.u32 %v2307, %v2308
        %v2310 = vmul.f32 %v2309, %v2290
        %v2312 = vrot.slane %v2309, 4
        %v2314 = vadd.f32 %v2310, %v2312
        %s2315 = scalar_lea.vmem [#allocation6], 3
        %2316 = vst.msk [vmem:[%s2315] ss:$8 sm:$0xf] %vm1823, %v2314
        %2317 = vst.msk [vmem:[%s2315] ss:$8 sm:$0x0] %vm1823, %v2314
        %s2318 = scalar_lea.vmem [#allocation3], 133
        %v2319 = vld [vmem:[%s2318] ss:$8 sm:$0xf]
        %v2320 = vld [vmem:[%s2318] ss:$8 sm:$0xf0]
        %v2321 = vor.u32 %v2319, %v2320
        %v2322 = vmul.f32 %v2321, %v2302
        %v2324 = vrot.slane %v2321, 4
        %v2326 = vadd.f32 %v2322, %v2324
        %s2327 = scalar_lea.vmem [#allocation5], 69
        %2328 = vst.msk [vmem:[%s2327] ss:$8 sm:$0xf] %vm1823, %v2326
        %2329 = vst.msk [vmem:[%s2327] ss:$8 sm:$0x0] %vm1823, %v2326
        %s2330 = scalar_lea.vmem [#allocation4], 2
        %v2331 = vld [vmem:[%s2330] ss:$8 sm:$0xf]
        %v2332 = vld [vmem:[%s2330] ss:$8 sm:$0xf0]
        %v2333 = vor.u32 %v2331, %v2332
        %v2334 = vmul.f32 %v2333, %v2314
        %v2336 = vrot.slane %v2333, 4
        %v2338 = vadd.f32 %v2334, %v2336
        %s2339 = scalar_lea.vmem [#allocation6], 2
        %2340 = vst.msk [vmem:[%s2339] ss:$8 sm:$0xf] %vm1823, %v2338
        %2341 = vst.msk [vmem:[%s2339] ss:$8 sm:$0x0] %vm1823, %v2338
        %s2342 = scalar_lea.vmem [#allocation3], 134
        %v2343 = vld [vmem:[%s2342] ss:$8 sm:$0xf]
        %v2344 = vld [vmem:[%s2342] ss:$8 sm:$0xf0]
        %v2345 = vor.u32 %v2343, %v2344
        %v2346 = vmul.f32 %v2345, %v2326
        %v2348 = vrot.slane %v2345, 4
        %v2350 = vadd.f32 %v2346, %v2348
        %s2351 = scalar_lea.vmem [#allocation5], 70
        %2352 = vst.msk [vmem:[%s2351] ss:$8 sm:$0xf] %vm1823, %v2350
        %2353 = vst.msk [vmem:[%s2351] ss:$8 sm:$0x0] %vm1823, %v2350
        %s2354 = scalar_lea.vmem [#allocation4], 1
        %v2355 = vld [vmem:[%s2354] ss:$8 sm:$0xf]
        %v2356 = vld [vmem:[%s2354] ss:$8 sm:$0xf0]
        %v2357 = vor.u32 %v2355, %v2356
        %v2358 = vmul.f32 %v2357, %v2338
        %v2360 = vrot.slane %v2357, 4
        %v2362 = vadd.f32 %v2358, %v2360
        %s2363 = scalar_lea.vmem [#allocation6], 1
        %2364 = vst.msk [vmem:[%s2363] ss:$8 sm:$0xf] %vm1823, %v2362
        %2365 = vst.msk [vmem:[%s2363] ss:$8 sm:$0x0] %vm1823, %v2362
        %s2366 = scalar_lea.vmem [#allocation3], 135
        %v2367 = vld [vmem:[%s2366] ss:$8 sm:$0xf]
        %v2368 = vld [vmem:[%s2366] ss:$8 sm:$0xf0]
        %v2369 = vor.u32 %v2367, %v2368
        %v2370 = vmul.f32 %v2369, %v2350
        %v2372 = vrot.slane %v2369, 4
        %v2374 = vadd.f32 %v2370, %v2372
        %s2375 = scalar_lea.vmem [#allocation5], 71
        %2376 = vst.msk [vmem:[%s2375] ss:$8 sm:$0xf] %vm1823, %v2374
        %2377 = vst.msk [vmem:[%s2375] ss:$8 sm:$0x0] %vm1823, %v2374
        %v2378 = vld [vmem:[#allocation4] ss:$8 sm:$0xf]
        %v2379 = vld [vmem:[#allocation4] ss:$8 sm:$0xf0]
        %v2380 = vor.u32 %v2378, %v2379
        %v2381 = vmul.f32 %v2380, %v2362
        %v2383 = vrot.slane %v2380, 4
        %v2385 = vadd.f32 %v2381, %v2383
        %2386 = vst.msk [vmem:[#allocation6] ss:$8 sm:$0xf] %vm1823, %v2385
        %2387 = vst.msk [vmem:[#allocation6] ss:$8 sm:$0x0] %vm1823, %v2385
        %v2388 = vld [vmem:[%s625] sm:$0x1]
        %v2390 = vlaneseq
        %v2391 = vshrl.u32 %v2390, 7
        %v2392 = vsub.s32 0, %v2391
        %v2393 = vrot.slane %v2388, %v2392
        %v2395 = vmul.f32 %v1019, %v2393
        %v2396 = vmul.f32 %v1020, %v2393
        %v2397 = vmul.f32 %v1021, %v2393
        %v2398 = vld [vmem:[#allocation5] sm:$0xff]
        %v2399 = vld [vmem:[#allocation5 + $0x20] sm:$0xff]
        %v2400 = vld [vmem:[#allocation5 + $0x40] sm:$0xff]
        %2401 = vset.pattern.permute.xlu0 8
        %2402 = vperm.xlu0 %2401, %v1135
        %v2403 = vpop.permute.xlu0 %2402
        %2405 = vset.pattern.permute.xlu0 8
        %2406 = vperm.xlu0 %2405, %v1141
        %v2407 = vpop.permute.xlu0 %2406
        %2409 = vset.pattern.permute.xlu0 8
        %2410 = vperm.xlu0 %2409, %v1147
        %v2411 = vpop.permute.xlu0 %2410
        %v2413 = vmul.f32 %v2403, %v2398
        %v2414 = vmul.f32 %v2407, %v2399
        %v2415 = vmul.f32 %v2411, %v2400
        %v2416 = vadd.f32 %v2395, %v2413
        %v2417 = vadd.f32 %v2396, %v2414
        %v2418 = vadd.f32 %v2397, %v2415
        %v2419 = vld [vmem:[#allocation6] sm:$0xff]
        %v2420 = vld [vmem:[#allocation6 + $0x20] sm:$0xff]
        %v2421 = vld [vmem:[#allocation6 + $0x40] sm:$0xff]
        %2422 = vset.pattern.permute.xlu0 24
        %2423 = vperm.xlu0 %2422, %v1135
        %v2424 = vpop.permute.xlu0 %2423
        %2426 = vset.pattern.permute.xlu0 24
        %2427 = vperm.xlu0 %2426, %v1141
        %v2428 = vpop.permute.xlu0 %2427
        %2430 = vset.pattern.permute.xlu0 24
        %2431 = vperm.xlu0 %2430, %v1147
        %v2432 = vpop.permute.xlu0 %2431
        %v2434 = vmul.f32 %v2424, %v2419
        %v2435 = vmul.f32 %v2428, %v2420
        %v2436 = vmul.f32 %v2432, %v2421
        %2440 = vrot.lane.b32.xlu0 %v2434, 64
        %v2441 = vpop.permute.xlu0 %2440
        %2442 = vrot.lane.b32.xlu0 %v2435, 64
        %v2443 = vpop.permute.xlu0 %2442
        %2444 = vrot.lane.b32.xlu0 %v2436, 64
        %v2445 = vpop.permute.xlu0 %2444
        %v2449 = vadd.f32 %v2395, %v2441
        %v2450 = vadd.f32 %v2396, %v2443
        %v2451 = vadd.f32 %v2397, %v2445
        %2452 = vset.pattern.permute.xlu0 9
        %2453 = vperm.xlu0 %2452, %v1135
        %v2454 = vpop.permute.xlu0 %2453
        %2456 = vset.pattern.permute.xlu0 9
        %2457 = vperm.xlu0 %2456, %v1141
        %v2458 = vpop.permute.xlu0 %2457
        %2460 = vset.pattern.permute.xlu0 9
        %2461 = vperm.xlu0 %2460, %v1147
        %v2462 = vpop.permute.xlu0 %2461
        %v2464 = vmul.f32 %v2454, %v2398
        %v2465 = vmul.f32 %v2458, %v2399
        %v2466 = vmul.f32 %v2462, %v2400
        %2470 = vrot.lane.b32.xlu0 %v2464, 64
        %v2471 = vpop.permute.xlu0 %2470
        %2472 = vrot.lane.b32.xlu0 %v2465, 64
        %v2473 = vpop.permute.xlu0 %2472
        %2474 = vrot.lane.b32.xlu0 %v2466, 64
        %v2475 = vpop.permute.xlu0 %2474
        %v2479 = vadd.f32 %v2416, %v2471
        %v2480 = vadd.f32 %v2417, %v2473
        %v2481 = vadd.f32 %v2418, %v2475
        %2482 = vset.pattern.permute.xlu0 25
        %2483 = vperm.xlu0 %2482, %v1135
        %v2484 = vpop.permute.xlu0 %2483
        %2486 = vset.pattern.permute.xlu0 25
        %2487 = vperm.xlu0 %2486, %v1141
        %v2488 = vpop.permute.xlu0 %2487
        %2490 = vset.pattern.permute.xlu0 25
        %2491 = vperm.xlu0 %2490, %v1147
        %v2492 = vpop.permute.xlu0 %2491
        %v2494 = vmul.f32 %v2484, %v2419
        %v2495 = vmul.f32 %v2488, %v2420
        %v2496 = vmul.f32 %v2492, %v2421
        %v2497 = vadd.f32 %v2449, %v2494
        %v2498 = vadd.f32 %v2450, %v2495
        %v2499 = vadd.f32 %v2451, %v2496
        %v2500 = vld [vmem:[#allocation5 + $0x8] sm:$0xff]
        %v2501 = vld [vmem:[#allocation5 + $0x28] sm:$0xff]
        %v2502 = vld [vmem:[#allocation5 + $0x48] sm:$0xff]
        %2503 = vset.pattern.permute.xlu0 10
        %2504 = vperm.xlu0 %2503, %v1135
        %v2505 = vpop.permute.xlu0 %2504
        %2507 = vset.pattern.permute.xlu0 10
        %2508 = vperm.xlu0 %2507, %v1141
        %v2509 = vpop.permute.xlu0 %2508
        %2511 = vset.pattern.permute.xlu0 10
        %2512 = vperm.xlu0 %2511, %v1147
        %v2513 = vpop.permute.xlu0 %2512
        %v2515 = vmul.f32 %v2505, %v2500
        %v2516 = vmul.f32 %v2509, %v2501
        %v2517 = vmul.f32 %v2513, %v2502
        %v2518 = vadd.f32 %v2479, %v2515
        %v2519 = vadd.f32 %v2480, %v2516
        %v2520 = vadd.f32 %v2481, %v2517
        %v2521 = vld [vmem:[#allocation6 + $0x8] sm:$0xff]
        %v2522 = vld [vmem:[#allocation6 + $0x28] sm:$0xff]
        %v2523 = vld [vmem:[#allocation6 + $0x48] sm:$0xff]
        %2524 = vset.pattern.permute.xlu0 26
        %2525 = vperm.xlu0 %2524, %v1135
        %v2526 = vpop.permute.xlu0 %2525
        %2528 = vset.pattern.permute.xlu0 26
        %2529 = vperm.xlu0 %2528, %v1141
        %v2530 = vpop.permute.xlu0 %2529
        %2532 = vset.pattern.permute.xlu0 26
        %2533 = vperm.xlu0 %2532, %v1147
        %v2534 = vpop.permute.xlu0 %2533
        %v2536 = vmul.f32 %v2526, %v2521
        %v2537 = vmul.f32 %v2530, %v2522
        %v2538 = vmul.f32 %v2534, %v2523
        %2542 = vrot.lane.b32.xlu0 %v2536, 64
        %v2543 = vpop.permute.xlu0 %2542
        %2544 = vrot.lane.b32.xlu0 %v2537, 64
        %v2545 = vpop.permute.xlu0 %2544
        %2546 = vrot.lane.b32.xlu0 %v2538, 64
        %v2547 = vpop.permute.xlu0 %2546
        %v2551 = vadd.f32 %v2497, %v2543
        %v2552 = vadd.f32 %v2498, %v2545
        %v2553 = vadd.f32 %v2499, %v2547
        %2554 = vset.pattern.permute.xlu0 11
        %2555 = vperm.xlu0 %2554, %v1135
        %v2556 = vpop.permute.xlu0 %2555
        %2558 = vset.pattern.permute.xlu0 11
        %2559 = vperm.xlu0 %2558, %v1141
        %v2560 = vpop.permute.xlu0 %2559
        %2562 = vset.pattern.permute.xlu0 11
        %2563 = vperm.xlu0 %2562, %v1147
        %v2564 = vpop.permute.xlu0 %2563
        %v2566 = vmul.f32 %v2556, %v2500
        %v2567 = vmul.f32 %v2560, %v2501
        %v2568 = vmul.f32 %v2564, %v2502
        %2572 = vrot.lane.b32.xlu0 %v2566, 64
        %v2573 = vpop.permute.xlu0 %2572
        %2574 = vrot.lane.b32.xlu0 %v2567, 64
        %v2575 = vpop.permute.xlu0 %2574
        %2576 = vrot.lane.b32.xlu0 %v2568, 64
        %v2577 = vpop.permute.xlu0 %2576
        %v2581 = vadd.f32 %v2518, %v2573
        %v2582 = vadd.f32 %v2519, %v2575
        %v2583 = vadd.f32 %v2520, %v2577
        %2584 = vset.pattern.permute.xlu0 27
        %2585 = vperm.xlu0 %2584, %v1135
        %v2586 = vpop.permute.xlu0 %2585
        %2588 = vset.pattern.permute.xlu0 27
        %2589 = vperm.xlu0 %2588, %v1141
        %v2590 = vpop.permute.xlu0 %2589
        %2592 = vset.pattern.permute.xlu0 27
        %2593 = vperm.xlu0 %2592, %v1147
        %v2594 = vpop.permute.xlu0 %2593
        %v2596 = vmul.f32 %v2586, %v2521
        %v2597 = vmul.f32 %v2590, %v2522
        %v2598 = vmul.f32 %v2594, %v2523
        %v2599 = vadd.f32 %v2551, %v2596
        %v2600 = vadd.f32 %v2552, %v2597
        %v2601 = vadd.f32 %v2553, %v2598
        %v2602 = vld [vmem:[#allocation5 + $0x10] sm:$0xff]
        %v2603 = vld [vmem:[#allocation5 + $0x30] sm:$0xff]
        %v2604 = vld [vmem:[#allocation5 + $0x50] sm:$0xff]
        %2605 = vset.pattern.permute.xlu0 12
        %2606 = vperm.xlu0 %2605, %v1135
        %v2607 = vpop.permute.xlu0 %2606
        %2609 = vset.pattern.permute.xlu0 12
        %2610 = vperm.xlu0 %2609, %v1141
        %v2611 = vpop.permute.xlu0 %2610
        %2613 = vset.pattern.permute.xlu0 12
        %2614 = vperm.xlu0 %2613, %v1147
        %v2615 = vpop.permute.xlu0 %2614
        %v2617 = vmul.f32 %v2607, %v2602
        %v2618 = vmul.f32 %v2611, %v2603
        %v2619 = vmul.f32 %v2615, %v2604
        %v2620 = vadd.f32 %v2581, %v2617
        %v2621 = vadd.f32 %v2582, %v2618
        %v2622 = vadd.f32 %v2583, %v2619
        %v2623 = vld [vmem:[#allocation6 + $0x10] sm:$0xff]
        %v2624 = vld [vmem:[#allocation6 + $0x30] sm:$0xff]
        %v2625 = vld [vmem:[#allocation6 + $0x50] sm:$0xff]
        %2626 = vset.pattern.permute.xlu0 28
        %2627 = vperm.xlu0 %2626, %v1135
        %v2628 = vpop.permute.xlu0 %2627
        %2630 = vset.pattern.permute.xlu0 28
        %2631 = vperm.xlu0 %2630, %v1141
        %v2632 = vpop.permute.xlu0 %2631
        %2634 = vset.pattern.permute.xlu0 28
        %2635 = vperm.xlu0 %2634, %v1147
        %v2636 = vpop.permute.xlu0 %2635
        %v2638 = vmul.f32 %v2628, %v2623
        %v2639 = vmul.f32 %v2632, %v2624
        %v2640 = vmul.f32 %v2636, %v2625
        %2644 = vrot.lane.b32.xlu0 %v2638, 64
        %v2645 = vpop.permute.xlu0 %2644
        %2646 = vrot.lane.b32.xlu0 %v2639, 64
        %v2647 = vpop.permute.xlu0 %2646
        %2648 = vrot.lane.b32.xlu0 %v2640, 64
        %v2649 = vpop.permute.xlu0 %2648
        %v2653 = vadd.f32 %v2599, %v2645
        %v2654 = vadd.f32 %v2600, %v2647
        %v2655 = vadd.f32 %v2601, %v2649
        %2656 = vset.pattern.permute.xlu0 13
        %2657 = vperm.xlu0 %2656, %v1135
        %v2658 = vpop.permute.xlu0 %2657
        %2660 = vset.pattern.permute.xlu0 13
        %2661 = vperm.xlu0 %2660, %v1141
        %v2662 = vpop.permute.xlu0 %2661
        %2664 = vset.pattern.permute.xlu0 13
        %2665 = vperm.xlu0 %2664, %v1147
        %v2666 = vpop.permute.xlu0 %2665
        %v2668 = vmul.f32 %v2658, %v2602
        %v2669 = vmul.f32 %v2662, %v2603
        %v2670 = vmul.f32 %v2666, %v2604
        %2674 = vrot.lane.b32.xlu0 %v2668, 64
        %v2675 = vpop.permute.xlu0 %2674
        %2676 = vrot.lane.b32.xlu0 %v2669, 64
        %v2677 = vpop.permute.xlu0 %2676
        %2678 = vrot.lane.b32.xlu0 %v2670, 64
        %v2679 = vpop.permute.xlu0 %2678
        %v2683 = vadd.f32 %v2620, %v2675
        %v2684 = vadd.f32 %v2621, %v2677
        %v2685 = vadd.f32 %v2622, %v2679
        %2686 = vset.pattern.permute.xlu0 29
        %2687 = vperm.xlu0 %2686, %v1135
        %v2688 = vpop.permute.xlu0 %2687
        %2690 = vset.pattern.permute.xlu0 29
        %2691 = vperm.xlu0 %2690, %v1141
        %v2692 = vpop.permute.xlu0 %2691
        %2694 = vset.pattern.permute.xlu0 29
        %2695 = vperm.xlu0 %2694, %v1147
        %v2696 = vpop.permute.xlu0 %2695
        %v2698 = vmul.f32 %v2688, %v2623
        %v2699 = vmul.f32 %v2692, %v2624
        %v2700 = vmul.f32 %v2696, %v2625
        %v2701 = vadd.f32 %v2653, %v2698
        %v2702 = vadd.f32 %v2654, %v2699
        %v2703 = vadd.f32 %v2655, %v2700
        %v2704 = vld [vmem:[#allocation5 + $0x18] sm:$0xff]
        %v2705 = vld [vmem:[#allocation5 + $0x38] sm:$0xff]
        %v2706 = vld [vmem:[#allocation5 + $0x58] sm:$0xff]
        %2707 = vset.pattern.permute.xlu0 14
        %2708 = vperm.xlu0 %2707, %v1135
        %v2709 = vpop.permute.xlu0 %2708
        %2711 = vset.pattern.permute.xlu0 14
        %2712 = vperm.xlu0 %2711, %v1141
        %v2713 = vpop.permute.xlu0 %2712
        %2715 = vset.pattern.permute.xlu0 14
        %2716 = vperm.xlu0 %2715, %v1147
        %v2717 = vpop.permute.xlu0 %2716
        %v2719 = vmul.f32 %v2709, %v2704
        %v2720 = vmul.f32 %v2713, %v2705
        %v2721 = vmul.f32 %v2717, %v2706
        %v2722 = vadd.f32 %v2683, %v2719
        %v2723 = vadd.f32 %v2684, %v2720
        %v2724 = vadd.f32 %v2685, %v2721
        %v2725 = vld [vmem:[#allocation6 + $0x18] sm:$0xff]
        %v2726 = vld [vmem:[#allocation6 + $0x38] sm:$0xff]
        %v2727 = vld [vmem:[#allocation6 + $0x58] sm:$0xff]
        %2728 = vset.pattern.permute.xlu0 30
        %2729 = vperm.xlu0 %2728, %v1135
        %v2730 = vpop.permute.xlu0 %2729
        %2732 = vset.pattern.permute.xlu0 30
        %2733 = vperm.xlu0 %2732, %v1141
        %v2734 = vpop.permute.xlu0 %2733
        %2736 = vset.pattern.permute.xlu0 30
        %2737 = vperm.xlu0 %2736, %v1147
        %v2738 = vpop.permute.xlu0 %2737
        %v2740 = vmul.f32 %v2730, %v2725
        %v2741 = vmul.f32 %v2734, %v2726
        %v2742 = vmul.f32 %v2738, %v2727
        %2746 = vrot.lane.b32.xlu0 %v2740, 64
        %v2747 = vpop.permute.xlu0 %2746
        %2748 = vrot.lane.b32.xlu0 %v2741, 64
        %v2749 = vpop.permute.xlu0 %2748
        %2750 = vrot.lane.b32.xlu0 %v2742, 64
        %v2751 = vpop.permute.xlu0 %2750
        %v2755 = vadd.f32 %v2701, %v2747
        %v2756 = vadd.f32 %v2702, %v2749
        %v2757 = vadd.f32 %v2703, %v2751
        %2758 = vset.pattern.permute.xlu0 15
        %2759 = vperm.xlu0 %2758, %v1135
        %v2760 = vpop.permute.xlu0 %2759
        %2762 = vset.pattern.permute.xlu0 15
        %2763 = vperm.xlu0 %2762, %v1141
        %v2764 = vpop.permute.xlu0 %2763
        %2766 = vset.pattern.permute.xlu0 15
        %2767 = vperm.xlu0 %2766, %v1147
        %v2768 = vpop.permute.xlu0 %2767
        %v2770 = vmul.f32 %v2760, %v2704
        %v2771 = vmul.f32 %v2764, %v2705
        %v2772 = vmul.f32 %v2768, %v2706
        %2776 = vrot.lane.b32.xlu0 %v2770, 64
        %v2777 = vpop.permute.xlu0 %2776
        %2778 = vrot.lane.b32.xlu0 %v2771, 64
        %v2779 = vpop.permute.xlu0 %2778
        %2780 = vrot.lane.b32.xlu0 %v2772, 64
        %v2781 = vpop.permute.xlu0 %2780
        %v2785 = vadd.f32 %v2722, %v2777
        %v2786 = vadd.f32 %v2723, %v2779
        %v2787 = vadd.f32 %v2724, %v2781
        %2788 = vset.pattern.permute.xlu0 31
        %2789 = vperm.xlu0 %2788, %v1135
        %v2790 = vpop.permute.xlu0 %2789
        %2792 = vset.pattern.permute.xlu0 31
        %2793 = vperm.xlu0 %2792, %v1141
        %v2794 = vpop.permute.xlu0 %2793
        %2796 = vset.pattern.permute.xlu0 31
        %2797 = vperm.xlu0 %2796, %v1147
        %v2798 = vpop.permute.xlu0 %2797
        %v2800 = vmul.f32 %v2790, %v2725
        %v2801 = vmul.f32 %v2794, %v2726
        %v2802 = vmul.f32 %v2798, %v2727
        %v2803 = vadd.f32 %v2755, %v2800
        %v2804 = vadd.f32 %v2756, %v2801
        %v2805 = vadd.f32 %v2757, %v2802
        %v2806 = vsub.f32 0.0, %v900
        %v2807 = vsub.f32 0.0, %v905
        %v2808 = vsub.f32 0.0, %v910
        %v2809 = vmul.f32 %v2806, 1.442695
        %v2810 = vpow.pop %v2809
        %v2811 = vmul.f32 %v2807, 1.442695
        %v2812 = vpow.pop %v2811
        %v2813 = vmul.f32 %v2808, 1.442695
        %v2814 = vpow.pop %v2813
        %v2815 = vadd.f32 %v2810, 1.0
        %v2816 = vadd.f32 %v2812, 1.0
        %v2817 = vadd.f32 %v2814, 1.0
        %v2818 = vrcp.pop %v2815
        %v2819 = vmul.f32 1.0, %v2818
        %v2820 = vrcp.pop %v2816
        %v2821 = vmul.f32 1.0, %v2820
        %v2822 = vrcp.pop %v2817
        %v2823 = vmul.f32 1.0, %v2822
        %v2824 = vmul.f32 %v900, %v2819
        %v2825 = vmul.f32 %v905, %v2821
        %v2826 = vmul.f32 %v910, %v2823
        %2830 = vrot.lane.b32.xlu0 %v2803, 64
        %v2831 = vpop.permute.xlu0 %2830
        %2832 = vrot.lane.b32.xlu0 %v2804, 64
        %v2833 = vpop.permute.xlu0 %2832
        %2834 = vrot.lane.b32.xlu0 %v2805, 64
        %v2835 = vpop.permute.xlu0 %2834
        %v2839 = vadd.f32 %v2785, %v2831
        %v2840 = vadd.f32 %v2786, %v2833
        %v2841 = vadd.f32 %v2787, %v2835
        %2845 = vrot.lane.b32.xlu0 %v2824, 64
        %v2846 = vpop.permute.xlu0 %2845
        %2847 = vrot.lane.b32.xlu0 %v2825, 64
        %v2848 = vpop.permute.xlu0 %2847
        %2849 = vrot.lane.b32.xlu0 %v2826, 64
        %v2850 = vpop.permute.xlu0 %2849
        %v2854 = vmul.f32 %v2839, %v2846
        %v2855 = vmul.f32 %v2840, %v2848
        %v2856 = vmul.f32 %v2841, %v2850
        %v2857 = vld [vmem:[%s630] sm:$0xff]
        %v2858 = vld [vmem:[%s630 + $0x8] sm:$0xff]
        %v2859 = vld [vmem:[%s630 + $0x10] sm:$0xff]
        %v2860 = vld [vmem:[%s630 + $0x18] sm:$0xff]
        %v2861 = vld [vmem:[%s630 + $0x20] sm:$0xff]
        %v2862 = vld [vmem:[%s630 + $0x28] sm:$0xff]
        %v2863 = vld [vmem:[%s630 + $0x30] sm:$0xff]
        %v2864 = vld [vmem:[%s630 + $0x38] sm:$0xff]
        %v2866 = vsel %vm915, %v2854, 0
        %v2869 = vsel %vm915, %v2855, 0
        %v2872 = vsel %vm915, %v2856, 0
        %2874 = vmatprep.subr.mxu0 0.0
        %2875 = vmatpush1.msra.mxu0 0.0
        %2876 = vmatprep.subr.mxu0 0.0
        %2877 = vmatpush1.msra.mxu0 0.0
        %2878 = vmatprep.subr.mxu0 0.0
        %2879 = vmatpush1.msra.mxu0 0.0
        %2880 = vmatprep.subr.mxu0 0.0
        %2881 = vmatpush1.msra.mxu0 0.0
        %2882 = vmatprep.subr.mxu0 0.0
        %2883 = vmatpush1.msra.mxu0 0.0
        %2884 = vmatprep.subr.mxu0 0.0
        %2885 = vmatpush1.msra.mxu0 0.0
        %2886 = vmatprep.subr.mxu0 0.0
        %2887 = vmatpush1.msra.mxu0 0.0
        %2888 = vmatprep.subr.mxu0 0.0
        %2889 = vmatpush1.msra.mxu0 0.0
        %2890 = vmatprep.subr.mxu0 0.0
        %2891 = vmatpush1.msra.mxu0 %v2864
        %2892 = vmatprep.subr.mxu0 0.0
        %2893 = vmatpush1.msra.mxu0 %v2863
        %2894 = vmatprep.subr.mxu0 0.0
        %2895 = vmatpush1.msra.mxu0 %v2862
        %2896 = vmatprep.subr.mxu0 0.0
        %2897 = vmatpush1.msra.mxu0 %v2861
        %2898 = vmatprep.subr.mxu0 0.0
        %2899 = vmatpush1.msra.mxu0 %v2860
        %2900 = vmatprep.subr.mxu0 0.0
        %2901 = vmatpush1.msra.mxu0 %v2859
        %2902 = vmatprep.subr.mxu0 0.0
        %2903 = vmatpush1.msra.mxu0 %v2858
        %2904 = vmatprep.subr.mxu0 0.0
        %2905 = vmatpush1.msra.mxu0 %v2857
        %2906 = vmatprep.subr.mxu0 0.0
        %2907 = vmatpush2.msra.mxu0 0.0
        %2908 = vmatprep.subr.mxu0 0.0
        %2909 = vmatpush2.msra.mxu0 0.0
        %2910 = vmatprep.subr.mxu0 0.0
        %2911 = vmatpush2.msra.mxu0 0.0
        %2912 = vmatprep.subr.mxu0 0.0
        %2913 = vmatpush2.msra.mxu0 0.0
        %2914 = vmatprep.subr.mxu0 0.0
        %2915 = vmatpush2.msra.mxu0 0.0
        %2916 = vmatprep.subr.mxu0 0.0
        %2917 = vmatpush2.msra.mxu0 0.0
        %2918 = vmatprep.subr.mxu0 0.0
        %2919 = vmatpush2.msra.mxu0 0.0
        %2920 = vmatprep.subr.mxu0 0.0
        %2921 = vmatpush2.msra.mxu0 0.0
        %2922 = vmatprep.subr.mxu0 0.0
        %2923 = vmatpush2.msra.mxu0 0.0
        %2924 = vmatprep.subr.mxu0 0.0
        %2925 = vmatpush2.msra.mxu0 0.0
        %2926 = vmatprep.subr.mxu0 0.0
        %2927 = vmatpush2.msra.mxu0 0.0
        %2928 = vmatprep.subr.mxu0 0.0
        %2929 = vmatpush2.msra.mxu0 0.0
        %2930 = vmatprep.subr.mxu0 0.0
        %2931 = vmatpush2.msra.mxu0 0.0
        %2932 = vmatprep.subr.mxu0 0.0
        %2933 = vmatpush2.msra.mxu0 0.0
        %2934 = vmatprep.subr.mxu0 0.0
        %2935 = vmatpush2.msra.mxu0 0.0
        %2936 = vmatprep.subr.mxu0 0.0
        %2937 = vmatpush2.msra.mxu0 0.0
        %2938 = vmatprep.mubr.f32.mxu0 0.0
        %2939 = vmatmul.mubr.f32.gmra.mxu0 %v2866
        %v2940 = vpop.f32.mrf.mxu0
        %v2941 = vadd.f32 0.0, %v2940
        %v2942 = vpop.f32.mrf.mxu0
        %2943 = vmatprep.mubr.f32.mxu0 0.0
        %2944 = vmatmul.mubr.f32.gmra.mxu0 %v2869
        %v2945 = vpop.f32.mrf.mxu0
        %v2946 = vadd.f32 0.0, %v2945
        %v2947 = vpop.f32.mrf.mxu0
        %2948 = vmatprep.mubr.f32.mxu0 0.0
        %2949 = vmatmul.mubr.f32.gmra.mxu0 %v2872
        %v2950 = vpop.f32.mrf.mxu0
        %v2951 = vadd.f32 0.0, %v2950
        %v2952 = vpop.f32.mrf.mxu0
        %2953 = vdwg.mxu0
        %2954 = vst.msk [vmem:[#allocation7] sm:$0xff] %vm787, %v2941
        %2955 = vst.msk [vmem:[#allocation7 + $0x8] sm:$0xff] %vm787, %v2946
        %2956 = vst.msk [vmem:[#allocation7 + $0x10] sm:$0xff] %vm787, %v2951
        %2957 = vst.msk [vmem:[#allocation8] sm:$0xff] %vm787, %v781
        %2958 = vst.msk [vmem:[#allocation8 + $0x8] sm:$0xff] %vm787, %v782
        %2959 = vst.msk [vmem:[#allocation8 + $0x10] sm:$0xff] %vm787, %v783
        %p2960 = scmp.eq.s32.totalorder %s33, 1
        // Predicated region
        $region81: #{_lambda_.1} parent=75 // pred_check
          %p2961 = pneg %p2960
        $region82: #{_lambda_.1} parent=75 // pred_check_branch
          %2963 = sbr.rel (%p2961) target = $region84
        $region83: #{_lambda_.1} parent=75 // pred_region
          %v2964 = vadd.f32 %v2941, %v781
          %v2965 = vadd.f32 %v2946, %v782
          %v2966 = vadd.f32 %v2951, %v783
          %v2967 = vmul.f32 %v2964, %v2964
          %v2968 = vmul.f32 %v2965, %v2965
          %v2969 = vmul.f32 %v2966, %v2966
          %v2970 = vsel %vm787, %v2967, 0.0
          %2971 = vadd.xlane.f32.xlu0 %v2970
          %v2972 = vpop.xlane.xlu0 %2971
          %v2973 = vsel %vm787, %v2968, 0.0
          %2974 = vadd.xlane.f32.xlu0 %v2973
          %v2975 = vpop.xlane.xlu0 %2974
          %v2976 = vsel %vm787, %v2969, 0.0
          %2977 = vadd.xlane.f32.xlu0 %v2976
          %v2978 = vpop.xlane.xlu0 %2977
          %v2979 = vmul.f32 %v2972, %v797
          %v2980 = vmul.f32 %v2975, %v797
          %v2981 = vmul.f32 %v2978, %v797
          %v2982 = vadd.f32 %v2979, 1e-05
          %v2983 = vadd.f32 %v2980, 1e-05
          %v2984 = vadd.f32 %v2981, 1e-05
          %v2985 = vrsqrt.pop %v2982
          %v2986 = vrsqrt.pop %v2983
          %v2987 = vrsqrt.pop %v2984
          %v2988 = vmul.f32 %v2964, %v2985
          %v2989 = vmul.f32 %v2965, %v2986
          %v2990 = vmul.f32 %v2966, %v2987
          %v2991 = vld [vmem:[%s4] sm:$0x1]
          %v2993 = vlaneseq
          %v2994 = vshrl.u32 %v2993, 7
          %v2995 = vsub.s32 0, %v2994
          %v2996 = vrot.slane %v2991, %v2995
          %v2998 = vmul.f32 %v2988, %v2996
          %v2999 = vmul.f32 %v2989, %v2996
          %v3000 = vmul.f32 %v2990, %v2996
          %3001 = vst.msk [vmem:[%s589] sm:$0xff] %vm787, %v2998
          %3002 = vst.msk [vmem:[%s589 + $0x8] sm:$0xff] %vm787, %v2999
          %3003 = vst.msk [vmem:[%s589 + $0x10] sm:$0xff] %vm787, %v3000
        $region84: #{_lambda_.1} parent=75 // pred_fallthru
          _
        %s3004 = sand.u32 %s392, 1
        %s3005 = scalar_lea.sflag [#allocation10], %s3004
        %s3006 = sand.u32 %s392, 1
        %s3007 = smul.addr %s3006, 24
        %s3008 = scalar_lea.vmem [#allocation9], %s3007
        // Predicated region
        $region85: #{_lambda_.1} parent=75 // pred_check
          %p3009 = pneg %p402
        $region86: #{_lambda_.1} parent=75 // pred_check_branch
          %3011 = sbr.rel (%p3009) target = $region88
        $region87: #{_lambda_.1} parent=75 // pred_region
          %s3013 = ssub.s32 384, 384
          %3014 = vsyncadd %s3005, %s3013
          %s3015 = smul.addr %s32, 3
          %s3016 = smul.addr %s3015, 128
          %s3017 = scalar_lea.hbm %s14, %s3016
          %s3018 = sshll.u32 %s3008, 4
          %s3019 = int_to_ptr.vmem [resolvable:$true] %s3018
          %3024 = dma.vmem_to_hbm [thread:$0]  %s3019, 384, %s3017, %s3005, 128, 128, 8
        $region88: #{_lambda_.1} parent=75 // pred_fallthru
          _
      $region76: #{_lambda_.1} parent=5 // pred_fallthru
        _
      %p3025 = scmp.le.s32.totalorder 2, %s23
      // Predicated region
      $region89: #{_lambda_.1} parent=5 // pred_check
        %p3026 = pneg %p3025
      $region90: #{_lambda_.1} parent=5 // pred_check_branch
        %3028 = sbr.rel (%p3026) target = $region92
      $region91: #{_lambda_.1} parent=5 // pred_region
        %s3029 = ssub.s32 %s23, 2
        // Predicated region
        $region93: #{_lambda_.1} parent=91 // pred_check
          %p3030 = pneg %p408
        $region94: #{_lambda_.1} parent=91 // pred_check_branch
          %3032 = sbr.rel (%p3030) target = $region96
        $region95: #{_lambda_.1} parent=91 // pred_region
          %s3033 = sand.u32 %s393, 1
          %s3034 = scalar_lea.sflag [#allocation10], %s3033
          %s3035 = sand.u32 %s393, 1
          %s3036 = smul.addr %s3035, 24
          %s3037 = scalar_lea.vmem [#allocation9], %s3036
          %3038 = dma.done %s3034, 384
        $region96: #{_lambda_.1} parent=91 // pred_fallthru
          _
      $region92: #{_lambda_.1} parent=5 // pred_fallthru
        _
    $region6: #{_lambda_.1} parent=1 // loop_footer
      %s27 = sadd.s32 1, %s23
    $region7: #{_lambda_.1} parent=1 // loop_footer_branch
      %22 = sbr.rel target = $region3
    $region8: #{_lambda_.1} parent=1 // loop_exit
      _
    %3039 = vsyncpa [#allocation10], 1
    %s3040 = scalar_lea.sflag [#allocation10], 1
    %3041 = vsyncpa %s3040, 1

</llo_original>
